<compile_context>
chip_gen: v7x
topology: tpu7x:2x2x1
jax: 0.10.0
libtpu: 0.0.40
codegen_flags: <defaults>
</compile_context>

<pallas_src>
import math
import functools

import jax
import jax.numpy as jnp
from jax.experimental import pallas as pl
from jax.experimental.pallas import tpu as pltpu


def _vmem_cap_bytes():
    """Per-core physical VMEM; falls back to the v7x minimum (64 MiB)."""
    try:
        cap = getattr(pltpu.get_tpu_info(), "vmem_capacity_bytes", None)
        if cap:
            return int(cap)
    except Exception:
        pass
    return 64 * 2**20


def _pick_q_tile(S, D, F, H, x_itemsize, scores_itemsize, vmem_cap):
    """Largest query tile whose estimated resident set fits comfortably in VMEM."""
    budget = int(0.70 * vmem_cap)
    w_bytes = (4 * D * D + 2 * D * F) * 2 + (5 * D + F) * 4        # bf16 weights (1 buf) + f32 biases
    kv_bytes = 2 * S * D * 2 * 2 + 2 * S * 4                       # bf16 x_kv (dbl-buf) + K/V caches + mask
    for t in (512, 256, 128):
        if S % t != 0:
            continue
        act = (2 * t * D * 4                        # f32 x_q tile (double-buffered)
               + 2 * t * D * x_itemsize             # output tile (double-buffered)
               + 2 * H * t * S * scores_itemsize    # scores tile (double-buffered)
               + t * D * 4                          # ctx scratch
               + (3 * t * D + t * F + 4 * t * S) * 4)   # f32 in-kernel intermediates
        if w_bytes + kv_bytes + act <= budget:
            return t
    return 128 if S % 128 == 0 else S


def encoder_block_kernel(
    x_q_ref, x_kv_ref, mask_ref,
    wq_ref, bq_ref, wk_ref, bk_ref, wv_ref, bv_ref, wo_ref, bo_ref,
    w1_ref, b1_ref, w2_ref, b2_ref,
    ln_ref,                              # SMEM (4,): [alpha1, bias1, alpha2, bias2]
    out_ref, scores_ref,
    k_cache, v_cache, ctx_ref,           # VMEM scratch
    *, num_heads, eps):
    qi = pl.program_id(1)

    # ---- K/V projections: once per batch row, cached in VMEM across query tiles ----
    @pl.when(qi == 0)
    def _():
        xkv = x_kv_ref[0]                                       # (S, D) bf16
        k = jnp.dot(xkv, wk_ref[...], preferred_element_type=jnp.float32) + bk_ref[...]
        v = jnp.dot(xkv, wv_ref[...], preferred_element_type=jnp.float32) + bv_ref[...]
        k_cache[...] = k.astype(jnp.bfloat16)
        v_cache[...] = v.astype(jnp.bfloat16)

    x_q32 = x_q_ref[0].astype(jnp.float32)                      # (Tq, D) residual path, f32
    Tq, D = x_q32.shape
    dk = D // num_heads

    # Additive mask computed once: 0 keep / -1e9 drop, broadcasts over heads & rows.
    add_mask = jnp.where(mask_ref[0] > 0.0, 0.0, -1e9).astype(jnp.float32)   # (1, S)

    # --- Q projection (1/sqrt(dk) already folded into wq/bq on the host) ---
    q = jnp.dot(x_q_ref[0].astype(jnp.bfloat16), wq_ref[...],
                preferred_element_type=jnp.float32) + bq_ref[...]
    q_b = q.astype(jnp.bfloat16)
    k_b = k_cache[...]
    v_b = v_cache[...]

    # --- per-head attention; contexts gathered in VMEM scratch for ONE K=D Wo matmul ---
    for h in range(num_heads):
        sl = slice(h * dk, (h + 1) * dk)
        s_h = jax.lax.dot_general(q_b[:, sl], k_b[:, sl],
                                  (((1,), (1,)), ((), ())),
                                  preferred_element_type=jnp.float32)        # (Tq, S)
        s_h = s_h + add_mask
        s_h = s_h - jnp.max(s_h, axis=-1, keepdims=True)
        p_h = jnp.exp(s_h)
        denom = jnp.sum(p_h, axis=-1, keepdims=True)
        p_h = p_h * pl.reciprocal(denom, approx=True)
        scores_ref[0, h] = p_h.astype(scores_ref.dtype)
        ctx_ref[:, sl] = jnp.dot(p_h.astype(jnp.bfloat16), v_b[:, sl],
                                 preferred_element_type=jnp.float32)         # (Tq, dk)

    attn_out = jnp.dot(ctx_ref[...].astype(jnp.bfloat16), wo_ref[...],
                       preferred_element_type=jnp.float32) + bo_ref[...]

    # --- torch-style LayerNormalization: scalar alpha/bias, unbiased std, eps on std ---
    def layer_norm(y, alpha, bias):
        mean = jnp.mean(y, axis=-1, keepdims=True)
        diff = y - mean
        var = jnp.sum(diff * diff, axis=-1, keepdims=True) / (D - 1)   # Bessel (torch.std)
        std = jnp.sqrt(var)
        return diff / (std + eps) * alpha + bias                       # exact divide

    ln1 = layer_norm(x_q32 + attn_out, ln_ref[0], ln_ref[1])

    # --- feed-forward: relu(x @ W1 + b1) @ W2 + b2 (bf16 operands, f32 acc) ---
    h1 = jnp.dot(ln1.astype(jnp.bfloat16), w1_ref[...],
                 preferred_element_type=jnp.float32) + b1_ref[...]
    h1 = jnp.maximum(h1, 0.0)
    ff = jnp.dot(h1.astype(jnp.bfloat16), w2_ref[...],
                 preferred_element_type=jnp.float32) + b2_ref[...]

    ln2 = layer_norm(ln1 + ff, ln_ref[2], ln_ref[3])
    out_ref[0] = ln2.astype(out_ref.dtype)


def encoder_block(x, mask, p, *, num_heads, eps=1e-5, scores_dtype=jnp.bfloat16):
    B, S, D = x.shape
    F = p["w1"].shape[1]
    H = num_heads
    x_itemsize = jnp.dtype(x.dtype).itemsize
    s_itemsize = jnp.dtype(scores_dtype).itemsize

    vmem_cap = _vmem_cap_bytes()
    tq = _pick_q_tile(S, D, F, H, x_itemsize, s_itemsize, vmem_cap)
    n_q = S // tq

    kernel = functools.partial(encoder_block_kernel, num_heads=num_heads, eps=eps)

    # Host-side weight prep: fold 1/sqrt(dk) into wq/bq; cast weights to bf16 (halves
    # weight VMEM / HBM traffic, feeds the MXU at bf16 rate with f32 accumulation).
    scale = 1.0 / math.sqrt(D // H)
    wq = (p["wq"] * scale).astype(jnp.bfloat16)
    bq = p["bq"] * scale
    wb = {k: p[k].astype(jnp.bfloat16) for k in ("wk", "wv", "wo", "w1", "w2")}
    x_kv = x.astype(jnp.bfloat16)     # K/V side is only ever a bf16 MXU operand

    def build(single_buffer_weights):
        def full(shape):
            n = len(shape)
            kwargs = {}
            if single_buffer_weights:
                # Constant index_map -> the second pipeline buffer is never refilled;
                # single-buffering halves the resident weight footprint (v7x critical).
                kwargs["pipeline_mode"] = pl.Buffered(1)
            return pl.BlockSpec(shape, lambda b, qi: (0,) * n, **kwargs)

        in_specs = [
            pl.BlockSpec((1, tq, D), lambda b, qi: (b, qi, 0)),   # x query tile (f32 residual)
            pl.BlockSpec((1, S, D), lambda b, qi: (b, 0, 0)),     # x full-S (bf16, K/V @ qi==0)
            pl.BlockSpec((1, 1, S), lambda b, qi: (b, 0, 0)),     # mask
            full((D, D)), full((1, D)),                           # wq, bq
            full((D, D)), full((1, D)),                           # wk, bk
            full((D, D)), full((1, D)),                           # wv, bv
            full((D, D)), full((1, D)),                           # wo, bo
            full((D, F)), full((1, F)),                           # w1, b1
            full((F, D)), full((1, D)),                           # w2, b2
            pl.BlockSpec(memory_space=pltpu.SMEM),                # ln params (4,)
        ]
        out_specs = [
            pl.BlockSpec((1, tq, D), lambda b, qi: (b, qi, 0)),
            pl.BlockSpec((1, H, tq, S), lambda b, qi: (b, 0, qi, 0)),
        ]
        out_shape = [
            jax.ShapeDtypeStruct((B, S, D), x.dtype),
            jax.ShapeDtypeStruct((B, H, S, S), scores_dtype),
        ]
        scratch_shapes = [
            pltpu.VMEM((S, D), jnp.bfloat16),   # K cache (per batch row)
            pltpu.VMEM((S, D), jnp.bfloat16),   # V cache (per batch row)
            pltpu.VMEM((tq, D), jnp.float32),   # per-head context gather
        ]

        # VMEM budget from the actual resident set + in-kernel intermediates,
        # clamped to the per-core physical capacity (<= 64 MiB on v7x).
        nb = 1 if single_buffer_weights else 2
        w_bytes = nb * ((4 * D * D + 2 * D * F) * 2 + (5 * D + F) * 4)
        act_bytes = (2 * tq * D * 4 + 2 * S * D * 2 + 2 * S * 4
                     + 2 * tq * D * x_itemsize + 2 * H * tq * S * s_itemsize)
        scratch_bytes = 2 * S * D * 2 + tq * D * 4
        live_bytes = (3 * tq * D + tq * F + 4 * tq * S) * 4
        est = w_bytes + act_bytes + scratch_bytes + live_bytes
        vmem_limit = int(min(int(0.9 * vmem_cap), max(32 * 2**20, int(1.5 * est))))

        return pl.pallas_call(
            kernel,
            grid=(B, n_q),
            in_specs=in_specs,
            out_specs=out_specs,
            out_shape=out_shape,
            scratch_shapes=scratch_shapes,
            compiler_params=pltpu.CompilerParams(
                # batch axis parallel (megacore); qi must be "arbitrary" because the
                # K/V VMEM cache is filled at qi==0 and reused by later qi steps.
                dimension_semantics=("parallel", "arbitrary"),
                vmem_limit_bytes=vmem_limit),
        )(x, x_kv, mask,
          wq, bq, wb["wk"], p["bk"], wb["wv"], p["bv"], wb["wo"], p["bo"],
          wb["w1"], p["b1"], wb["w2"], p["b2"], p["ln"])

    try:
        return build(True)
    except Exception:
        # pl.Buffered(1) not supported by this jax/libtpu combo -> default buffering.
        return build(False)


def reference(x, mask, p, num_heads, eps=1e-5):
    """Pure-JAX f32 reference mirroring the PyTorch forward (dropout = identity)."""
    B, S, D = x.shape
    dk = D // num_heads

    def lin(v, w, b):
        return v @ w + b

    q = lin(x, p["wq"], p["bq"]).reshape(B, S, num_heads, dk).transpose(0, 2, 1, 3)
    k = lin(x, p["wk"], p["bk"]).reshape(B, S, num_heads, dk).transpose(0, 2, 1, 3)
    v = lin(x, p["wv"], p["bv"]).reshape(B, S, num_heads, dk).transpose(0, 2, 1, 3)
    scores = jnp.einsum("bhqd,bhkd->bhqk", q, k) / math.sqrt(dk)
    scores = jnp.where(mask[:, :, None, :] > 0, scores, -1e9)
    attn = jax.nn.softmax(scores, axis=-1)
    ctx = jnp.einsum("bhqk,bhkd->bhqd", attn, v).transpose(0, 2, 1, 3).reshape(B, S, D)
    attn_out = lin(ctx, p["wo"], p["bo"])

    def layer_norm(y, alpha, bias):
        mean = y.mean(-1, keepdims=True)
        diff = y - mean
        std = jnp.sqrt((diff * diff).sum(-1, keepdims=True) / (D - 1))
        return diff / (std + eps) * alpha + bias

    x1 = layer_norm(x + attn_out, p["ln"][0], p["ln"][1])
    ff = lin(jnp.maximum(lin(x1, p["w1"], p["b1"]), 0.0), p["w2"], p["b2"])
    x2 = layer_norm(x1 + ff, p["ln"][2], p["ln"][3])
    return x2, attn


def init_params(key, d_model, d_ff):
    ks = jax.random.split(key, 12)

    def linear(kw, kb, fan_in, fan_out):
        bound = 1.0 / math.sqrt(fan_in)
        w = jax.random.uniform(kw, (fan_in, fan_out), jnp.float32, -bound, bound)
        b = jax.random.uniform(kb, (1, fan_out), jnp.float32, -bound, bound)
        return w, b

    wq, bq = linear(ks[0], ks[1], d_model, d_model)
    wk, bk = linear(ks[2], ks[3], d_model, d_model)
    wv, bv = linear(ks[4], ks[5], d_model, d_model)
    wo, bo = linear(ks[6], ks[7], d_model, d_model)
    w1, b1 = linear(ks[8], ks[9], d_model, d_ff)
    w2, b2 = linear(ks[10], ks[11], d_ff, d_model)
    ln = jnp.array([1.0, 0.0, 1.0, 0.0], jnp.float32)   # alpha1, bias1, alpha2, bias2
    return dict(wq=wq, bq=bq, wk=wk, bk=bk, wv=wv, bv=bv, wo=wo, bo=bo,
                w1=w1, b1=b1, w2=w2, b2=b2, ln=ln)


if __name__ == "__main__":
    B, S, D, H, F = 2, 8, 32, 4, 64

    key = jax.random.PRNGKey(0)
    k_x, k_p = jax.random.split(key)
    x = jax.random.normal(k_x, (B, S, D), jnp.float32)
    mask = jnp.ones((B, 1, S), jnp.float32)
    mask = mask.at[1, 0, S - 2:].set(0.0)          # mask out last 2 keys of batch 1
    params = init_params(k_p, D, F)

    out, attn_maps = encoder_block(x, mask, params, num_heads=H)
    jax.block_until_ready((out, attn_maps))

    ref_out, ref_attn = reference(x, mask, params, H)
    assert out.shape == (B, S, D) and attn_maps.shape == (B, H, S, S)
    # bf16 MXU operands + bf16 attention maps + approx softmax reciprocal -> looser tol.
    assert float(jnp.max(jnp.abs(out - ref_out))) < 2.5e-2
    assert float(jnp.max(jnp.abs(attn_maps.astype(jnp.float32) - ref_attn))) < 2e-2

    print("KERNEL_OK")
</pallas_src>

<mosaic_0001>
module attributes {stable_mosaic.version = 11 : i64} {
  func.func @encoder_block_kernel(%arg0: i32, %arg1: i32, %arg2: memref<1x8x32xf32, #tpu.memory_space<vmem>>, %arg3: memref<1x8x32xbf16, #tpu.memory_space<vmem>>, %arg4: memref<1x1x8xf32, #tpu.memory_space<vmem>>, %arg5: memref<32x32xbf16, #tpu.memory_space<vmem>>, %arg6: memref<1x32xf32, #tpu.memory_space<vmem>>, %arg7: memref<32x32xbf16, #tpu.memory_space<vmem>>, %arg8: memref<1x32xf32, #tpu.memory_space<vmem>>, %arg9: memref<32x32xbf16, #tpu.memory_space<vmem>>, %arg10: memref<1x32xf32, #tpu.memory_space<vmem>>, %arg11: memref<32x32xbf16, #tpu.memory_space<vmem>>, %arg12: memref<1x32xf32, #tpu.memory_space<vmem>>, %arg13: memref<32x64xbf16, #tpu.memory_space<vmem>>, %arg14: memref<1x64xf32, #tpu.memory_space<vmem>>, %arg15: memref<64x32xbf16, #tpu.memory_space<vmem>>, %arg16: memref<1x32xf32, #tpu.memory_space<vmem>>, %arg17: memref<4xf32, #tpu.memory_space<smem>>, %arg18: memref<1x8x32xf32, #tpu.memory_space<vmem>>, %arg19: memref<1x4x8x8xbf16, #tpu.memory_space<vmem>>, %arg20: memref<8x32xbf16, #tpu.memory_space<vmem>>, %arg21: memref<8x32xbf16, #tpu.memory_space<vmem>>, %arg22: memref<8x32xf32, #tpu.memory_space<vmem>>) attributes {dimension_semantics = [#tpu.dimension_semantics<parallel>, #tpu.dimension_semantics<arbitrary>], iteration_bounds = array<i64: 2, 1>, scalar_prefetch = 0 : i64, scratch_operands = 3 : i64, tpu.core_type = #tpu.core_type<tc>, window_params = [{transform_indices = @transform_0, window_bounds = array<i64: 1, 8, 32>}, {transform_indices = @transform_1, window_bounds = array<i64: 1, 8, 32>}, {transform_indices = @transform_2, window_bounds = array<i64: 1, 1, 8>}, {pipeline_mode = #tpu.pipeline_mode<synchronous>, transform_indices = @transform_3, window_bounds = array<i64: 32, 32>}, {pipeline_mode = #tpu.pipeline_mode<synchronous>, transform_indices = @transform_4, window_bounds = array<i64: 1, 32>}, {pipeline_mode = #tpu.pipeline_mode<synchronous>, transform_indices = @transform_5, window_bounds = array<i64: 32, 32>}, {pipeline_mode = #tpu.pipeline_mode<synchronous>, transform_indices = @transform_6, window_bounds = array<i64: 1, 32>}, {pipeline_mode = #tpu.pipeline_mode<synchronous>, transform_indices = @transform_7, window_bounds = array<i64: 32, 32>}, {pipeline_mode = #tpu.pipeline_mode<synchronous>, transform_indices = @transform_8, window_bounds = array<i64: 1, 32>}, {pipeline_mode = #tpu.pipeline_mode<synchronous>, transform_indices = @transform_9, window_bounds = array<i64: 32, 32>}, {pipeline_mode = #tpu.pipeline_mode<synchronous>, transform_indices = @transform_10, window_bounds = array<i64: 1, 32>}, {pipeline_mode = #tpu.pipeline_mode<synchronous>, transform_indices = @transform_11, window_bounds = array<i64: 32, 64>}, {pipeline_mode = #tpu.pipeline_mode<synchronous>, transform_indices = @transform_12, window_bounds = array<i64: 1, 64>}, {pipeline_mode = #tpu.pipeline_mode<synchronous>, transform_indices = @transform_13, window_bounds = array<i64: 64, 32>}, {pipeline_mode = #tpu.pipeline_mode<synchronous>, transform_indices = @transform_14, window_bounds = array<i64: 1, 32>}, {transform_indices = @transform_15, window_bounds = array<i64: 4>}, {transform_indices = @transform_16, window_bounds = array<i64: 1, 8, 32>}, {transform_indices = @transform_17, window_bounds = array<i64: 1, 4, 8, 8>}]} {
    %c0_i32 = arith.constant 0 : i32
    %0 = arith.cmpi eq, %arg1, %c0_i32 : i32
    %1 = arith.extui %0 : i1 to i32
    %c0_i32_0 = arith.constant 0 : i32
    %2 = arith.cmpi ne, %1, %c0_i32_0 : i32
    scf.if %2 {
      %c0_89 = arith.constant 0 : index
      %c0_90 = arith.constant 0 : index
      %c0_91 = arith.constant 0 : index
      %185 = vector.load %arg3[%c0_89, %c0_90, %c0_91] : memref<1x8x32xbf16, #tpu.memory_space<vmem>>, vector<1x8x32xbf16>
      %186 = vector.shape_cast %185 : vector<1x8x32xbf16> to vector<8x32xbf16>
      %c0_92 = arith.constant 0 : index
      %c0_93 = arith.constant 0 : index
      %187 = vector.load %arg7[%c0_92, %c0_93] : memref<32x32xbf16, #tpu.memory_space<vmem>>, vector<32x32xbf16>
      %cst_94 = arith.constant dense<0.000000e+00> : vector<8x32xf32>
      %188 = tpu.matmul %186, %187, %cst_94 {dimension_numbers = #tpu.dot_dimension_numbers<[1], [0], [0], [1], [0, 0, 1, 1], [], []>} : vector<8x32xbf16>, vector<32x32xbf16>, vector<8x32xf32> -> vector<8x32xf32>
      %c0_95 = arith.constant 0 : index
      %c0_96 = arith.constant 0 : index
      %189 = vector.load %arg8[%c0_95, %c0_96] : memref<1x32xf32, #tpu.memory_space<vmem>>, vector<1x32xf32>
      %190 = vector.broadcast %189 : vector<1x32xf32> to vector<8x32xf32>
      %191 = arith.addf %188, %190 : vector<8x32xf32>
      %c0_97 = arith.constant 0 : index
      %c0_98 = arith.constant 0 : index
      %192 = vector.load %arg9[%c0_97, %c0_98] : memref<32x32xbf16, #tpu.memory_space<vmem>>, vector<32x32xbf16>
      %cst_99 = arith.constant dense<0.000000e+00> : vector<8x32xf32>
      %193 = tpu.matmul %186, %192, %cst_99 {dimension_numbers = #tpu.dot_dimension_numbers<[1], [0], [0], [1], [0, 0, 1, 1], [], []>} : vector<8x32xbf16>, vector<32x32xbf16>, vector<8x32xf32> -> vector<8x32xf32>
      %c0_100 = arith.constant 0 : index
      %c0_101 = arith.constant 0 : index
      %194 = vector.load %arg10[%c0_100, %c0_101] : memref<1x32xf32, #tpu.memory_space<vmem>>, vector<1x32xf32>
      %195 = vector.broadcast %194 : vector<1x32xf32> to vector<8x32xf32>
      %196 = arith.addf %193, %195 : vector<8x32xf32>
      %197 = arith.truncf %191 : vector<8x32xf32> to vector<8x32xbf16>
      %c0_102 = arith.constant 0 : index
      %c0_103 = arith.constant 0 : index
      %198 = vector.load %arg20[%c0_102, %c0_103] : memref<8x32xbf16, #tpu.memory_space<vmem>>, vector<8x32xbf16>
      tpu.vector_store %arg20[%c0_102, %c0_103], %197 {strides = array<i32>} : memref<8x32xbf16, #tpu.memory_space<vmem>>, vector<8x32xbf16>,
      %199 = arith.truncf %196 : vector<8x32xf32> to vector<8x32xbf16>
      %c0_104 = arith.constant 0 : index
      %c0_105 = arith.constant 0 : index
      %200 = vector.load %arg21[%c0_104, %c0_105] : memref<8x32xbf16, #tpu.memory_space<vmem>>, vector<8x32xbf16>
      tpu.vector_store %arg21[%c0_104, %c0_105], %199 {strides = array<i32>} : memref<8x32xbf16, #tpu.memory_space<vmem>>, vector<8x32xbf16>,
    } else {
    }
    %c0 = arith.constant 0 : index
    %c0_1 = arith.constant 0 : index
    %c0_2 = arith.constant 0 : index
    %3 = vector.load %arg2[%c0, %c0_1, %c0_2] : memref<1x8x32xf32, #tpu.memory_space<vmem>>, vector<1x8x32xf32>
    %4 = vector.shape_cast %3 : vector<1x8x32xf32> to vector<8x32xf32>
    %c0_3 = arith.constant 0 : index
    %c0_4 = arith.constant 0 : index
    %c0_5 = arith.constant 0 : index
    %5 = vector.load %arg4[%c0_3, %c0_4, %c0_5] : memref<1x1x8xf32, #tpu.memory_space<vmem>>, vector<1x1x8xf32>
    %6 = vector.shape_cast %5 : vector<1x1x8xf32> to vector<1x8xf32>
    %cst = arith.constant 0.000000e+00 : f32
    %7 = vector.broadcast %cst : f32 to vector<1x8xf32>
    %8 = arith.cmpf ogt, %6, %7 : vector<1x8xf32>
    %cst_6 = arith.constant 0.000000e+00 : f32
    %cst_7 = arith.constant -1.000000e+09 : f32
    %9 = vector.broadcast %cst_6 : f32 to vector<1x8xf32>
    %10 = vector.broadcast %cst_7 : f32 to vector<1x8xf32>
    %11 = arith.select %8, %9, %10 : vector<1x8xi1>, vector<1x8xf32>
    %c0_8 = arith.constant 0 : index
    %c0_9 = arith.constant 0 : index
    %c0_10 = arith.constant 0 : index
    %12 = vector.load %arg2[%c0_8, %c0_9, %c0_10] : memref<1x8x32xf32, #tpu.memory_space<vmem>>, vector<1x8x32xf32>
    %13 = vector.shape_cast %12 : vector<1x8x32xf32> to vector<8x32xf32>
    %14 = arith.truncf %13 : vector<8x32xf32> to vector<8x32xbf16>
    %c0_11 = arith.constant 0 : index
    %c0_12 = arith.constant 0 : index
    %15 = vector.load %arg5[%c0_11, %c0_12] : memref<32x32xbf16, #tpu.memory_space<vmem>>, vector<32x32xbf16>
    %cst_13 = arith.constant dense<0.000000e+00> : vector<8x32xf32>
    %16 = tpu.matmul %14, %15, %cst_13 {dimension_numbers = #tpu.dot_dimension_numbers<[1], [0], [0], [1], [0, 0, 1, 1], [], []>} : vector<8x32xbf16>, vector<32x32xbf16>, vector<8x32xf32> -> vector<8x32xf32>
    %c0_14 = arith.constant 0 : index
    %c0_15 = arith.constant 0 : index
    %17 = vector.load %arg6[%c0_14, %c0_15] : memref<1x32xf32, #tpu.memory_space<vmem>>, vector<1x32xf32>
    %18 = vector.broadcast %17 : vector<1x32xf32> to vector<8x32xf32>
    %19 = arith.addf %16, %18 : vector<8x32xf32>
    %20 = arith.truncf %19 : vector<8x32xf32> to vector<8x32xbf16>
    %c0_16 = arith.constant 0 : index
    %c0_17 = arith.constant 0 : index
    %21 = vector.load %arg20[%c0_16, %c0_17] : memref<8x32xbf16, #tpu.memory_space<vmem>>, vector<8x32xbf16>
    %c0_18 = arith.constant 0 : index
    %c0_19 = arith.constant 0 : index
    %22 = vector.load %arg21[%c0_18, %c0_19] : memref<8x32xbf16, #tpu.memory_space<vmem>>, vector<8x32xbf16>
    %23 = vector.extract_strided_slice %20 {offsets = [0, 0], sizes = [8, 8], strides = [1, 1]} : vector<8x32xbf16> to vector<8x8xbf16>
    %24 = vector.extract_strided_slice %21 {offsets = [0, 0], sizes = [8, 8], strides = [1, 1]} : vector<8x32xbf16> to vector<8x8xbf16>
    %cst_20 = arith.constant dense<0.000000e+00> : vector<8x8xf32>
    %25 = tpu.matmul %23, %24, %cst_20 {dimension_numbers = #tpu.dot_dimension_numbers<[1], [1], [0], [0], [0, 0, 1, 0], [], []>} : vector<8x8xbf16>, vector<8x8xbf16>, vector<8x8xf32> -> vector<8x8xf32>
    %26 = vector.broadcast %11 : vector<1x8xf32> to vector<8x8xf32>
    %27 = arith.addf %25, %26 : vector<8x8xf32>
    %cst_21 = arith.constant dense<0xFF800000> : vector<8xf32>
    %28 = vector.multi_reduction <maximumf>, %27, %cst_21 [1] : vector<8x8xf32> to vector<8xf32>
    %29 = vector.shape_cast %28 : vector<8xf32> to vector<8x1xf32>
    %30 = vector.broadcast %29 : vector<8x1xf32> to vector<8x8xf32>
    %31 = arith.subf %27, %30 : vector<8x8xf32>
    %32 = math.exp %31 : vector<8x8xf32>
    %cst_22 = arith.constant dense<0.000000e+00> : vector<8xf32>
    %33 = vector.multi_reduction <add>, %32, %cst_22 [1] : vector<8x8xf32> to vector<8xf32>
    %34 = vector.shape_cast %33 : vector<8xf32> to vector<8x1xf32>
    %35 = tpu.reciprocal %34 {approx = true} : vector<8x1xf32> -> vector<8x1xf32>
    %36 = vector.broadcast %35 : vector<8x1xf32> to vector<8x8xf32>
    %37 = arith.mulf %32, %36 : vector<8x8xf32>
    %38 = arith.truncf %37 : vector<8x8xf32> to vector<8x8xbf16>
    %c0_23 = arith.constant 0 : index
    %c0_24 = arith.constant 0 : index
    %c0_25 = arith.constant 0 : index
    %c0_26 = arith.constant 0 : index
    %39 = vector.load %arg19[%c0_23, %c0_24, %c0_25, %c0_26] : memref<1x4x8x8xbf16, #tpu.memory_space<vmem>>, vector<1x1x8x8xbf16>
    %40 = vector.shape_cast %39 : vector<1x1x8x8xbf16> to vector<8x8xbf16>
    %41 = vector.shape_cast %38 : vector<8x8xbf16> to vector<1x1x8x8xbf16>
    tpu.vector_store %arg19[%c0_23, %c0_24, %c0_25, %c0_26], %41 {strides = array<i32>} : memref<1x4x8x8xbf16, #tpu.memory_space<vmem>>, vector<1x1x8x8xbf16>,
    %42 = arith.truncf %37 : vector<8x8xf32> to vector<8x8xbf16>
    %43 = vector.extract_strided_slice %22 {offsets = [0, 0], sizes = [8, 8], strides = [1, 1]} : vector<8x32xbf16> to vector<8x8xbf16>
    %cst_27 = arith.constant dense<0.000000e+00> : vector<8x8xf32>
    %44 = tpu.matmul %42, %43, %cst_27 {dimension_numbers = #tpu.dot_dimension_numbers<[1], [0], [0], [1], [0, 0, 1, 1], [], []>} : vector<8x8xbf16>, vector<8x8xbf16>, vector<8x8xf32> -> vector<8x8xf32>
    %c0_28 = arith.constant 0 : index
    %c0_29 = arith.constant 0 : index
    %45 = vector.load %arg22[%c0_28, %c0_29] : memref<8x32xf32, #tpu.memory_space<vmem>>, vector<8x8xf32>
    tpu.vector_store %arg22[%c0_28, %c0_29], %44 {strides = array<i32>} : memref<8x32xf32, #tpu.memory_space<vmem>>, vector<8x8xf32>,
    %46 = vector.extract_strided_slice %20 {offsets = [0, 8], sizes = [8, 8], strides = [1, 1]} : vector<8x32xbf16> to vector<8x8xbf16>
    %47 = vector.extract_strided_slice %21 {offsets = [0, 8], sizes = [8, 8], strides = [1, 1]} : vector<8x32xbf16> to vector<8x8xbf16>
    %cst_30 = arith.constant dense<0.000000e+00> : vector<8x8xf32>
    %48 = tpu.matmul %46, %47, %cst_30 {dimension_numbers = #tpu.dot_dimension_numbers<[1], [1], [0], [0], [0, 0, 1, 0], [], []>} : vector<8x8xbf16>, vector<8x8xbf16>, vector<8x8xf32> -> vector<8x8xf32>
    %49 = vector.broadcast %11 : vector<1x8xf32> to vector<8x8xf32>
    %50 = arith.addf %48, %49 : vector<8x8xf32>
    %cst_31 = arith.constant dense<0xFF800000> : vector<8xf32>
    %51 = vector.multi_reduction <maximumf>, %50, %cst_31 [1] : vector<8x8xf32> to vector<8xf32>
    %52 = vector.shape_cast %51 : vector<8xf32> to vector<8x1xf32>
    %53 = vector.broadcast %52 : vector<8x1xf32> to vector<8x8xf32>
    %54 = arith.subf %50, %53 : vector<8x8xf32>
    %55 = math.exp %54 : vector<8x8xf32>
    %cst_32 = arith.constant dense<0.000000e+00> : vector<8xf32>
    %56 = vector.multi_reduction <add>, %55, %cst_32 [1] : vector<8x8xf32> to vector<8xf32>
    %57 = vector.shape_cast %56 : vector<8xf32> to vector<8x1xf32>
    %58 = tpu.reciprocal %57 {approx = true} : vector<8x1xf32> -> vector<8x1xf32>
    %59 = vector.broadcast %58 : vector<8x1xf32> to vector<8x8xf32>
    %60 = arith.mulf %55, %59 : vector<8x8xf32>
    %61 = arith.truncf %60 : vector<8x8xf32> to vector<8x8xbf16>
    %c0_33 = arith.constant 0 : index
    %c1 = arith.constant 1 : index
    %c0_34 = arith.constant 0 : index
    %c0_35 = arith.constant 0 : index
    %62 = vector.load %arg19[%c0_33, %c1, %c0_34, %c0_35] : memref<1x4x8x8xbf16, #tpu.memory_space<vmem>>, vector<1x1x8x8xbf16>
    %63 = vector.shape_cast %62 : vector<1x1x8x8xbf16> to vector<8x8xbf16>
    %64 = vector.shape_cast %61 : vector<8x8xbf16> to vector<1x1x8x8xbf16>
    tpu.vector_store %arg19[%c0_33, %c1, %c0_34, %c0_35], %64 {strides = array<i32>} : memref<1x4x8x8xbf16, #tpu.memory_space<vmem>>, vector<1x1x8x8xbf16>,
    %65 = arith.truncf %60 : vector<8x8xf32> to vector<8x8xbf16>
    %66 = vector.extract_strided_slice %22 {offsets = [0, 8], sizes = [8, 8], strides = [1, 1]} : vector<8x32xbf16> to vector<8x8xbf16>
    %cst_36 = arith.constant dense<0.000000e+00> : vector<8x8xf32>
    %67 = tpu.matmul %65, %66, %cst_36 {dimension_numbers = #tpu.dot_dimension_numbers<[1], [0], [0], [1], [0, 0, 1, 1], [], []>} : vector<8x8xbf16>, vector<8x8xbf16>, vector<8x8xf32> -> vector<8x8xf32>
    %c0_37 = arith.constant 0 : index
    %c8 = arith.constant 8 : index
    %68 = vector.load %arg22[%c0_37, %c8] : memref<8x32xf32, #tpu.memory_space<vmem>>, vector<8x8xf32>
    tpu.vector_store %arg22[%c0_37, %c8], %67 {strides = array<i32>} : memref<8x32xf32, #tpu.memory_space<vmem>>, vector<8x8xf32>,
    %69 = vector.extract_strided_slice %20 {offsets = [0, 16], sizes = [8, 8], strides = [1, 1]} : vector<8x32xbf16> to vector<8x8xbf16>
    %70 = vector.extract_strided_slice %21 {offsets = [0, 16], sizes = [8, 8], strides = [1, 1]} : vector<8x32xbf16> to vector<8x8xbf16>
    %cst_38 = arith.constant dense<0.000000e+00> : vector<8x8xf32>
    %71 = tpu.matmul %69, %70, %cst_38 {dimension_numbers = #tpu.dot_dimension_numbers<[1], [1], [0], [0], [0, 0, 1, 0], [], []>} : vector<8x8xbf16>, vector<8x8xbf16>, vector<8x8xf32> -> vector<8x8xf32>
    %72 = vector.broadcast %11 : vector<1x8xf32> to vector<8x8xf32>
    %73 = arith.addf %71, %72 : vector<8x8xf32>
    %cst_39 = arith.constant dense<0xFF800000> : vector<8xf32>
    %74 = vector.multi_reduction <maximumf>, %73, %cst_39 [1] : vector<8x8xf32> to vector<8xf32>
    %75 = vector.shape_cast %74 : vector<8xf32> to vector<8x1xf32>
    %76 = vector.broadcast %75 : vector<8x1xf32> to vector<8x8xf32>
    %77 = arith.subf %73, %76 : vector<8x8xf32>
    %78 = math.exp %77 : vector<8x8xf32>
    %cst_40 = arith.constant dense<0.000000e+00> : vector<8xf32>
    %79 = vector.multi_reduction <add>, %78, %cst_40 [1] : vector<8x8xf32> to vector<8xf32>
    %80 = vector.shape_cast %79 : vector<8xf32> to vector<8x1xf32>
    %81 = tpu.reciprocal %80 {approx = true} : vector<8x1xf32> -> vector<8x1xf32>
    %82 = vector.broadcast %81 : vector<8x1xf32> to vector<8x8xf32>
    %83 = arith.mulf %78, %82 : vector<8x8xf32>
    %84 = arith.truncf %83 : vector<8x8xf32> to vector<8x8xbf16>
    %c0_41 = arith.constant 0 : index
    %c2 = arith.constant 2 : index
    %c0_42 = arith.constant 0 : index
    %c0_43 = arith.constant 0 : index
    %85 = vector.load %arg19[%c0_41, %c2, %c0_42, %c0_43] : memref<1x4x8x8xbf16, #tpu.memory_space<vmem>>, vector<1x1x8x8xbf16>
    %86 = vector.shape_cast %85 : vector<1x1x8x8xbf16> to vector<8x8xbf16>
    %87 = vector.shape_cast %84 : vector<8x8xbf16> to vector<1x1x8x8xbf16>
    tpu.vector_store %arg19[%c0_41, %c2, %c0_42, %c0_43], %87 {strides = array<i32>} : memref<1x4x8x8xbf16, #tpu.memory_space<vmem>>, vector<1x1x8x8xbf16>,
    %88 = arith.truncf %83 : vector<8x8xf32> to vector<8x8xbf16>
    %89 = vector.extract_strided_slice %22 {offsets = [0, 16], sizes = [8, 8], strides = [1, 1]} : vector<8x32xbf16> to vector<8x8xbf16>
    %cst_44 = arith.constant dense<0.000000e+00> : vector<8x8xf32>
    %90 = tpu.matmul %88, %89, %cst_44 {dimension_numbers = #tpu.dot_dimension_numbers<[1], [0], [0], [1], [0, 0, 1, 1], [], []>} : vector<8x8xbf16>, vector<8x8xbf16>, vector<8x8xf32> -> vector<8x8xf32>
    %c0_45 = arith.constant 0 : index
    %c16 = arith.constant 16 : index
    %91 = vector.load %arg22[%c0_45, %c16] : memref<8x32xf32, #tpu.memory_space<vmem>>, vector<8x8xf32>
    tpu.vector_store %arg22[%c0_45, %c16], %90 {strides = array<i32>} : memref<8x32xf32, #tpu.memory_space<vmem>>, vector<8x8xf32>,
    %92 = vector.extract_strided_slice %20 {offsets = [0, 24], sizes = [8, 8], strides = [1, 1]} : vector<8x32xbf16> to vector<8x8xbf16>
    %93 = vector.extract_strided_slice %21 {offsets = [0, 24], sizes = [8, 8], strides = [1, 1]} : vector<8x32xbf16> to vector<8x8xbf16>
    %cst_46 = arith.constant dense<0.000000e+00> : vector<8x8xf32>
    %94 = tpu.matmul %92, %93, %cst_46 {dimension_numbers = #tpu.dot_dimension_numbers<[1], [1], [0], [0], [0, 0, 1, 0], [], []>} : vector<8x8xbf16>, vector<8x8xbf16>, vector<8x8xf32> -> vector<8x8xf32>
    %95 = vector.broadcast %11 : vector<1x8xf32> to vector<8x8xf32>
    %96 = arith.addf %94, %95 : vector<8x8xf32>
    %cst_47 = arith.constant dense<0xFF800000> : vector<8xf32>
    %97 = vector.multi_reduction <maximumf>, %96, %cst_47 [1] : vector<8x8xf32> to vector<8xf32>
    %98 = vector.shape_cast %97 : vector<8xf32> to vector<8x1xf32>
    %99 = vector.broadcast %98 : vector<8x1xf32> to vector<8x8xf32>
    %100 = arith.subf %96, %99 : vector<8x8xf32>
    %101 = math.exp %100 : vector<8x8xf32>
    %cst_48 = arith.constant dense<0.000000e+00> : vector<8xf32>
    %102 = vector.multi_reduction <add>, %101, %cst_48 [1] : vector<8x8xf32> to vector<8xf32>
    %103 = vector.shape_cast %102 : vector<8xf32> to vector<8x1xf32>
    %104 = tpu.reciprocal %103 {approx = true} : vector<8x1xf32> -> vector<8x1xf32>
    %105 = vector.broadcast %104 : vector<8x1xf32> to vector<8x8xf32>
    %106 = arith.mulf %101, %105 : vector<8x8xf32>
    %107 = arith.truncf %106 : vector<8x8xf32> to vector<8x8xbf16>
    %c0_49 = arith.constant 0 : index
    %c3 = arith.constant 3 : index
    %c0_50 = arith.constant 0 : index
    %c0_51 = arith.constant 0 : index
    %108 = vector.load %arg19[%c0_49, %c3, %c0_50, %c0_51] : memref<1x4x8x8xbf16, #tpu.memory_space<vmem>>, vector<1x1x8x8xbf16>
    %109 = vector.shape_cast %108 : vector<1x1x8x8xbf16> to vector<8x8xbf16>
    %110 = vector.shape_cast %107 : vector<8x8xbf16> to vector<1x1x8x8xbf16>
    tpu.vector_store %arg19[%c0_49, %c3, %c0_50, %c0_51], %110 {strides = array<i32>} : memref<1x4x8x8xbf16, #tpu.memory_space<vmem>>, vector<1x1x8x8xbf16>,
    %111 = arith.truncf %106 : vector<8x8xf32> to vector<8x8xbf16>
    %112 = vector.extract_strided_slice %22 {offsets = [0, 24], sizes = [8, 8], strides = [1, 1]} : vector<8x32xbf16> to vector<8x8xbf16>
    %cst_52 = arith.constant dense<0.000000e+00> : vector<8x8xf32>
    %113 = tpu.matmul %111, %112, %cst_52 {dimension_numbers = #tpu.dot_dimension_numbers<[1], [0], [0], [1], [0, 0, 1, 1], [], []>} : vector<8x8xbf16>, vector<8x8xbf16>, vector<8x8xf32> -> vector<8x8xf32>
    %c0_53 = arith.constant 0 : index
    %c24 = arith.constant 24 : index
    %114 = vector.load %arg22[%c0_53, %c24] : memref<8x32xf32, #tpu.memory_space<vmem>>, vector<8x8xf32>
    tpu.vector_store %arg22[%c0_53, %c24], %113 {strides = array<i32>} : memref<8x32xf32, #tpu.memory_space<vmem>>, vector<8x8xf32>,
    %c0_54 = arith.constant 0 : index
    %c0_55 = arith.constant 0 : index
    %115 = vector.load %arg22[%c0_54, %c0_55] : memref<8x32xf32, #tpu.memory_space<vmem>>, vector<8x32xf32>
    %116 = arith.truncf %115 : vector<8x32xf32> to vector<8x32xbf16>
    %c0_56 = arith.constant 0 : index
    %c0_57 = arith.constant 0 : index
    %117 = vector.load %arg11[%c0_56, %c0_57] : memref<32x32xbf16, #tpu.memory_space<vmem>>, vector<32x32xbf16>
    %cst_58 = arith.constant dense<0.000000e+00> : vector<8x32xf32>
    %118 = tpu.matmul %116, %117, %cst_58 {dimension_numbers = #tpu.dot_dimension_numbers<[1], [0], [0], [1], [0, 0, 1, 1], [], []>} : vector<8x32xbf16>, vector<32x32xbf16>, vector<8x32xf32> -> vector<8x32xf32>
    %c0_59 = arith.constant 0 : index
    %c0_60 = arith.constant 0 : index
    %119 = vector.load %arg12[%c0_59, %c0_60] : memref<1x32xf32, #tpu.memory_space<vmem>>, vector<1x32xf32>
    %120 = vector.broadcast %119 : vector<1x32xf32> to vector<8x32xf32>
    %121 = arith.addf %118, %120 : vector<8x32xf32>
    %122 = arith.addf %4, %121 : vector<8x32xf32>
    %c0_61 = arith.constant 0 : index
    %123 = memref.load %arg17[%c0_61] : memref<4xf32, #tpu.memory_space<smem>>
    %c1_62 = arith.constant 1 : index
    %124 = memref.load %arg17[%c1_62] : memref<4xf32, #tpu.memory_space<smem>>
    %cst_63 = arith.constant dense<0.000000e+00> : vector<8xf32>
    %125 = vector.multi_reduction <add>, %122, %cst_63 [1] : vector<8x32xf32> to vector<8xf32>
    %126 = vector.shape_cast %125 : vector<8xf32> to vector<8x1xf32>
    %cst_64 = arith.constant 3.200000e+01 : f32
    %127 = vector.broadcast %cst_64 : f32 to vector<8x1xf32>
    %128 = arith.divf %126, %127 : vector<8x1xf32>
    %129 = vector.broadcast %128 : vector<8x1xf32> to vector<8x32xf32>
    %130 = arith.subf %122, %129 : vector<8x32xf32>
    %131 = arith.mulf %130, %130 : vector<8x32xf32>
    %cst_65 = arith.constant dense<0.000000e+00> : vector<8xf32>
    %132 = vector.multi_reduction <add>, %131, %cst_65 [1] : vector<8x32xf32> to vector<8xf32>
    %133 = vector.shape_cast %132 : vector<8xf32> to vector<8x1xf32>
    %cst_66 = arith.constant 3.100000e+01 : f32
    %134 = vector.broadcast %cst_66 : f32 to vector<8x1xf32>
    %135 = arith.divf %133, %134 : vector<8x1xf32>
    %136 = math.sqrt %135 : vector<8x1xf32>
    %cst_67 = arith.constant 9.99999974E-6 : f32
    %137 = vector.broadcast %cst_67 : f32 to vector<8x1xf32>
    %138 = arith.addf %136, %137 : vector<8x1xf32>
    %139 = vector.broadcast %138 : vector<8x1xf32> to vector<8x32xf32>
    %140 = arith.divf %130, %139 : vector<8x32xf32>
    %141 = vector.broadcast %123 : f32 to vector<8x32xf32>
    %142 = arith.mulf %140, %141 : vector<8x32xf32>
    %143 = vector.broadcast %124 : f32 to vector<8x32xf32>
    %144 = arith.addf %142, %143 : vector<8x32xf32>
    %145 = arith.truncf %144 : vector<8x32xf32> to vector<8x32xbf16>
    %c0_68 = arith.constant 0 : index
    %c0_69 = arith.constant 0 : index
    %146 = vector.load %arg13[%c0_68, %c0_69] : memref<32x64xbf16, #tpu.memory_space<vmem>>, vector<32x64xbf16>
    %cst_70 = arith.constant dense<0.000000e+00> : vector<8x64xf32>
    %147 = tpu.matmul %145, %146, %cst_70 {dimension_numbers = #tpu.dot_dimension_numbers<[1], [0], [0], [1], [0, 0, 1, 1], [], []>} : vector<8x32xbf16>, vector<32x64xbf16>, vector<8x64xf32> -> vector<8x64xf32>
    %c0_71 = arith.constant 0 : index
    %c0_72 = arith.constant 0 : index
    %148 = vector.load %arg14[%c0_71, %c0_72] : memref<1x64xf32, #tpu.memory_space<vmem>>, vector<1x64xf32>
    %149 = vector.broadcast %148 : vector<1x64xf32> to vector<8x64xf32>
    %150 = arith.addf %147, %149 : vector<8x64xf32>
    %cst_73 = arith.constant 0.000000e+00 : f32
    %151 = vector.broadcast %cst_73 : f32 to vector<8x64xf32>
    %152 = arith.maximumf %150, %151 : vector<8x64xf32>
    %153 = arith.truncf %152 : vector<8x64xf32> to vector<8x64xbf16>
    %c0_74 = arith.constant 0 : index
    %c0_75 = arith.constant 0 : index
    %154 = vector.load %arg15[%c0_74, %c0_75] : memref<64x32xbf16, #tpu.memory_space<vmem>>, vector<64x32xbf16>
    %cst_76 = arith.constant dense<0.000000e+00> : vector<8x32xf32>
    %155 = tpu.matmul %153, %154, %cst_76 {dimension_numbers = #tpu.dot_dimension_numbers<[1], [0], [0], [1], [0, 0, 1, 1], [], []>} : vector<8x64xbf16>, vector<64x32xbf16>, vector<8x32xf32> -> vector<8x32xf32>
    %c0_77 = arith.constant 0 : index
    %c0_78 = arith.constant 0 : index
    %156 = vector.load %arg16[%c0_77, %c0_78] : memref<1x32xf32, #tpu.memory_space<vmem>>, vector<1x32xf32>
    %157 = vector.broadcast %156 : vector<1x32xf32> to vector<8x32xf32>
    %158 = arith.addf %155, %157 : vector<8x32xf32>
    %159 = arith.addf %144, %158 : vector<8x32xf32>
    %c2_79 = arith.constant 2 : index
    %160 = memref.load %arg17[%c2_79] : memref<4xf32, #tpu.memory_space<smem>>
    %c3_80 = arith.constant 3 : index
    %161 = memref.load %arg17[%c3_80] : memref<4xf32, #tpu.memory_space<smem>>
    %cst_81 = arith.constant dense<0.000000e+00> : vector<8xf32>
    %162 = vector.multi_reduction <add>, %159, %cst_81 [1] : vector<8x32xf32> to vector<8xf32>
    %163 = vector.shape_cast %162 : vector<8xf32> to vector<8x1xf32>
    %cst_82 = arith.constant 3.200000e+01 : f32
    %164 = vector.broadcast %cst_82 : f32 to vector<8x1xf32>
    %165 = arith.divf %163, %164 : vector<8x1xf32>
    %166 = vector.broadcast %165 : vector<8x1xf32> to vector<8x32xf32>
    %167 = arith.subf %159, %166 : vector<8x32xf32>
    %168 = arith.mulf %167, %167 : vector<8x32xf32>
    %cst_83 = arith.constant dense<0.000000e+00> : vector<8xf32>
    %169 = vector.multi_reduction <add>, %168, %cst_83 [1] : vector<8x32xf32> to vector<8xf32>
    %170 = vector.shape_cast %169 : vector<8xf32> to vector<8x1xf32>
    %cst_84 = arith.constant 3.100000e+01 : f32
    %171 = vector.broadcast %cst_84 : f32 to vector<8x1xf32>
    %172 = arith.divf %170, %171 : vector<8x1xf32>
    %173 = math.sqrt %172 : vector<8x1xf32>
    %cst_85 = arith.constant 9.99999974E-6 : f32
    %174 = vector.broadcast %cst_85 : f32 to vector<8x1xf32>
    %175 = arith.addf %173, %174 : vector<8x1xf32>
    %176 = vector.broadcast %175 : vector<8x1xf32> to vector<8x32xf32>
    %177 = arith.divf %167, %176 : vector<8x32xf32>
    %178 = vector.broadcast %160 : f32 to vector<8x32xf32>
    %179 = arith.mulf %177, %178 : vector<8x32xf32>
    %180 = vector.broadcast %161 : f32 to vector<8x32xf32>
    %181 = arith.addf %179, %180 : vector<8x32xf32>
    %c0_86 = arith.constant 0 : index
    %c0_87 = arith.constant 0 : index
    %c0_88 = arith.constant 0 : index
    %182 = vector.load %arg18[%c0_86, %c0_87, %c0_88] : memref<1x8x32xf32, #tpu.memory_space<vmem>>, vector<1x8x32xf32>
    %183 = vector.shape_cast %182 : vector<1x8x32xf32> to vector<8x32xf32>
    %184 = vector.shape_cast %181 : vector<8x32xf32> to vector<1x8x32xf32>
    tpu.vector_store %arg18[%c0_86, %c0_87, %c0_88], %184 {strides = array<i32>} : memref<1x8x32xf32, #tpu.memory_space<vmem>>, vector<1x8x32xf32>,
    return
  }
  func.func @transform_0(%arg0: i32, %arg1: i32) -> (i32, i32, i32) {
    %c0_i32 = arith.constant 0 : i32
    %c0_i32_0 = arith.constant 0 : i32
    return %arg0, %arg1, %c0_i32 : i32, i32, i32
  }
  func.func @transform_1(%arg0: i32, %arg1: i32) -> (i32, i32, i32) {
    %c0_i32 = arith.constant 0 : i32
    %c0_i32_0 = arith.constant 0 : i32
    %c0_i32_1 = arith.constant 0 : i32
    return %arg0, %c0_i32, %c0_i32_0 : i32, i32, i32
  }
  func.func @transform_2(%arg0: i32, %arg1: i32) -> (i32, i32, i32) {
    %c0_i32 = arith.constant 0 : i32
    %c0_i32_0 = arith.constant 0 : i32
    %c0_i32_1 = arith.constant 0 : i32
    return %arg0, %c0_i32, %c0_i32_0 : i32, i32, i32
  }
  func.func @transform_3(%arg0: i32, %arg1: i32) -> (i32, i32) {
    %c0_i32 = arith.constant 0 : i32
    %c0_i32_0 = arith.constant 0 : i32
    %c0_i32_1 = arith.constant 0 : i32
    return %c0_i32, %c0_i32_0 : i32, i32
  }
  func.func @transform_4(%arg0: i32, %arg1: i32) -> (i32, i32) {
    %c0_i32 = arith.constant 0 : i32
    %c0_i32_0 = arith.constant 0 : i32
    %c0_i32_1 = arith.constant 0 : i32
    return %c0_i32, %c0_i32_0 : i32, i32
  }
  func.func @transform_5(%arg0: i32, %arg1: i32) -> (i32, i32) {
    %c0_i32 = arith.constant 0 : i32
    %c0_i32_0 = arith.constant 0 : i32
    %c0_i32_1 = arith.constant 0 : i32
    return %c0_i32, %c0_i32_0 : i32, i32
  }
  func.func @transform_6(%arg0: i32, %arg1: i32) -> (i32, i32) {
    %c0_i32 = arith.constant 0 : i32
    %c0_i32_0 = arith.constant 0 : i32
    %c0_i32_1 = arith.constant 0 : i32
    return %c0_i32, %c0_i32_0 : i32, i32
  }
  func.func @transform_7(%arg0: i32, %arg1: i32) -> (i32, i32) {
    %c0_i32 = arith.constant 0 : i32
    %c0_i32_0 = arith.constant 0 : i32
    %c0_i32_1 = arith.constant 0 : i32
    return %c0_i32, %c0_i32_0 : i32, i32
  }
  func.func @transform_8(%arg0: i32, %arg1: i32) -> (i32, i32) {
    %c0_i32 = arith.constant 0 : i32
    %c0_i32_0 = arith.constant 0 : i32
    %c0_i32_1 = arith.constant 0 : i32
    return %c0_i32, %c0_i32_0 : i32, i32
  }
  func.func @transform_9(%arg0: i32, %arg1: i32) -> (i32, i32) {
    %c0_i32 = arith.constant 0 : i32
    %c0_i32_0 = arith.constant 0 : i32
    %c0_i32_1 = arith.constant 0 : i32
    return %c0_i32, %c0_i32_0 : i32, i32
  }
  func.func @transform_10(%arg0: i32, %arg1: i32) -> (i32, i32) {
    %c0_i32 = arith.constant 0 : i32
    %c0_i32_0 = arith.constant 0 : i32
    %c0_i32_1 = arith.constant 0 : i32
    return %c0_i32, %c0_i32_0 : i32, i32
  }
  func.func @transform_11(%arg0: i32, %arg1: i32) -> (i32, i32) {
    %c0_i32 = arith.constant 0 : i32
    %c0_i32_0 = arith.constant 0 : i32
    %c0_i32_1 = arith.constant 0 : i32
    return %c0_i32, %c0_i32_0 : i32, i32
  }
  func.func @transform_12(%arg0: i32, %arg1: i32) -> (i32, i32) {
    %c0_i32 = arith.constant 0 : i32
    %c0_i32_0 = arith.constant 0 : i32
    %c0_i32_1 = arith.constant 0 : i32
    return %c0_i32, %c0_i32_0 : i32, i32
  }
  func.func @transform_13(%arg0: i32, %arg1: i32) -> (i32, i32) {
    %c0_i32 = arith.constant 0 : i32
    %c0_i32_0 = arith.constant 0 : i32
    %c0_i32_1 = arith.constant 0 : i32
    return %c0_i32, %c0_i32_0 : i32, i32
  }
  func.func @transform_14(%arg0: i32, %arg1: i32) -> (i32, i32) {
    %c0_i32 = arith.constant 0 : i32
    %c0_i32_0 = arith.constant 0 : i32
    %c0_i32_1 = arith.constant 0 : i32
    return %c0_i32, %c0_i32_0 : i32, i32
  }
  func.func @transform_15(%arg0: i32, %arg1: i32) -> i32 {
    %c0_i32 = arith.constant 0 : i32
    %c0_i32_0 = arith.constant 0 : i32
    return %c0_i32 : i32
  }
  func.func @transform_16(%arg0: i32, %arg1: i32) -> (i32, i32, i32) {
    %c0_i32 = arith.constant 0 : i32
    %c0_i32_0 = arith.constant 0 : i32
    return %arg0, %arg1, %c0_i32 : i32, i32, i32
  }
  func.func @transform_17(%arg0: i32, %arg1: i32) -> (i32, i32, i32, i32) {
    %c0_i32 = arith.constant 0 : i32
    %c0_i32_0 = arith.constant 0 : i32
    %c0_i32_1 = arith.constant 0 : i32
    return %arg0, %c0_i32, %arg1, %c0_i32_0 : i32, i32, i32, i32
  }
}

module attributes {stable_mosaic.version = 11 : i64} {
  func.func @encoder_block_kernel(%arg0: i32, %arg1: i32, %arg2: memref<1x8x32xf32, #tpu.memory_space<vmem>>, %arg3: memref<1x8x32xbf16, #tpu.memory_space<vmem>>, %arg4: memref<1x1x8xf32, #tpu.memory_space<vmem>>, %arg5: memref<32x32xbf16, #tpu.memory_space<vmem>>, %arg6: memref<1x32xf32, #tpu.memory_space<vmem>>, %arg7: memref<32x32xbf16, #tpu.memory_space<vmem>>, %arg8: memref<1x32xf32, #tpu.memory_space<vmem>>, %arg9: memref<32x32xbf16, #tpu.memory_space<vmem>>, %arg10: memref<1x32xf32, #tpu.memory_space<vmem>>, %arg11: memref<32x32xbf16, #tpu.memory_space<vmem>>, %arg12: memref<1x32xf32, #tpu.memory_space<vmem>>, %arg13: memref<32x64xbf16, #tpu.memory_space<vmem>>, %arg14: memref<1x64xf32, #tpu.memory_space<vmem>>, %arg15: memref<64x32xbf16, #tpu.memory_space<vmem>>, %arg16: memref<1x32xf32, #tpu.memory_space<vmem>>, %arg17: memref<4xf32, #tpu.memory_space<smem>>, %arg18: memref<1x8x32xf32, #tpu.memory_space<vmem>>, %arg19: memref<1x4x8x8xbf16, #tpu.memory_space<vmem>>, %arg20: memref<8x32xbf16, #tpu.memory_space<vmem>>, %arg21: memref<8x32xbf16, #tpu.memory_space<vmem>>, %arg22: memref<8x32xf32, #tpu.memory_space<vmem>>) attributes {dimension_semantics = [#tpu.dimension_semantics<parallel>, #tpu.dimension_semantics<arbitrary>], iteration_bounds = array<i64: 2, 1>, scalar_prefetch = 0 : i64, scratch_operands = 3 : i64, tpu.core_type = #tpu.core_type<tc>, window_params = [{transform_indices = @transform_0, window_bounds = array<i64: 1, 8, 32>}, {transform_indices = @transform_1, window_bounds = array<i64: 1, 8, 32>}, {transform_indices = @transform_2, window_bounds = array<i64: 1, 1, 8>}, {pipeline_mode = #tpu.pipeline_mode<synchronous>, transform_indices = @transform_3, window_bounds = array<i64: 32, 32>}, {pipeline_mode = #tpu.pipeline_mode<synchronous>, transform_indices = @transform_4, window_bounds = array<i64: 1, 32>}, {pipeline_mode = #tpu.pipeline_mode<synchronous>, transform_indices = @transform_5, window_bounds = array<i64: 32, 32>}, {pipeline_mode = #tpu.pipeline_mode<synchronous>, transform_indices = @transform_6, window_bounds = array<i64: 1, 32>}, {pipeline_mode = #tpu.pipeline_mode<synchronous>, transform_indices = @transform_7, window_bounds = array<i64: 32, 32>}, {pipeline_mode = #tpu.pipeline_mode<synchronous>, transform_indices = @transform_8, window_bounds = array<i64: 1, 32>}, {pipeline_mode = #tpu.pipeline_mode<synchronous>, transform_indices = @transform_9, window_bounds = array<i64: 32, 32>}, {pipeline_mode = #tpu.pipeline_mode<synchronous>, transform_indices = @transform_10, window_bounds = array<i64: 1, 32>}, {pipeline_mode = #tpu.pipeline_mode<synchronous>, transform_indices = @transform_11, window_bounds = array<i64: 32, 64>}, {pipeline_mode = #tpu.pipeline_mode<synchronous>, transform_indices = @transform_12, window_bounds = array<i64: 1, 64>}, {pipeline_mode = #tpu.pipeline_mode<synchronous>, transform_indices = @transform_13, window_bounds = array<i64: 64, 32>}, {pipeline_mode = #tpu.pipeline_mode<synchronous>, transform_indices = @transform_14, window_bounds = array<i64: 1, 32>}, {transform_indices = @transform_15, window_bounds = array<i64: 4>}, {transform_indices = @transform_16, window_bounds = array<i64: 1, 8, 32>}, {transform_indices = @transform_17, window_bounds = array<i64: 1, 4, 8, 8>}]} {
    %c0_i32 = arith.constant 0 : i32
    %0 = arith.cmpi eq, %arg1, %c0_i32 : i32
    %1 = arith.extui %0 : i1 to i32
    %c0_i32_0 = arith.constant 0 : i32
    %2 = arith.cmpi ne, %1, %c0_i32_0 : i32
    scf.if %2 {
      %c0_89 = arith.constant 0 : index
      %c0_90 = arith.constant 0 : index
      %c0_91 = arith.constant 0 : index
      %185 = vector.load %arg3[%c0_89, %c0_90, %c0_91] : memref<1x8x32xbf16, #tpu.memory_space<vmem>>, vector<1x8x32xbf16>
      %186 = vector.shape_cast %185 : vector<1x8x32xbf16> to vector<8x32xbf16>
      %c0_92 = arith.constant 0 : index
      %c0_93 = arith.constant 0 : index
      %187 = vector.load %arg7[%c0_92, %c0_93] : memref<32x32xbf16, #tpu.memory_space<vmem>>, vector<32x32xbf16>
      %cst_94 = arith.constant dense<0.000000e+00> : vector<8x32xf32>
      %188 = tpu.matmul %186, %187, %cst_94 {dimension_numbers = #tpu.dot_dimension_numbers<[1], [0], [0], [1], [0, 0, 1, 1], [], []>} : vector<8x32xbf16>, vector<32x32xbf16>, vector<8x32xf32> -> vector<8x32xf32>
      %c0_95 = arith.constant 0 : index
      %c0_96 = arith.constant 0 : index
      %189 = vector.load %arg8[%c0_95, %c0_96] : memref<1x32xf32, #tpu.memory_space<vmem>>, vector<1x32xf32>
      %190 = vector.broadcast %189 : vector<1x32xf32> to vector<8x32xf32>
      %191 = arith.addf %188, %190 : vector<8x32xf32>
      %c0_97 = arith.constant 0 : index
      %c0_98 = arith.constant 0 : index
      %192 = vector.load %arg9[%c0_97, %c0_98] : memref<32x32xbf16, #tpu.memory_space<vmem>>, vector<32x32xbf16>
      %cst_99 = arith.constant dense<0.000000e+00> : vector<8x32xf32>
      %193 = tpu.matmul %186, %192, %cst_99 {dimension_numbers = #tpu.dot_dimension_numbers<[1], [0], [0], [1], [0, 0, 1, 1], [], []>} : vector<8x32xbf16>, vector<32x32xbf16>, vector<8x32xf32> -> vector<8x32xf32>
      %c0_100 = arith.constant 0 : index
      %c0_101 = arith.constant 0 : index
      %194 = vector.load %arg10[%c0_100, %c0_101] : memref<1x32xf32, #tpu.memory_space<vmem>>, vector<1x32xf32>
      %195 = vector.broadcast %194 : vector<1x32xf32> to vector<8x32xf32>
      %196 = arith.addf %193, %195 : vector<8x32xf32>
      %197 = arith.truncf %191 : vector<8x32xf32> to vector<8x32xbf16>
      %c0_102 = arith.constant 0 : index
      %c0_103 = arith.constant 0 : index
      %198 = vector.load %arg20[%c0_102, %c0_103] : memref<8x32xbf16, #tpu.memory_space<vmem>>, vector<8x32xbf16>
      tpu.vector_store %arg20[%c0_102, %c0_103], %197 {strides = array<i32>} : memref<8x32xbf16, #tpu.memory_space<vmem>>, vector<8x32xbf16>,
      %199 = arith.truncf %196 : vector<8x32xf32> to vector<8x32xbf16>
      %c0_104 = arith.constant 0 : index
      %c0_105 = arith.constant 0 : index
      %200 = vector.load %arg21[%c0_104, %c0_105] : memref<8x32xbf16, #tpu.memory_space<vmem>>, vector<8x32xbf16>
      tpu.vector_store %arg21[%c0_104, %c0_105], %199 {strides = array<i32>} : memref<8x32xbf16, #tpu.memory_space<vmem>>, vector<8x32xbf16>,
    } else {
    }
    %c0 = arith.constant 0 : index
    %c0_1 = arith.constant 0 : index
    %c0_2 = arith.constant 0 : index
    %3 = vector.load %arg2[%c0, %c0_1, %c0_2] : memref<1x8x32xf32, #tpu.memory_space<vmem>>, vector<1x8x32xf32>
    %4 = vector.shape_cast %3 : vector<1x8x32xf32> to vector<8x32xf32>
    %c0_3 = arith.constant 0 : index
    %c0_4 = arith.constant 0 : index
    %c0_5 = arith.constant 0 : index
    %5 = vector.load %arg4[%c0_3, %c0_4, %c0_5] : memref<1x1x8xf32, #tpu.memory_space<vmem>>, vector<1x1x8xf32>
    %6 = vector.shape_cast %5 : vector<1x1x8xf32> to vector<1x8xf32>
    %cst = arith.constant 0.000000e+00 : f32
    %7 = vector.broadcast %cst : f32 to vector<1x8xf32>
    %8 = arith.cmpf ogt, %6, %7 : vector<1x8xf32>
    %cst_6 = arith.constant 0.000000e+00 : f32
    %cst_7 = arith.constant -1.000000e+09 : f32
    %9 = vector.broadcast %cst_6 : f32 to vector<1x8xf32>
    %10 = vector.broadcast %cst_7 : f32 to vector<1x8xf32>
    %11 = arith.select %8, %9, %10 : vector<1x8xi1>, vector<1x8xf32>
    %c0_8 = arith.constant 0 : index
    %c0_9 = arith.constant 0 : index
    %c0_10 = arith.constant 0 : index
    %12 = vector.load %arg2[%c0_8, %c0_9, %c0_10] : memref<1x8x32xf32, #tpu.memory_space<vmem>>, vector<1x8x32xf32>
    %13 = vector.shape_cast %12 : vector<1x8x32xf32> to vector<8x32xf32>
    %14 = arith.truncf %13 : vector<8x32xf32> to vector<8x32xbf16>
    %c0_11 = arith.constant 0 : index
    %c0_12 = arith.constant 0 : index
    %15 = vector.load %arg5[%c0_11, %c0_12] : memref<32x32xbf16, #tpu.memory_space<vmem>>, vector<32x32xbf16>
    %cst_13 = arith.constant dense<0.000000e+00> : vector<8x32xf32>
    %16 = tpu.matmul %14, %15, %cst_13 {dimension_numbers = #tpu.dot_dimension_numbers<[1], [0], [0], [1], [0, 0, 1, 1], [], []>} : vector<8x32xbf16>, vector<32x32xbf16>, vector<8x32xf32> -> vector<8x32xf32>
    %c0_14 = arith.constant 0 : index
    %c0_15 = arith.constant 0 : index
    %17 = vector.load %arg6[%c0_14, %c0_15] : memref<1x32xf32, #tpu.memory_space<vmem>>, vector<1x32xf32>
    %18 = vector.broadcast %17 : vector<1x32xf32> to vector<8x32xf32>
    %19 = arith.addf %16, %18 : vector<8x32xf32>
    %20 = arith.truncf %19 : vector<8x32xf32> to vector<8x32xbf16>
    %c0_16 = arith.constant 0 : index
    %c0_17 = arith.constant 0 : index
    %21 = vector.load %arg20[%c0_16, %c0_17] : memref<8x32xbf16, #tpu.memory_space<vmem>>, vector<8x32xbf16>
    %c0_18 = arith.constant 0 : index
    %c0_19 = arith.constant 0 : index
    %22 = vector.load %arg21[%c0_18, %c0_19] : memref<8x32xbf16, #tpu.memory_space<vmem>>, vector<8x32xbf16>
    %23 = vector.extract_strided_slice %20 {offsets = [0, 0], sizes = [8, 8], strides = [1, 1]} : vector<8x32xbf16> to vector<8x8xbf16>
    %24 = vector.extract_strided_slice %21 {offsets = [0, 0], sizes = [8, 8], strides = [1, 1]} : vector<8x32xbf16> to vector<8x8xbf16>
    %cst_20 = arith.constant dense<0.000000e+00> : vector<8x8xf32>
    %25 = tpu.matmul %23, %24, %cst_20 {dimension_numbers = #tpu.dot_dimension_numbers<[1], [1], [0], [0], [0, 0, 1, 0], [], []>} : vector<8x8xbf16>, vector<8x8xbf16>, vector<8x8xf32> -> vector<8x8xf32>
    %26 = vector.broadcast %11 : vector<1x8xf32> to vector<8x8xf32>
    %27 = arith.addf %25, %26 : vector<8x8xf32>
    %cst_21 = arith.constant dense<0xFF800000> : vector<8xf32>
    %28 = vector.multi_reduction <maximumf>, %27, %cst_21 [1] : vector<8x8xf32> to vector<8xf32>
    %29 = vector.shape_cast %28 : vector<8xf32> to vector<8x1xf32>
    %30 = vector.broadcast %29 : vector<8x1xf32> to vector<8x8xf32>
    %31 = arith.subf %27, %30 : vector<8x8xf32>
    %32 = math.exp %31 : vector<8x8xf32>
    %cst_22 = arith.constant dense<0.000000e+00> : vector<8xf32>
    %33 = vector.multi_reduction <add>, %32, %cst_22 [1] : vector<8x8xf32> to vector<8xf32>
    %34 = vector.shape_cast %33 : vector<8xf32> to vector<8x1xf32>
    %35 = tpu.reciprocal %34 {approx = true} : vector<8x1xf32> -> vector<8x1xf32>
    %36 = vector.broadcast %35 : vector<8x1xf32> to vector<8x8xf32>
    %37 = arith.mulf %32, %36 : vector<8x8xf32>
    %38 = arith.truncf %37 : vector<8x8xf32> to vector<8x8xbf16>
    %c0_23 = arith.constant 0 : index
    %c0_24 = arith.constant 0 : index
    %c0_25 = arith.constant 0 : index
    %c0_26 = arith.constant 0 : index
    %39 = vector.load %arg19[%c0_23, %c0_24, %c0_25, %c0_26] : memref<1x4x8x8xbf16, #tpu.memory_space<vmem>>, vector<1x1x8x8xbf16>
    %40 = vector.shape_cast %39 : vector<1x1x8x8xbf16> to vector<8x8xbf16>
    %41 = vector.shape_cast %38 : vector<8x8xbf16> to vector<1x1x8x8xbf16>
    tpu.vector_store %arg19[%c0_23, %c0_24, %c0_25, %c0_26], %41 {strides = array<i32>} : memref<1x4x8x8xbf16, #tpu.memory_space<vmem>>, vector<1x1x8x8xbf16>,
    %42 = arith.truncf %37 : vector<8x8xf32> to vector<8x8xbf16>
    %43 = vector.extract_strided_slice %22 {offsets = [0, 0], sizes = [8, 8], strides = [1, 1]} : vector<8x32xbf16> to vector<8x8xbf16>
    %cst_27 = arith.constant dense<0.000000e+00> : vector<8x8xf32>
    %44 = tpu.matmul %42, %43, %cst_27 {dimension_numbers = #tpu.dot_dimension_numbers<[1], [0], [0], [1], [0, 0, 1, 1], [], []>} : vector<8x8xbf16>, vector<8x8xbf16>, vector<8x8xf32> -> vector<8x8xf32>
    %c0_28 = arith.constant 0 : index
    %c0_29 = arith.constant 0 : index
    %45 = vector.load %arg22[%c0_28, %c0_29] : memref<8x32xf32, #tpu.memory_space<vmem>>, vector<8x8xf32>
    tpu.vector_store %arg22[%c0_28, %c0_29], %44 {strides = array<i32>} : memref<8x32xf32, #tpu.memory_space<vmem>>, vector<8x8xf32>,
    %46 = vector.extract_strided_slice %20 {offsets = [0, 8], sizes = [8, 8], strides = [1, 1]} : vector<8x32xbf16> to vector<8x8xbf16>
    %47 = vector.extract_strided_slice %21 {offsets = [0, 8], sizes = [8, 8], strides = [1, 1]} : vector<8x32xbf16> to vector<8x8xbf16>
    %cst_30 = arith.constant dense<0.000000e+00> : vector<8x8xf32>
    %48 = tpu.matmul %46, %47, %cst_30 {dimension_numbers = #tpu.dot_dimension_numbers<[1], [1], [0], [0], [0, 0, 1, 0], [], []>} : vector<8x8xbf16>, vector<8x8xbf16>, vector<8x8xf32> -> vector<8x8xf32>
    %49 = vector.broadcast %11 : vector<1x8xf32> to vector<8x8xf32>
    %50 = arith.addf %48, %49 : vector<8x8xf32>
    %cst_31 = arith.constant dense<0xFF800000> : vector<8xf32>
    %51 = vector.multi_reduction <maximumf>, %50, %cst_31 [1] : vector<8x8xf32> to vector<8xf32>
    %52 = vector.shape_cast %51 : vector<8xf32> to vector<8x1xf32>
    %53 = vector.broadcast %52 : vector<8x1xf32> to vector<8x8xf32>
    %54 = arith.subf %50, %53 : vector<8x8xf32>
    %55 = math.exp %54 : vector<8x8xf32>
    %cst_32 = arith.constant dense<0.000000e+00> : vector<8xf32>
    %56 = vector.multi_reduction <add>, %55, %cst_32 [1] : vector<8x8xf32> to vector<8xf32>
    %57 = vector.shape_cast %56 : vector<8xf32> to vector<8x1xf32>
    %58 = tpu.reciprocal %57 {approx = true} : vector<8x1xf32> -> vector<8x1xf32>
    %59 = vector.broadcast %58 : vector<8x1xf32> to vector<8x8xf32>
    %60 = arith.mulf %55, %59 : vector<8x8xf32>
    %61 = arith.truncf %60 : vector<8x8xf32> to vector<8x8xbf16>
    %c0_33 = arith.constant 0 : index
    %c1 = arith.constant 1 : index
    %c0_34 = arith.constant 0 : index
    %c0_35 = arith.constant 0 : index
    %62 = vector.load %arg19[%c0_33, %c1, %c0_34, %c0_35] : memref<1x4x8x8xbf16, #tpu.memory_space<vmem>>, vector<1x1x8x8xbf16>
    %63 = vector.shape_cast %62 : vector<1x1x8x8xbf16> to vector<8x8xbf16>
    %64 = vector.shape_cast %61 : vector<8x8xbf16> to vector<1x1x8x8xbf16>
    tpu.vector_store %arg19[%c0_33, %c1, %c0_34, %c0_35], %64 {strides = array<i32>} : memref<1x4x8x8xbf16, #tpu.memory_space<vmem>>, vector<1x1x8x8xbf16>,
    %65 = arith.truncf %60 : vector<8x8xf32> to vector<8x8xbf16>
    %66 = vector.extract_strided_slice %22 {offsets = [0, 8], sizes = [8, 8], strides = [1, 1]} : vector<8x32xbf16> to vector<8x8xbf16>
    %cst_36 = arith.constant dense<0.000000e+00> : vector<8x8xf32>
    %67 = tpu.matmul %65, %66, %cst_36 {dimension_numbers = #tpu.dot_dimension_numbers<[1], [0], [0], [1], [0, 0, 1, 1], [], []>} : vector<8x8xbf16>, vector<8x8xbf16>, vector<8x8xf32> -> vector<8x8xf32>
    %c0_37 = arith.constant 0 : index
    %c8 = arith.constant 8 : index
    %68 = vector.load %arg22[%c0_37, %c8] : memref<8x32xf32, #tpu.memory_space<vmem>>, vector<8x8xf32>
    tpu.vector_store %arg22[%c0_37, %c8], %67 {strides = array<i32>} : memref<8x32xf32, #tpu.memory_space<vmem>>, vector<8x8xf32>,
    %69 = vector.extract_strided_slice %20 {offsets = [0, 16], sizes = [8, 8], strides = [1, 1]} : vector<8x32xbf16> to vector<8x8xbf16>
    %70 = vector.extract_strided_slice %21 {offsets = [0, 16], sizes = [8, 8], strides = [1, 1]} : vector<8x32xbf16> to vector<8x8xbf16>
    %cst_38 = arith.constant dense<0.000000e+00> : vector<8x8xf32>
    %71 = tpu.matmul %69, %70, %cst_38 {dimension_numbers = #tpu.dot_dimension_numbers<[1], [1], [0], [0], [0, 0, 1, 0], [], []>} : vector<8x8xbf16>, vector<8x8xbf16>, vector<8x8xf32> -> vector<8x8xf32>
    %72 = vector.broadcast %11 : vector<1x8xf32> to vector<8x8xf32>
    %73 = arith.addf %71, %72 : vector<8x8xf32>
    %cst_39 = arith.constant dense<0xFF800000> : vector<8xf32>
    %74 = vector.multi_reduction <maximumf>, %73, %cst_39 [1] : vector<8x8xf32> to vector<8xf32>
    %75 = vector.shape_cast %74 : vector<8xf32> to vector<8x1xf32>
    %76 = vector.broadcast %75 : vector<8x1xf32> to vector<8x8xf32>
    %77 = arith.subf %73, %76 : vector<8x8xf32>
    %78 = math.exp %77 : vector<8x8xf32>
    %cst_40 = arith.constant dense<0.000000e+00> : vector<8xf32>
    %79 = vector.multi_reduction <add>, %78, %cst_40 [1] : vector<8x8xf32> to vector<8xf32>
    %80 = vector.shape_cast %79 : vector<8xf32> to vector<8x1xf32>
    %81 = tpu.reciprocal %80 {approx = true} : vector<8x1xf32> -> vector<8x1xf32>
    %82 = vector.broadcast %81 : vector<8x1xf32> to vector<8x8xf32>
    %83 = arith.mulf %78, %82 : vector<8x8xf32>
    %84 = arith.truncf %83 : vector<8x8xf32> to vector<8x8xbf16>
    %c0_41 = arith.constant 0 : index
    %c2 = arith.constant 2 : index
    %c0_42 = arith.constant 0 : index
    %c0_43 = arith.constant 0 : index
    %85 = vector.load %arg19[%c0_41, %c2, %c0_42, %c0_43] : memref<1x4x8x8xbf16, #tpu.memory_space<vmem>>, vector<1x1x8x8xbf16>
    %86 = vector.shape_cast %85 : vector<1x1x8x8xbf16> to vector<8x8xbf16>
    %87 = vector.shape_cast %84 : vector<8x8xbf16> to vector<1x1x8x8xbf16>
    tpu.vector_store %arg19[%c0_41, %c2, %c0_42, %c0_43], %87 {strides = array<i32>} : memref<1x4x8x8xbf16, #tpu.memory_space<vmem>>, vector<1x1x8x8xbf16>,
    %88 = arith.truncf %83 : vector<8x8xf32> to vector<8x8xbf16>
    %89 = vector.extract_strided_slice %22 {offsets = [0, 16], sizes = [8, 8], strides = [1, 1]} : vector<8x32xbf16> to vector<8x8xbf16>
    %cst_44 = arith.constant dense<0.000000e+00> : vector<8x8xf32>
    %90 = tpu.matmul %88, %89, %cst_44 {dimension_numbers = #tpu.dot_dimension_numbers<[1], [0], [0], [1], [0, 0, 1, 1], [], []>} : vector<8x8xbf16>, vector<8x8xbf16>, vector<8x8xf32> -> vector<8x8xf32>
    %c0_45 = arith.constant 0 : index
    %c16 = arith.constant 16 : index
    %91 = vector.load %arg22[%c0_45, %c16] : memref<8x32xf32, #tpu.memory_space<vmem>>, vector<8x8xf32>
    tpu.vector_store %arg22[%c0_45, %c16], %90 {strides = array<i32>} : memref<8x32xf32, #tpu.memory_space<vmem>>, vector<8x8xf32>,
    %92 = vector.extract_strided_slice %20 {offsets = [0, 24], sizes = [8, 8], strides = [1, 1]} : vector<8x32xbf16> to vector<8x8xbf16>
    %93 = vector.extract_strided_slice %21 {offsets = [0, 24], sizes = [8, 8], strides = [1, 1]} : vector<8x32xbf16> to vector<8x8xbf16>
    %cst_46 = arith.constant dense<0.000000e+00> : vector<8x8xf32>
    %94 = tpu.matmul %92, %93, %cst_46 {dimension_numbers = #tpu.dot_dimension_numbers<[1], [1], [0], [0], [0, 0, 1, 0], [], []>} : vector<8x8xbf16>, vector<8x8xbf16>, vector<8x8xf32> -> vector<8x8xf32>
    %95 = vector.broadcast %11 : vector<1x8xf32> to vector<8x8xf32>
    %96 = arith.addf %94, %95 : vector<8x8xf32>
    %cst_47 = arith.constant dense<0xFF800000> : vector<8xf32>
    %97 = vector.multi_reduction <maximumf>, %96, %cst_47 [1] : vector<8x8xf32> to vector<8xf32>
    %98 = vector.shape_cast %97 : vector<8xf32> to vector<8x1xf32>
    %99 = vector.broadcast %98 : vector<8x1xf32> to vector<8x8xf32>
    %100 = arith.subf %96, %99 : vector<8x8xf32>
    %101 = math.exp %100 : vector<8x8xf32>
    %cst_48 = arith.constant dense<0.000000e+00> : vector<8xf32>
    %102 = vector.multi_reduction <add>, %101, %cst_48 [1] : vector<8x8xf32> to vector<8xf32>
    %103 = vector.shape_cast %102 : vector<8xf32> to vector<8x1xf32>
    %104 = tpu.reciprocal %103 {approx = true} : vector<8x1xf32> -> vector<8x1xf32>
    %105 = vector.broadcast %104 : vector<8x1xf32> to vector<8x8xf32>
    %106 = arith.mulf %101, %105 : vector<8x8xf32>
    %107 = arith.truncf %106 : vector<8x8xf32> to vector<8x8xbf16>
    %c0_49 = arith.constant 0 : index
    %c3 = arith.constant 3 : index
    %c0_50 = arith.constant 0 : index
    %c0_51 = arith.constant 0 : index
    %108 = vector.load %arg19[%c0_49, %c3, %c0_50, %c0_51] : memref<1x4x8x8xbf16, #tpu.memory_space<vmem>>, vector<1x1x8x8xbf16>
    %109 = vector.shape_cast %108 : vector<1x1x8x8xbf16> to vector<8x8xbf16>
    %110 = vector.shape_cast %107 : vector<8x8xbf16> to vector<1x1x8x8xbf16>
    tpu.vector_store %arg19[%c0_49, %c3, %c0_50, %c0_51], %110 {strides = array<i32>} : memref<1x4x8x8xbf16, #tpu.memory_space<vmem>>, vector<1x1x8x8xbf16>,
    %111 = arith.truncf %106 : vector<8x8xf32> to vector<8x8xbf16>
    %112 = vector.extract_strided_slice %22 {offsets = [0, 24], sizes = [8, 8], strides = [1, 1]} : vector<8x32xbf16> to vector<8x8xbf16>
    %cst_52 = arith.constant dense<0.000000e+00> : vector<8x8xf32>
    %113 = tpu.matmul %111, %112, %cst_52 {dimension_numbers = #tpu.dot_dimension_numbers<[1], [0], [0], [1], [0, 0, 1, 1], [], []>} : vector<8x8xbf16>, vector<8x8xbf16>, vector<8x8xf32> -> vector<8x8xf32>
    %c0_53 = arith.constant 0 : index
    %c24 = arith.constant 24 : index
    %114 = vector.load %arg22[%c0_53, %c24] : memref<8x32xf32, #tpu.memory_space<vmem>>, vector<8x8xf32>
    tpu.vector_store %arg22[%c0_53, %c24], %113 {strides = array<i32>} : memref<8x32xf32, #tpu.memory_space<vmem>>, vector<8x8xf32>,
    %c0_54 = arith.constant 0 : index
    %c0_55 = arith.constant 0 : index
    %115 = vector.load %arg22[%c0_54, %c0_55] : memref<8x32xf32, #tpu.memory_space<vmem>>, vector<8x32xf32>
    %116 = arith.truncf %115 : vector<8x32xf32> to vector<8x32xbf16>
    %c0_56 = arith.constant 0 : index
    %c0_57 = arith.constant 0 : index
    %117 = vector.load %arg11[%c0_56, %c0_57] : memref<32x32xbf16, #tpu.memory_space<vmem>>, vector<32x32xbf16>
    %cst_58 = arith.constant dense<0.000000e+00> : vector<8x32xf32>
    %118 = tpu.matmul %116, %117, %cst_58 {dimension_numbers = #tpu.dot_dimension_numbers<[1], [0], [0], [1], [0, 0, 1, 1], [], []>} : vector<8x32xbf16>, vector<32x32xbf16>, vector<8x32xf32> -> vector<8x32xf32>
    %c0_59 = arith.constant 0 : index
    %c0_60 = arith.constant 0 : index
    %119 = vector.load %arg12[%c0_59, %c0_60] : memref<1x32xf32, #tpu.memory_space<vmem>>, vector<1x32xf32>
    %120 = vector.broadcast %119 : vector<1x32xf32> to vector<8x32xf32>
    %121 = arith.addf %118, %120 : vector<8x32xf32>
    %122 = arith.addf %4, %121 : vector<8x32xf32>
    %c0_61 = arith.constant 0 : index
    %123 = memref.load %arg17[%c0_61] : memref<4xf32, #tpu.memory_space<smem>>
    %c1_62 = arith.constant 1 : index
    %124 = memref.load %arg17[%c1_62] : memref<4xf32, #tpu.memory_space<smem>>
    %cst_63 = arith.constant dense<0.000000e+00> : vector<8xf32>
    %125 = vector.multi_reduction <add>, %122, %cst_63 [1] : vector<8x32xf32> to vector<8xf32>
    %126 = vector.shape_cast %125 : vector<8xf32> to vector<8x1xf32>
    %cst_64 = arith.constant 3.200000e+01 : f32
    %127 = vector.broadcast %cst_64 : f32 to vector<8x1xf32>
    %128 = arith.divf %126, %127 : vector<8x1xf32>
    %129 = vector.broadcast %128 : vector<8x1xf32> to vector<8x32xf32>
    %130 = arith.subf %122, %129 : vector<8x32xf32>
    %131 = arith.mulf %130, %130 : vector<8x32xf32>
    %cst_65 = arith.constant dense<0.000000e+00> : vector<8xf32>
    %132 = vector.multi_reduction <add>, %131, %cst_65 [1] : vector<8x32xf32> to vector<8xf32>
    %133 = vector.shape_cast %132 : vector<8xf32> to vector<8x1xf32>
    %cst_66 = arith.constant 3.100000e+01 : f32
    %134 = vector.broadcast %cst_66 : f32 to vector<8x1xf32>
    %135 = arith.divf %133, %134 : vector<8x1xf32>
    %136 = math.sqrt %135 : vector<8x1xf32>
    %cst_67 = arith.constant 9.99999974E-6 : f32
    %137 = vector.broadcast %cst_67 : f32 to vector<8x1xf32>
    %138 = arith.addf %136, %137 : vector<8x1xf32>
    %139 = vector.broadcast %138 : vector<8x1xf32> to vector<8x32xf32>
    %140 = arith.divf %130, %139 : vector<8x32xf32>
    %141 = vector.broadcast %123 : f32 to vector<8x32xf32>
    %142 = arith.mulf %140, %141 : vector<8x32xf32>
    %143 = vector.broadcast %124 : f32 to vector<8x32xf32>
    %144 = arith.addf %142, %143 : vector<8x32xf32>
    %145 = arith.truncf %144 : vector<8x32xf32> to vector<8x32xbf16>
    %c0_68 = arith.constant 0 : index
    %c0_69 = arith.constant 0 : index
    %146 = vector.load %arg13[%c0_68, %c0_69] : memref<32x64xbf16, #tpu.memory_space<vmem>>, vector<32x64xbf16>
    %cst_70 = arith.constant dense<0.000000e+00> : vector<8x64xf32>
    %147 = tpu.matmul %145, %146, %cst_70 {dimension_numbers = #tpu.dot_dimension_numbers<[1], [0], [0], [1], [0, 0, 1, 1], [], []>} : vector<8x32xbf16>, vector<32x64xbf16>, vector<8x64xf32> -> vector<8x64xf32>
    %c0_71 = arith.constant 0 : index
    %c0_72 = arith.constant 0 : index
    %148 = vector.load %arg14[%c0_71, %c0_72] : memref<1x64xf32, #tpu.memory_space<vmem>>, vector<1x64xf32>
    %149 = vector.broadcast %148 : vector<1x64xf32> to vector<8x64xf32>
    %150 = arith.addf %147, %149 : vector<8x64xf32>
    %cst_73 = arith.constant 0.000000e+00 : f32
    %151 = vector.broadcast %cst_73 : f32 to vector<8x64xf32>
    %152 = arith.maximumf %150, %151 : vector<8x64xf32>
    %153 = arith.truncf %152 : vector<8x64xf32> to vector<8x64xbf16>
    %c0_74 = arith.constant 0 : index
    %c0_75 = arith.constant 0 : index
    %154 = vector.load %arg15[%c0_74, %c0_75] : memref<64x32xbf16, #tpu.memory_space<vmem>>, vector<64x32xbf16>
    %cst_76 = arith.constant dense<0.000000e+00> : vector<8x32xf32>
    %155 = tpu.matmul %153, %154, %cst_76 {dimension_numbers = #tpu.dot_dimension_numbers<[1], [0], [0], [1], [0, 0, 1, 1], [], []>} : vector<8x64xbf16>, vector<64x32xbf16>, vector<8x32xf32> -> vector<8x32xf32>
    %c0_77 = arith.constant 0 : index
    %c0_78 = arith.constant 0 : index
    %156 = vector.load %arg16[%c0_77, %c0_78] : memref<1x32xf32, #tpu.memory_space<vmem>>, vector<1x32xf32>
    %157 = vector.broadcast %156 : vector<1x32xf32> to vector<8x32xf32>
    %158 = arith.addf %155, %157 : vector<8x32xf32>
    %159 = arith.addf %144, %158 : vector<8x32xf32>
    %c2_79 = arith.constant 2 : index
    %160 = memref.load %arg17[%c2_79] : memref<4xf32, #tpu.memory_space<smem>>
    %c3_80 = arith.constant 3 : index
    %161 = memref.load %arg17[%c3_80] : memref<4xf32, #tpu.memory_space<smem>>
    %cst_81 = arith.constant dense<0.000000e+00> : vector<8xf32>
    %162 = vector.multi_reduction <add>, %159, %cst_81 [1] : vector<8x32xf32> to vector<8xf32>
    %163 = vector.shape_cast %162 : vector<8xf32> to vector<8x1xf32>
    %cst_82 = arith.constant 3.200000e+01 : f32
    %164 = vector.broadcast %cst_82 : f32 to vector<8x1xf32>
    %165 = arith.divf %163, %164 : vector<8x1xf32>
    %166 = vector.broadcast %165 : vector<8x1xf32> to vector<8x32xf32>
    %167 = arith.subf %159, %166 : vector<8x32xf32>
    %168 = arith.mulf %167, %167 : vector<8x32xf32>
    %cst_83 = arith.constant dense<0.000000e+00> : vector<8xf32>
    %169 = vector.multi_reduction <add>, %168, %cst_83 [1] : vector<8x32xf32> to vector<8xf32>
    %170 = vector.shape_cast %169 : vector<8xf32> to vector<8x1xf32>
    %cst_84 = arith.constant 3.100000e+01 : f32
    %171 = vector.broadcast %cst_84 : f32 to vector<8x1xf32>
    %172 = arith.divf %170, %171 : vector<8x1xf32>
    %173 = math.sqrt %172 : vector<8x1xf32>
    %cst_85 = arith.constant 9.99999974E-6 : f32
    %174 = vector.broadcast %cst_85 : f32 to vector<8x1xf32>
    %175 = arith.addf %173, %174 : vector<8x1xf32>
    %176 = vector.broadcast %175 : vector<8x1xf32> to vector<8x32xf32>
    %177 = arith.divf %167, %176 : vector<8x32xf32>
    %178 = vector.broadcast %160 : f32 to vector<8x32xf32>
    %179 = arith.mulf %177, %178 : vector<8x32xf32>
    %180 = vector.broadcast %161 : f32 to vector<8x32xf32>
    %181 = arith.addf %179, %180 : vector<8x32xf32>
    %c0_86 = arith.constant 0 : index
    %c0_87 = arith.constant 0 : index
    %c0_88 = arith.constant 0 : index
    %182 = vector.load %arg18[%c0_86, %c0_87, %c0_88] : memref<1x8x32xf32, #tpu.memory_space<vmem>>, vector<1x8x32xf32>
    %183 = vector.shape_cast %182 : vector<1x8x32xf32> to vector<8x32xf32>
    %184 = vector.shape_cast %181 : vector<8x32xf32> to vector<1x8x32xf32>
    tpu.vector_store %arg18[%c0_86, %c0_87, %c0_88], %184 {strides = array<i32>} : memref<1x8x32xf32, #tpu.memory_space<vmem>>, vector<1x8x32xf32>,
    return
  }
  func.func @transform_0(%arg0: i32, %arg1: i32) -> (i32, i32, i32) {
    %c0_i32 = arith.constant 0 : i32
    %c0_i32_0 = arith.constant 0 : i32
    return %arg0, %arg1, %c0_i32 : i32, i32, i32
  }
  func.func @transform_1(%arg0: i32, %arg1: i32) -> (i32, i32, i32) {
    %c0_i32 = arith.constant 0 : i32
    %c0_i32_0 = arith.constant 0 : i32
    %c0_i32_1 = arith.constant 0 : i32
    return %arg0, %c0_i32, %c0_i32_0 : i32, i32, i32
  }
  func.func @transform_2(%arg0: i32, %arg1: i32) -> (i32, i32, i32) {
    %c0_i32 = arith.constant 0 : i32
    %c0_i32_0 = arith.constant 0 : i32
    %c0_i32_1 = arith.constant 0 : i32
    return %arg0, %c0_i32, %c0_i32_0 : i32, i32, i32
  }
  func.func @transform_3(%arg0: i32, %arg1: i32) -> (i32, i32) {
    %c0_i32 = arith.constant 0 : i32
    %c0_i32_0 = arith.constant 0 : i32
    %c0_i32_1 = arith.constant 0 : i32
    return %c0_i32, %c0_i32_0 : i32, i32
  }
  func.func @transform_4(%arg0: i32, %arg1: i32) -> (i32, i32) {
    %c0_i32 = arith.constant 0 : i32
    %c0_i32_0 = arith.constant 0 : i32
    %c0_i32_1 = arith.constant 0 : i32
    return %c0_i32, %c0_i32_0 : i32, i32
  }
  func.func @transform_5(%arg0: i32, %arg1: i32) -> (i32, i32) {
    %c0_i32 = arith.constant 0 : i32
    %c0_i32_0 = arith.constant 0 : i32
    %c0_i32_1 = arith.constant 0 : i32
    return %c0_i32, %c0_i32_0 : i32, i32
  }
  func.func @transform_6(%arg0: i32, %arg1: i32) -> (i32, i32) {
    %c0_i32 = arith.constant 0 : i32
    %c0_i32_0 = arith.constant 0 : i32
    %c0_i32_1 = arith.constant 0 : i32
    return %c0_i32, %c0_i32_0 : i32, i32
  }
  func.func @transform_7(%arg0: i32, %arg1: i32) -> (i32, i32) {
    %c0_i32 = arith.constant 0 : i32
    %c0_i32_0 = arith.constant 0 : i32
    %c0_i32_1 = arith.constant 0 : i32
    return %c0_i32, %c0_i32_0 : i32, i32
  }
  func.func @transform_8(%arg0: i32, %arg1: i32) -> (i32, i32) {
    %c0_i32 = arith.constant 0 : i32
    %c0_i32_0 = arith.constant 0 : i32
    %c0_i32_1 = arith.constant 0 : i32
    return %c0_i32, %c0_i32_0 : i32, i32
  }
  func.func @transform_9(%arg0: i32, %arg1: i32) -> (i32, i32) {
    %c0_i32 = arith.constant 0 : i32
    %c0_i32_0 = arith.constant 0 : i32
    %c0_i32_1 = arith.constant 0 : i32
    return %c0_i32, %c0_i32_0 : i32, i32
  }
  func.func @transform_10(%arg0: i32, %arg1: i32) -> (i32, i32) {
    %c0_i32 = arith.constant 0 : i32
    %c0_i32_0 = arith.constant 0 : i32
    %c0_i32_1 = arith.constant 0 : i32
    return %c0_i32, %c0_i32_0 : i32, i32
  }
  func.func @transform_11(%arg0: i32, %arg1: i32) -> (i32, i32) {
    %c0_i32 = arith.constant 0 : i32
    %c0_i32_0 = arith.constant 0 : i32
    %c0_i32_1 = arith.constant 0 : i32
    return %c0_i32, %c0_i32_0 : i32, i32
  }
  func.func @transform_12(%arg0: i32, %arg1: i32) -> (i32, i32) {
    %c0_i32 = arith.constant 0 : i32
    %c0_i32_0 = arith.constant 0 : i32
    %c0_i32_1 = arith.constant 0 : i32
    return %c0_i32, %c0_i32_0 : i32, i32
  }
  func.func @transform_13(%arg0: i32, %arg1: i32) -> (i32, i32) {
    %c0_i32 = arith.constant 0 : i32
    %c0_i32_0 = arith.constant 0 : i32
    %c0_i32_1 = arith.constant 0 : i32
    return %c0_i32, %c0_i32_0 : i32, i32
  }
  func.func @transform_14(%arg0: i32, %arg1: i32) -> (i32, i32) {
    %c0_i32 = arith.constant 0 : i32
    %c0_i32_0 = arith.constant 0 : i32
    %c0_i32_1 = arith.constant 0 : i32
    return %c0_i32, %c0_i32_0 : i32, i32
  }
  func.func @transform_15(%arg0: i32, %arg1: i32) -> i32 {
    %c0_i32 = arith.constant 0 : i32
    %c0_i32_0 = arith.constant 0 : i32
    return %c0_i32 : i32
  }
  func.func @transform_16(%arg0: i32, %arg1: i32) -> (i32, i32, i32) {
    %c0_i32 = arith.constant 0 : i32
    %c0_i32_0 = arith.constant 0 : i32
    return %arg0, %arg1, %c0_i32 : i32, i32, i32
  }
  func.func @transform_17(%arg0: i32, %arg1: i32) -> (i32, i32, i32, i32) {
    %c0_i32 = arith.constant 0 : i32
    %c0_i32_0 = arith.constant 0 : i32
    %c0_i32_1 = arith.constant 0 : i32
    return %arg0, %c0_i32, %arg1, %c0_i32_0 : i32, i32, i32, i32
  }
}

</mosaic_0001>

<llo_original>
// kernel: tpu_custom_call.1
$region0: #{tpu_custom_call.1}
  #allocation0 [shape = 'u32[]', space=smem, size = 0x4, offset = 0x4, fixed_abs, tag = 'smem constant byte address 0x4 - core index']
  #allocation1 [shape = 'u32[144,128]{1,0:T(1,128)}', space=vmem, size = 0x12000, scoped, tag = 'internal scratch']
  #allocation2 [shape = 'bf16[8,32]{1,0:T(8,128)(2,1)}', space=vmem, size = 0x800, scoped, tag = 'scratch operand']
  #allocation3 [shape = 'bf16[8,32]{1,0:T(8,128)(2,1)}', space=vmem, size = 0x800, scoped, tag = 'scratch operand']
  #allocation4 [shape = 'f32[8,32]{1,0:T(8,128)}', space=vmem, size = 0x1000, scoped, tag = 'scratch operand']
  %s0 = inlined_call_operand.vmem [shape: f32[2,8,32], index: 0, kind: input, shape index: {}]
  %s1 = inlined_call_operand.hbm [shape: bf16[2,8,32], index: 1, kind: input, shape index: {}]
  %s2 = inlined_call_operand.vmem [shape: f32[2,1,8], index: 2, kind: input, shape index: {}]
  %s3 = inlined_call_operand.vmem [shape: bf16[32,32], index: 3, kind: input, shape index: {}]
  %s4 = inlined_call_operand.hbm [shape: f32[1,32], index: 4, kind: input, shape index: {}]
  %s5 = inlined_call_operand.vmem [shape: bf16[32,32], index: 5, kind: input, shape index: {}]
  %s6 = inlined_call_operand.hbm [shape: f32[1,32], index: 6, kind: input, shape index: {}]
  %s7 = inlined_call_operand.hbm [shape: bf16[32,32], index: 7, kind: input, shape index: {}]
  %s8 = inlined_call_operand.hbm [shape: f32[1,32], index: 8, kind: input, shape index: {}]
  %s9 = inlined_call_operand.vmem [shape: bf16[32,32], index: 9, kind: input, shape index: {}]
  %s10 = inlined_call_operand.vmem [shape: f32[1,32], index: 10, kind: input, shape index: {}]
  %s11 = inlined_call_operand.hbm [shape: bf16[32,64], index: 11, kind: input, shape index: {}]
  %s12 = inlined_call_operand.vmem [shape: f32[1,64], index: 12, kind: input, shape index: {}]
  %s13 = inlined_call_operand.vmem [shape: bf16[64,32], index: 13, kind: input, shape index: {}]
  %s14 = inlined_call_operand.vmem [shape: f32[1,32], index: 14, kind: input, shape index: {}]
  %s15 = inlined_call_operand.vmem [shape: f32[4], index: 15, kind: input, shape index: {}]
  %s16 = inlined_call_operand.hbm [shape: f32[2,8,32], index: 16, kind: output, shape index: {0}]
  %s17 = inlined_call_operand.hbm [shape: bf16[2,4,8,8], index: 17, kind: output, shape index: {1}]
  %18 = xla_tuple %s16, %s17
  %s19 = sld [smem:[#allocation0]]
  $region137: #{tpu_custom_call.1} parent=0
    _
  %s21 = ssub.s32 1, %s19
  %s22 = scalar_select 0, %s21, %s19
  $region1: #{tpu_custom_call.1} parent=0
    #allocation5 [shape = 'u8[4096]{0}', space=vmem, size = 0x1000, scoped, tag = 'input window, operand 1']
    #allocation6 [shape = 's32[2]{0}', space=sflag, size = 0x8, scoped, tag = 'scoped memory for tpu_custom_call.1']
    #allocation7 [shape = 's32[2]{0}', space=sflag, size = 0x8, scoped, tag = 'scoped memory for tpu_custom_call.1']
    #allocation8 [shape = 's32[2]{0}', space=sflag, size = 0x8, scoped, tag = 'scoped memory for tpu_custom_call.1']
    #allocation9 [shape = 'u8[512]{0}', space=vmem, size = 0x400, scoped, tag = 'input window, operand 4, single buffered']
    #allocation10 [shape = 's32[1]{0}', space=sflag, size = 0x4, scoped, tag = 'scoped memory for tpu_custom_call.1']
    #allocation11 [shape = 'u8[512]{0}', space=vmem, size = 0x400, scoped, tag = 'input window, operand 6, single buffered']
    #allocation12 [shape = 'u8[8192]{0}', space=vmem, size = 0x2000, scoped, tag = 'input window, operand 7, single buffered']
    #allocation13 [shape = 's32[1]{0}', space=sflag, size = 0x4, scoped, tag = 'scoped memory for tpu_custom_call.1']
    #allocation14 [shape = 'u8[512]{0}', space=vmem, size = 0x400, scoped, tag = 'input window, operand 8, single buffered']
    #allocation15 [shape = 'u8[8192]{0}', space=vmem, size = 0x2000, scoped, tag = 'input window, operand 11, single buffered']
    #allocation16 [shape = 's32[1]{0}', space=sflag, size = 0x4, scoped, tag = 'scoped memory for tpu_custom_call.1']
    #allocation17 [shape = 'u8[512]{0}', space=smem, size = 0x200, scoped, tag = 'input window, operand 15, single buffered']
    #allocation18 [shape = 'u8[8192]{0}', space=vmem, size = 0x2000, scoped, tag = 'output window, operand 0']
    #allocation19 [shape = 'u8[16384]{0}', space=vmem, size = 0x4000, scoped, tag = 'output window, operand 1']
    #allocation20 [shape = 's32[2]{0}', space=sflag, size = 0x8, scoped, tag = 'scoped memory for tpu_custom_call.1']
    %23 = vsyncpa [#allocation6], 0
    %s24 = scalar_lea.sflag [#allocation6], 1
    %25 = vsyncpa %s24, 0
    %26 = vsyncpa [#allocation10], 0
    %27 = vsyncpa [#allocation13], 0
    %28 = vsyncpa [#allocation16], 0
    %29 = vsyncpa [#allocation8], 0
    %30 = vsyncpa [#allocation7], 0
    %s31 = scalar_lea.sflag [#allocation7], 1
    %32 = vsyncpa %s31, 0
    %33 = vsyncpa [#allocation20], 0
    %s34 = scalar_lea.sflag [#allocation20], 1
    %35 = vsyncpa %s34, 0
    loop: start=0, step=1, limit=4
    $region2: #{tpu_custom_call.1} parent=1 // loop_pre_header
      _
    $region3: #{tpu_custom_call.1} parent=1 // loop_header
      %s37 = sphi 0, %s41
      %p38 = scmp.ge.s32.totalorder %s37, 4
      %s44 = sphi 0, %s56
      %s45 = sphi 0, %s52
      %s46 = sphi 0, %s44
      %s47 = sphi 0, %s45
      %s48 = sphi 0, %s46
      %s49 = sphi 0, %s47
      %s61 = sphi 0, %s63
      %s64 = sphi 0, %s61
      %s65 = sphi 0, %s64
      %s81 = sphi 0, %s65
      %s87 = sphi 0, %s89
      %s90 = sphi 0, %s87
      %s91 = sphi 0, %s90
      %s107 = sphi 0, %s91
      %s113 = sphi 0, %s115
      %s116 = sphi 0, %s113
      %s117 = sphi 0, %s116
      %s133 = sphi 0, %s117
      %s137 = sphi 0, %s137
      %s139 = sphi 0, %s137
      %s140 = sphi 0, %s139
      %s154 = sphi 0, %s140
      %s158 = sphi 0, %s158
      %s160 = sphi 0, %s158
      %s161 = sphi 0, %s160
      %s175 = sphi 0, %s161
      %s179 = sphi 0, %s179
      %s181 = sphi 0, %s179
      %s182 = sphi 0, %s181
      %s196 = sphi 0, %s182
      %s200 = sphi 0, %s200
      %s202 = sphi 0, %s200
      %s203 = sphi 0, %s202
      %s217 = sphi 0, %s203
      %s221 = sphi 0, %s221
      %s223 = sphi 0, %s221
      %s224 = sphi 0, %s223
      %s238 = sphi 0, %s224
      %s242 = sphi 0, %s242
      %s244 = sphi 0, %s242
      %s245 = sphi 0, %s244
      %s259 = sphi 0, %s245
      %s263 = sphi 0, %s263
      %s265 = sphi 0, %s263
      %s266 = sphi 0, %s265
      %s280 = sphi 0, %s266
      %s284 = sphi 0, %s284
      %s286 = sphi 0, %s284
      %s287 = sphi 0, %s286
      %s301 = sphi 0, %s287
      %s305 = sphi 0, %s305
      %s307 = sphi 0, %s305
      %s308 = sphi 0, %s307
      %s322 = sphi 0, %s308
      %s326 = sphi 0, %s326
      %s328 = sphi 0, %s326
      %s329 = sphi 0, %s328
      %s343 = sphi 0, %s329
      %s347 = sphi 0, %s347
      %s349 = sphi 0, %s347
      %s350 = sphi 0, %s349
      %s364 = sphi 0, %s350
      %s368 = sphi 0, %s368
      %s370 = sphi 0, %s368
      %s371 = sphi 0, %s370
      %s385 = sphi 0, %s371
      %s389 = sphi 0, %s389
      %s391 = sphi 0, %s389
      %s392 = sphi 0, %s391
      %s406 = sphi 0, %s392
      %s414 = sphi 0, %s416
      %s417 = sphi 0, %s414
      %s418 = sphi 0, %s417
      %s434 = sphi 0, %s418
      %s442 = sphi 0, %s444
      %s445 = sphi 0, %s442
      %s446 = sphi 0, %s445
      %s462 = sphi 0, %s446
    $region4: #{tpu_custom_call.1} parent=1 // loop_header_branch
      %40 = sbr.rel (%p38) target = $region8
    $region5: #{tpu_custom_call.1} parent=1 // loop_body
      %s42 = ssub.s32 %s37, 1
      %s43 = ssub.s32 %s37, 2
      %s50 = sadd.s32 1, %s45
      %p51 = scmp.ge.s32.totalorder %s50, 1
      %s52 = scalar_select %p51, 0, %s50
      %s53 = sadd.s32 1, %s44
      %s54 = scalar_select %p51, %s53, %s44
      %p55 = scmp.ge.s32.totalorder %s54, 2
      %s56 = scalar_select %p55, 0, %s54
      %s57 = ssub.s32 %s44, %s56
      %s58 = ssub.s32 %s45, %s52
      %s59 = sor.u32 %s57, %s58
      %p60 = scmp.eq.s32.totalorder %s59, 0
      %s62 = sadd.s32 %s61, 1
      %s63 = scalar_select %p60, %s61, %s62
      %p66 = pneg %p60
      %p67 = scmp.eq.s32.totalorder %s37, 1
      %p68 = por %p66, %p67
      %p69 = scmp.ne.s32.totalorder %s61, %s64
      %p70 = scmp.eq.s32.totalorder %s37, 0
      %p71 = por %p69, %p70
      %p72 = scmp.ne.s32.totalorder %s61, %s64
      %p73 = scmp.eq.s32.totalorder %s42, 1
      %p74 = por %p72, %p73
      %p75 = scmp.ne.s32.totalorder %s64, %s65
      %p76 = scmp.eq.s32.totalorder %s42, 0
      %p77 = por %p75, %p76
      %p78 = scmp.ne.s32.totalorder %s64, %s65
      %p79 = scmp.eq.s32.totalorder %s43, 1
      %p80 = por %p78, %p79
      %p82 = scmp.ne.s32.totalorder %s65, %s81
      %p83 = scmp.eq.s32.totalorder %s43, 0
      %p84 = por %p82, %p83
      %s85 = ssub.s32 %s44, %s56
      %p86 = scmp.eq.s32.totalorder %s85, 0
      %s88 = sadd.s32 %s87, 1
      %s89 = scalar_select %p86, %s87, %s88
      %p92 = pneg %p86
      %p93 = scmp.eq.s32.totalorder %s37, 1
      %p94 = por %p92, %p93
      %p95 = scmp.ne.s32.totalorder %s87, %s90
      %p96 = scmp.eq.s32.totalorder %s37, 0
      %p97 = por %p95, %p96
      %p98 = scmp.ne.s32.totalorder %s87, %s90
      %p99 = scmp.eq.s32.totalorder %s42, 1
      %p100 = por %p98, %p99
      %p101 = scmp.ne.s32.totalorder %s90, %s91
      %p102 = scmp.eq.s32.totalorder %s42, 0
      %p103 = por %p101, %p102
      %p104 = scmp.ne.s32.totalorder %s90, %s91
      %p105 = scmp.eq.s32.totalorder %s43, 1
      %p106 = por %p104, %p105
      %p108 = scmp.ne.s32.totalorder %s91, %s107
      %p109 = scmp.eq.s32.totalorder %s43, 0
      %p110 = por %p108, %p109
      %s111 = ssub.s32 %s44, %s56
      %p112 = scmp.eq.s32.totalorder %s111, 0
      %s114 = sadd.s32 %s113, 1
      %s115 = scalar_select %p112, %s113, %s114
      %p118 = pneg %p112
      %p119 = scmp.eq.s32.totalorder %s37, 1
      %p120 = por %p118, %p119
      %p121 = scmp.ne.s32.totalorder %s113, %s116
      %p122 = scmp.eq.s32.totalorder %s37, 0
      %p123 = por %p121, %p122
      %p124 = scmp.ne.s32.totalorder %s113, %s116
      %p125 = scmp.eq.s32.totalorder %s42, 1
      %p126 = por %p124, %p125
      %p127 = scmp.ne.s32.totalorder %s116, %s117
      %p128 = scmp.eq.s32.totalorder %s42, 0
      %p129 = por %p127, %p128
      %p130 = scmp.ne.s32.totalorder %s116, %s117
      %p131 = scmp.eq.s32.totalorder %s43, 1
      %p132 = por %p130, %p131
      %p134 = scmp.ne.s32.totalorder %s117, %s133
      %p135 = scmp.eq.s32.totalorder %s43, 0
      %p136 = por %p134, %p135
      %s138 = sadd.s32 %s137, 1
      %p141 = scmp.eq.s32.totalorder %s37, 1
      %p142 = scmp.ne.s32.totalorder %s137, %s139
      %p143 = scmp.eq.s32.totalorder %s37, 0
      %p144 = por %p142, %p143
      %p145 = scmp.ne.s32.totalorder %s137, %s139
      %p146 = scmp.eq.s32.totalorder %s42, 1
      %p147 = por %p145, %p146
      %p148 = scmp.ne.s32.totalorder %s139, %s140
      %p149 = scmp.eq.s32.totalorder %s42, 0
      %p150 = por %p148, %p149
      %p151 = scmp.ne.s32.totalorder %s139, %s140
      %p152 = scmp.eq.s32.totalorder %s43, 1
      %p153 = por %p151, %p152
      %p155 = scmp.ne.s32.totalorder %s140, %s154
      %p156 = scmp.eq.s32.totalorder %s43, 0
      %p157 = por %p155, %p156
      %s159 = sadd.s32 %s158, 1
      %p162 = scmp.eq.s32.totalorder %s37, 1
      %p163 = scmp.ne.s32.totalorder %s158, %s160
      %p164 = scmp.eq.s32.totalorder %s37, 0
      %p165 = por %p163, %p164
      %p166 = scmp.ne.s32.totalorder %s158, %s160
      %p167 = scmp.eq.s32.totalorder %s42, 1
      %p168 = por %p166, %p167
      %p169 = scmp.ne.s32.totalorder %s160, %s161
      %p170 = scmp.eq.s32.totalorder %s42, 0
      %p171 = por %p169, %p170
      %p172 = scmp.ne.s32.totalorder %s160, %s161
      %p173 = scmp.eq.s32.totalorder %s43, 1
      %p174 = por %p172, %p173
      %p176 = scmp.ne.s32.totalorder %s161, %s175
      %p177 = scmp.eq.s32.totalorder %s43, 0
      %p178 = por %p176, %p177
      %s180 = sadd.s32 %s179, 1
      %p183 = scmp.eq.s32.totalorder %s37, 1
      %p184 = scmp.ne.s32.totalorder %s179, %s181
      %p185 = scmp.eq.s32.totalorder %s37, 0
      %p186 = por %p184, %p185
      %p187 = scmp.ne.s32.totalorder %s179, %s181
      %p188 = scmp.eq.s32.totalorder %s42, 1
      %p189 = por %p187, %p188
      %p190 = scmp.ne.s32.totalorder %s181, %s182
      %p191 = scmp.eq.s32.totalorder %s42, 0
      %p192 = por %p190, %p191
      %p193 = scmp.ne.s32.totalorder %s181, %s182
      %p194 = scmp.eq.s32.totalorder %s43, 1
      %p195 = por %p193, %p194
      %p197 = scmp.ne.s32.totalorder %s182, %s196
      %p198 = scmp.eq.s32.totalorder %s43, 0
      %p199 = por %p197, %p198
      %s201 = sadd.s32 %s200, 1
      %p204 = scmp.eq.s32.totalorder %s37, 1
      %p205 = scmp.ne.s32.totalorder %s200, %s202
      %p206 = scmp.eq.s32.totalorder %s37, 0
      %p207 = por %p205, %p206
      %p208 = scmp.ne.s32.totalorder %s200, %s202
      %p209 = scmp.eq.s32.totalorder %s42, 1
      %p210 = por %p208, %p209
      %p211 = scmp.ne.s32.totalorder %s202, %s203
      %p212 = scmp.eq.s32.totalorder %s42, 0
      %p213 = por %p211, %p212
      %p214 = scmp.ne.s32.totalorder %s202, %s203
      %p215 = scmp.eq.s32.totalorder %s43, 1
      %p216 = por %p214, %p215
      %p218 = scmp.ne.s32.totalorder %s203, %s217
      %p219 = scmp.eq.s32.totalorder %s43, 0
      %p220 = por %p218, %p219
      %s222 = sadd.s32 %s221, 1
      %p225 = scmp.eq.s32.totalorder %s37, 1
      %p226 = scmp.ne.s32.totalorder %s221, %s223
      %p227 = scmp.eq.s32.totalorder %s37, 0
      %p228 = por %p226, %p227
      %p229 = scmp.ne.s32.totalorder %s221, %s223
      %p230 = scmp.eq.s32.totalorder %s42, 1
      %p231 = por %p229, %p230
      %p232 = scmp.ne.s32.totalorder %s223, %s224
      %p233 = scmp.eq.s32.totalorder %s42, 0
      %p234 = por %p232, %p233
      %p235 = scmp.ne.s32.totalorder %s223, %s224
      %p236 = scmp.eq.s32.totalorder %s43, 1
      %p237 = por %p235, %p236
      %p239 = scmp.ne.s32.totalorder %s224, %s238
      %p240 = scmp.eq.s32.totalorder %s43, 0
      %p241 = por %p239, %p240
      %s243 = sadd.s32 %s242, 1
      %p246 = scmp.eq.s32.totalorder %s37, 1
      %p247 = scmp.ne.s32.totalorder %s242, %s244
      %p248 = scmp.eq.s32.totalorder %s37, 0
      %p249 = por %p247, %p248
      %p250 = scmp.ne.s32.totalorder %s242, %s244
      %p251 = scmp.eq.s32.totalorder %s42, 1
      %p252 = por %p250, %p251
      %p253 = scmp.ne.s32.totalorder %s244, %s245
      %p254 = scmp.eq.s32.totalorder %s42, 0
      %p255 = por %p253, %p254
      %p256 = scmp.ne.s32.totalorder %s244, %s245
      %p257 = scmp.eq.s32.totalorder %s43, 1
      %p258 = por %p256, %p257
      %p260 = scmp.ne.s32.totalorder %s245, %s259
      %p261 = scmp.eq.s32.totalorder %s43, 0
      %p262 = por %p260, %p261
      %s264 = sadd.s32 %s263, 1
      %p267 = scmp.eq.s32.totalorder %s37, 1
      %p268 = scmp.ne.s32.totalorder %s263, %s265
      %p269 = scmp.eq.s32.totalorder %s37, 0
      %p270 = por %p268, %p269
      %p271 = scmp.ne.s32.totalorder %s263, %s265
      %p272 = scmp.eq.s32.totalorder %s42, 1
      %p273 = por %p271, %p272
      %p274 = scmp.ne.s32.totalorder %s265, %s266
      %p275 = scmp.eq.s32.totalorder %s42, 0
      %p276 = por %p274, %p275
      %p277 = scmp.ne.s32.totalorder %s265, %s266
      %p278 = scmp.eq.s32.totalorder %s43, 1
      %p279 = por %p277, %p278
      %p281 = scmp.ne.s32.totalorder %s266, %s280
      %p282 = scmp.eq.s32.totalorder %s43, 0
      %p283 = por %p281, %p282
      %s285 = sadd.s32 %s284, 1
      %p288 = scmp.eq.s32.totalorder %s37, 1
      %p289 = scmp.ne.s32.totalorder %s284, %s286
      %p290 = scmp.eq.s32.totalorder %s37, 0
      %p291 = por %p289, %p290
      %p292 = scmp.ne.s32.totalorder %s284, %s286
      %p293 = scmp.eq.s32.totalorder %s42, 1
      %p294 = por %p292, %p293
      %p295 = scmp.ne.s32.totalorder %s286, %s287
      %p296 = scmp.eq.s32.totalorder %s42, 0
      %p297 = por %p295, %p296
      %p298 = scmp.ne.s32.totalorder %s286, %s287
      %p299 = scmp.eq.s32.totalorder %s43, 1
      %p300 = por %p298, %p299
      %p302 = scmp.ne.s32.totalorder %s287, %s301
      %p303 = scmp.eq.s32.totalorder %s43, 0
      %p304 = por %p302, %p303
      %s306 = sadd.s32 %s305, 1
      %p309 = scmp.eq.s32.totalorder %s37, 1
      %p310 = scmp.ne.s32.totalorder %s305, %s307
      %p311 = scmp.eq.s32.totalorder %s37, 0
      %p312 = por %p310, %p311
      %p313 = scmp.ne.s32.totalorder %s305, %s307
      %p314 = scmp.eq.s32.totalorder %s42, 1
      %p315 = por %p313, %p314
      %p316 = scmp.ne.s32.totalorder %s307, %s308
      %p317 = scmp.eq.s32.totalorder %s42, 0
      %p318 = por %p316, %p317
      %p319 = scmp.ne.s32.totalorder %s307, %s308
      %p320 = scmp.eq.s32.totalorder %s43, 1
      %p321 = por %p319, %p320
      %p323 = scmp.ne.s32.totalorder %s308, %s322
      %p324 = scmp.eq.s32.totalorder %s43, 0
      %p325 = por %p323, %p324
      %s327 = sadd.s32 %s326, 1
      %p330 = scmp.eq.s32.totalorder %s37, 1
      %p331 = scmp.ne.s32.totalorder %s326, %s328
      %p332 = scmp.eq.s32.totalorder %s37, 0
      %p333 = por %p331, %p332
      %p334 = scmp.ne.s32.totalorder %s326, %s328
      %p335 = scmp.eq.s32.totalorder %s42, 1
      %p336 = por %p334, %p335
      %p337 = scmp.ne.s32.totalorder %s328, %s329
      %p338 = scmp.eq.s32.totalorder %s42, 0
      %p339 = por %p337, %p338
      %p340 = scmp.ne.s32.totalorder %s328, %s329
      %p341 = scmp.eq.s32.totalorder %s43, 1
      %p342 = por %p340, %p341
      %p344 = scmp.ne.s32.totalorder %s329, %s343
      %p345 = scmp.eq.s32.totalorder %s43, 0
      %p346 = por %p344, %p345
      %s348 = sadd.s32 %s347, 1
      %p351 = scmp.eq.s32.totalorder %s37, 1
      %p352 = scmp.ne.s32.totalorder %s347, %s349
      %p353 = scmp.eq.s32.totalorder %s37, 0
      %p354 = por %p352, %p353
      %p355 = scmp.ne.s32.totalorder %s347, %s349
      %p356 = scmp.eq.s32.totalorder %s42, 1
      %p357 = por %p355, %p356
      %p358 = scmp.ne.s32.totalorder %s349, %s350
      %p359 = scmp.eq.s32.totalorder %s42, 0
      %p360 = por %p358, %p359
      %p361 = scmp.ne.s32.totalorder %s349, %s350
      %p362 = scmp.eq.s32.totalorder %s43, 1
      %p363 = por %p361, %p362
      %p365 = scmp.ne.s32.totalorder %s350, %s364
      %p366 = scmp.eq.s32.totalorder %s43, 0
      %p367 = por %p365, %p366
      %s369 = sadd.s32 %s368, 1
      %p372 = scmp.eq.s32.totalorder %s37, 1
      %p373 = scmp.ne.s32.totalorder %s368, %s370
      %p374 = scmp.eq.s32.totalorder %s37, 0
      %p375 = por %p373, %p374
      %p376 = scmp.ne.s32.totalorder %s368, %s370
      %p377 = scmp.eq.s32.totalorder %s42, 1
      %p378 = por %p376, %p377
      %p379 = scmp.ne.s32.totalorder %s370, %s371
      %p380 = scmp.eq.s32.totalorder %s42, 0
      %p381 = por %p379, %p380
      %p382 = scmp.ne.s32.totalorder %s370, %s371
      %p383 = scmp.eq.s32.totalorder %s43, 1
      %p384 = por %p382, %p383
      %p386 = scmp.ne.s32.totalorder %s371, %s385
      %p387 = scmp.eq.s32.totalorder %s43, 0
      %p388 = por %p386, %p387
      %s390 = sadd.s32 %s389, 1
      %p393 = scmp.eq.s32.totalorder %s37, 1
      %p394 = scmp.ne.s32.totalorder %s389, %s391
      %p395 = scmp.eq.s32.totalorder %s37, 0
      %p396 = por %p394, %p395
      %p397 = scmp.ne.s32.totalorder %s389, %s391
      %p398 = scmp.eq.s32.totalorder %s42, 1
      %p399 = por %p397, %p398
      %p400 = scmp.ne.s32.totalorder %s391, %s392
      %p401 = scmp.eq.s32.totalorder %s42, 0
      %p402 = por %p400, %p401
      %p403 = scmp.ne.s32.totalorder %s391, %s392
      %p404 = scmp.eq.s32.totalorder %s43, 1
      %p405 = por %p403, %p404
      %p407 = scmp.ne.s32.totalorder %s392, %s406
      %p408 = scmp.eq.s32.totalorder %s43, 0
      %p409 = por %p407, %p408
      %s410 = ssub.s32 %s44, %s56
      %s411 = ssub.s32 %s45, %s52
      %s412 = sor.u32 %s410, %s411
      %p413 = scmp.eq.s32.totalorder %s412, 0
      %s415 = sadd.s32 %s414, 1
      %s416 = scalar_select %p413, %s414, %s415
      %p419 = pneg %p413
      %p420 = scmp.eq.s32.totalorder %s37, 1
      %p421 = por %p419, %p420
      %p422 = scmp.ne.s32.totalorder %s414, %s417
      %p423 = scmp.eq.s32.totalorder %s37, 0
      %p424 = por %p422, %p423
      %p425 = scmp.ne.s32.totalorder %s414, %s417
      %p426 = scmp.eq.s32.totalorder %s42, 1
      %p427 = por %p425, %p426
      %p428 = scmp.ne.s32.totalorder %s417, %s418
      %p429 = scmp.eq.s32.totalorder %s42, 0
      %p430 = por %p428, %p429
      %p431 = scmp.ne.s32.totalorder %s417, %s418
      %p432 = scmp.eq.s32.totalorder %s43, 1
      %p433 = por %p431, %p432
      %p435 = scmp.ne.s32.totalorder %s418, %s434
      %p436 = scmp.eq.s32.totalorder %s43, 0
      %p437 = por %p435, %p436
      %s438 = ssub.s32 %s44, %s56
      %s439 = ssub.s32 %s45, %s52
      %s440 = sor.u32 %s438, %s439
      %p441 = scmp.eq.s32.totalorder %s440, 0
      %s443 = sadd.s32 %s442, 1
      %s444 = scalar_select %p441, %s442, %s443
      %p447 = pneg %p441
      %p448 = scmp.eq.s32.totalorder %s37, 1
      %p449 = por %p447, %p448
      %p450 = scmp.ne.s32.totalorder %s442, %s445
      %p451 = scmp.eq.s32.totalorder %s37, 0
      %p452 = por %p450, %p451
      %p453 = scmp.ne.s32.totalorder %s442, %s445
      %p454 = scmp.eq.s32.totalorder %s42, 1
      %p455 = por %p453, %p454
      %p456 = scmp.ne.s32.totalorder %s445, %s446
      %p457 = scmp.eq.s32.totalorder %s42, 0
      %p458 = por %p456, %p457
      %p459 = scmp.ne.s32.totalorder %s445, %s446
      %p460 = scmp.eq.s32.totalorder %s43, 1
      %p461 = por %p459, %p460
      %p463 = scmp.ne.s32.totalorder %s446, %s462
      %p464 = scmp.eq.s32.totalorder %s43, 0
      %p465 = por %p463, %p464
      %p466 = scmp.le.s32.totalorder 1, %s37
      %p467 = scmp.lt.s32.totalorder %s37, 3
      %p468 = pnand %p466, %p467
      %p469 = pneg %p468
      // Predicated region
      $region9: #{tpu_custom_call.1} parent=5 // pred_check
        _
      $region10: #{tpu_custom_call.1} parent=5 // pred_check_branch
        %471 = sbr.rel (%p468) target = $region12
      $region11: #{tpu_custom_call.1} parent=5 // pred_region
        %s472 = ssub.s32 %s37, 1
        // Predicated region
        $region13: #{tpu_custom_call.1} parent=11 // pred_check
          %p473 = pneg %p150
        $region14: #{tpu_custom_call.1} parent=11 // pred_check_branch
          %475 = sbr.rel (%p473) target = $region16
        $region15: #{tpu_custom_call.1} parent=11 // pred_region
          _
        $region16: #{tpu_custom_call.1} parent=11 // pred_fallthru
          _
        // Predicated region
        $region17: #{tpu_custom_call.1} parent=11 // pred_check
          %p476 = pneg %p171
        $region18: #{tpu_custom_call.1} parent=11 // pred_check_branch
          %478 = sbr.rel (%p476) target = $region20
        $region19: #{tpu_custom_call.1} parent=11 // pred_region
          %s480 = ssub.s32 16, 16
          %481 = vsyncadd [#allocation10], %s480
          %s483 = sshll.u32 [#allocation9], 4
          %s484 = int_to_ptr.vmem [resolvable:$true] %s483
          %486 = dma.hbm_to_vmem [thread:$0]  %s4, 16, %s484, [#allocation10]
        $region20: #{tpu_custom_call.1} parent=11 // pred_fallthru
          _
        // Predicated region
        $region21: #{tpu_custom_call.1} parent=11 // pred_check
          %p487 = pneg %p192
        $region22: #{tpu_custom_call.1} parent=11 // pred_check_branch
          %489 = sbr.rel (%p487) target = $region24
        $region23: #{tpu_custom_call.1} parent=11 // pred_region
          _
        $region24: #{tpu_custom_call.1} parent=11 // pred_fallthru
          _
        // Predicated region
        $region25: #{tpu_custom_call.1} parent=11 // pred_check
          %p490 = pneg %p213
        $region26: #{tpu_custom_call.1} parent=11 // pred_check_branch
          %492 = sbr.rel (%p490) target = $region28
        $region27: #{tpu_custom_call.1} parent=11 // pred_region
          %s494 = ssub.s32 16, 16
          %495 = vsyncadd [#allocation10], %s494
          %s497 = sshll.u32 [#allocation11], 4
          %s498 = int_to_ptr.vmem [resolvable:$true] %s497
          %500 = dma.hbm_to_vmem [thread:$0]  %s6, 16, %s498, [#allocation10]
        $region28: #{tpu_custom_call.1} parent=11 // pred_fallthru
          _
        // Predicated region
        $region29: #{tpu_custom_call.1} parent=11 // pred_check
          %p501 = pneg %p234
        $region30: #{tpu_custom_call.1} parent=11 // pred_check_branch
          %503 = sbr.rel (%p501) target = $region32
        $region31: #{tpu_custom_call.1} parent=11 // pred_region
          %s505 = ssub.s32 256, 256
          %506 = vsyncadd [#allocation13], %s505
          %s507 = sshll.u32 [#allocation12], 4
          %s508 = int_to_ptr.vmem [resolvable:$true] %s507
          %513 = dma.hbm_to_vmem [thread:$0]  %s7, 256, %s508, [#allocation13], 64, 64, 4
        $region32: #{tpu_custom_call.1} parent=11 // pred_fallthru
          _
        // Predicated region
        $region33: #{tpu_custom_call.1} parent=11 // pred_check
          %p514 = pneg %p255
        $region34: #{tpu_custom_call.1} parent=11 // pred_check_branch
          %516 = sbr.rel (%p514) target = $region36
        $region35: #{tpu_custom_call.1} parent=11 // pred_region
          %s518 = ssub.s32 16, 16
          %519 = vsyncadd [#allocation13], %s518
          %s521 = sshll.u32 [#allocation14], 4
          %s522 = int_to_ptr.vmem [resolvable:$true] %s521
          %524 = dma.hbm_to_vmem [thread:$0]  %s8, 16, %s522, [#allocation13]
        $region36: #{tpu_custom_call.1} parent=11 // pred_fallthru
          _
        // Predicated region
        $region37: #{tpu_custom_call.1} parent=11 // pred_check
          %p525 = pneg %p276
        $region38: #{tpu_custom_call.1} parent=11 // pred_check_branch
          %527 = sbr.rel (%p525) target = $region40
        $region39: #{tpu_custom_call.1} parent=11 // pred_region
          _
        $region40: #{tpu_custom_call.1} parent=11 // pred_fallthru
          _
        // Predicated region
        $region41: #{tpu_custom_call.1} parent=11 // pred_check
          %p528 = pneg %p297
        $region42: #{tpu_custom_call.1} parent=11 // pred_check_branch
          %530 = sbr.rel (%p528) target = $region44
        $region43: #{tpu_custom_call.1} parent=11 // pred_region
          _
        $region44: #{tpu_custom_call.1} parent=11 // pred_fallthru
          _
        // Predicated region
        $region45: #{tpu_custom_call.1} parent=11 // pred_check
          %p531 = pneg %p318
        $region46: #{tpu_custom_call.1} parent=11 // pred_check_branch
          %533 = sbr.rel (%p531) target = $region48
        $region47: #{tpu_custom_call.1} parent=11 // pred_region
          %s535 = ssub.s32 256, 256
          %536 = vsyncadd [#allocation16], %s535
          %s537 = sshll.u32 [#allocation15], 4
          %s538 = int_to_ptr.vmem [resolvable:$true] %s537
          %543 = dma.hbm_to_vmem [thread:$0]  %s11, 256, %s538, [#allocation16], 64, 64, 4
        $region48: #{tpu_custom_call.1} parent=11 // pred_fallthru
          _
        // Predicated region
        $region49: #{tpu_custom_call.1} parent=11 // pred_check
          %p544 = pneg %p339
        $region50: #{tpu_custom_call.1} parent=11 // pred_check_branch
          %546 = sbr.rel (%p544) target = $region52
        $region51: #{tpu_custom_call.1} parent=11 // pred_region
          _
        $region52: #{tpu_custom_call.1} parent=11 // pred_fallthru
          _
        // Predicated region
        $region53: #{tpu_custom_call.1} parent=11 // pred_check
          %p547 = pneg %p360
        $region54: #{tpu_custom_call.1} parent=11 // pred_check_branch
          %549 = sbr.rel (%p547) target = $region56
        $region55: #{tpu_custom_call.1} parent=11 // pred_region
          _
        $region56: #{tpu_custom_call.1} parent=11 // pred_fallthru
          _
        // Predicated region
        $region57: #{tpu_custom_call.1} parent=11 // pred_check
          %p550 = pneg %p381
        $region58: #{tpu_custom_call.1} parent=11 // pred_check_branch
          %552 = sbr.rel (%p550) target = $region60
        $region59: #{tpu_custom_call.1} parent=11 // pred_region
          _
        $region60: #{tpu_custom_call.1} parent=11 // pred_fallthru
          _
        // Predicated region
        $region61: #{tpu_custom_call.1} parent=11 // pred_check
          %p553 = pneg %p402
        $region62: #{tpu_custom_call.1} parent=11 // pred_check_branch
          %555 = sbr.rel (%p553) target = $region64
        $region63: #{tpu_custom_call.1} parent=11 // pred_region
          %s557 = ssub.s32 16, 16
          %558 = vsyncadd [#allocation8], %s557
          %s560 = sshll.u32 %s15, 4
          %s561 = int_to_ptr.vmem [resolvable:$true] %s560
          %563 = dma.vmem_to_smem %s561, 16, [#allocation17], [#allocation8]
        $region64: #{tpu_custom_call.1} parent=11 // pred_fallthru
          _
      $region12: #{tpu_custom_call.1} parent=5 // pred_fallthru
        _
      %p564 = scmp.lt.s32.totalorder %s37, 2
      // Predicated region
      $region65: #{tpu_custom_call.1} parent=5 // pred_check
        %p565 = pneg %p564
      $region66: #{tpu_custom_call.1} parent=5 // pred_check_branch
        %567 = sbr.rel (%p565) target = $region68
      $region67: #{tpu_custom_call.1} parent=5 // pred_region
        // Predicated region
        $region69: #{tpu_custom_call.1} parent=67 // pred_check
          %p568 = pneg %p71
        $region70: #{tpu_custom_call.1} parent=67 // pred_check_branch
          %570 = sbr.rel (%p568) target = $region72
        $region71: #{tpu_custom_call.1} parent=67 // pred_region
          %p571 = scmp.lt.s32.totalorder %s44, 1
          %s572 = scalar_select %p571, %s44, 1
          %p573 = scmp.lt.s32.totalorder %s45, 0
          %s574 = scalar_select %p573, %s45, 0
          %s575 = sadd.s32 %s574, %s572
          %s576 = smul.addr %s575, 8
          %s577 = scalar_lea.vmem %s0, %s576
        $region72: #{tpu_custom_call.1} parent=67 // pred_fallthru
          _
        // Predicated region
        $region73: #{tpu_custom_call.1} parent=67 // pred_check
          %p578 = pneg %p97
        $region74: #{tpu_custom_call.1} parent=67 // pred_check_branch
          %580 = sbr.rel (%p578) target = $region76
        $region75: #{tpu_custom_call.1} parent=67 // pred_region
          %s581 = sand.u32 %s87, 1
          %s582 = scalar_lea.sflag [#allocation6], %s581
          %s583 = sand.u32 %s87, 1
          %s584 = smul.addr %s583, 4
          %s585 = scalar_lea.vmem [#allocation5], %s584
          %s587 = ssub.s32 64, 64
          %588 = vsyncadd %s582, %s587
          %s589 = smul.addr %s44, 64
          %s590 = scalar_lea.hbm %s1, %s589
          %s592 = sshll.u32 %s585, 4
          %s593 = int_to_ptr.vmem [resolvable:$true] %s592
          %595 = dma.hbm_to_vmem [thread:$0]  %s590, 64, %s593, %s582
        $region76: #{tpu_custom_call.1} parent=67 // pred_fallthru
          _
        // Predicated region
        $region77: #{tpu_custom_call.1} parent=67 // pred_check
          %p596 = pneg %p123
        $region78: #{tpu_custom_call.1} parent=67 // pred_check_branch
          %598 = sbr.rel (%p596) target = $region80
        $region79: #{tpu_custom_call.1} parent=67 // pred_region
          %p599 = scmp.lt.s32.totalorder %s44, 1
          %s600 = scalar_select %p599, %s44, 1
          %s601 = scalar_lea.vmem %s2, %s600
        $region80: #{tpu_custom_call.1} parent=67 // pred_fallthru
          _
      $region68: #{tpu_custom_call.1} parent=5 // pred_fallthru
        _
      %p602 = scmp.le.s32.totalorder 1, %s37
      %p603 = scmp.lt.s32.totalorder %s37, 3
      %p604 = pnand %p602, %p603
      %p605 = pneg %p604
      // Predicated region
      $region81: #{tpu_custom_call.1} parent=5 // pred_check
        _
      $region82: #{tpu_custom_call.1} parent=5 // pred_check_branch
        %607 = sbr.rel (%p604) target = $region84
      $region83: #{tpu_custom_call.1} parent=5 // pred_region
        %s608 = ssub.s32 %s37, 1
        %s609 = sand.u32 %s90, 1
        %s610 = scalar_lea.sflag [#allocation6], %s609
        %s611 = sand.u32 %s90, 1
        %s612 = smul.addr %s611, 4
        %s613 = scalar_lea.vmem [#allocation5], %s612
        // Predicated region
        $region85: #{tpu_custom_call.1} parent=83 // pred_check
          %p614 = pneg %p103
        $region86: #{tpu_custom_call.1} parent=83 // pred_check_branch
          %616 = sbr.rel (%p614) target = $region88
        $region87: #{tpu_custom_call.1} parent=83 // pred_region
          %617 = dma.done %s610, 64
        $region88: #{tpu_custom_call.1} parent=83 // pred_fallthru
          _
        // Predicated region
        $region89: #{tpu_custom_call.1} parent=83 // pred_check
          %p618 = pneg %p171
        $region90: #{tpu_custom_call.1} parent=83 // pred_check_branch
          %620 = sbr.rel (%p618) target = $region92
        $region91: #{tpu_custom_call.1} parent=83 // pred_region
          %621 = dma.done [#allocation10], 16
        $region92: #{tpu_custom_call.1} parent=83 // pred_fallthru
          _
        // Predicated region
        $region93: #{tpu_custom_call.1} parent=83 // pred_check
          %p622 = pneg %p213
        $region94: #{tpu_custom_call.1} parent=83 // pred_check_branch
          %624 = sbr.rel (%p622) target = $region96
        $region95: #{tpu_custom_call.1} parent=83 // pred_region
          %625 = dma.done [#allocation10], 16
        $region96: #{tpu_custom_call.1} parent=83 // pred_fallthru
          _
        // Predicated region
        $region97: #{tpu_custom_call.1} parent=83 // pred_check
          %p626 = pneg %p234
        $region98: #{tpu_custom_call.1} parent=83 // pred_check_branch
          %628 = sbr.rel (%p626) target = $region100
        $region99: #{tpu_custom_call.1} parent=83 // pred_region
          %629 = dma.done [#allocation13], 256
        $region100: #{tpu_custom_call.1} parent=83 // pred_fallthru
          _
        // Predicated region
        $region101: #{tpu_custom_call.1} parent=83 // pred_check
          %p630 = pneg %p255
        $region102: #{tpu_custom_call.1} parent=83 // pred_check_branch
          %632 = sbr.rel (%p630) target = $region104
        $region103: #{tpu_custom_call.1} parent=83 // pred_region
          %633 = dma.done [#allocation13], 16
        $region104: #{tpu_custom_call.1} parent=83 // pred_fallthru
          _
        // Predicated region
        $region105: #{tpu_custom_call.1} parent=83 // pred_check
          %p634 = pneg %p318
        $region106: #{tpu_custom_call.1} parent=83 // pred_check_branch
          %636 = sbr.rel (%p634) target = $region108
        $region107: #{tpu_custom_call.1} parent=83 // pred_region
          %637 = dma.done [#allocation16], 256
        $region108: #{tpu_custom_call.1} parent=83 // pred_fallthru
          _
        // Predicated region
        $region109: #{tpu_custom_call.1} parent=83 // pred_check
          %p638 = pneg %p402
        $region110: #{tpu_custom_call.1} parent=83 // pred_check_branch
          %640 = sbr.rel (%p638) target = $region112
        $region111: #{tpu_custom_call.1} parent=83 // pred_region
          %641 = dma.done [#allocation8], 16
        $region112: #{tpu_custom_call.1} parent=83 // pred_fallthru
          _
        %642 = sfence
        %p643 = scmp.lt.s32.totalorder %s46, 1
        %s644 = scalar_select %p643, %s46, 1
        %p645 = scmp.lt.s32.totalorder %s47, 0
        %s646 = scalar_select %p645, %s47, 0
        %s647 = sadd.s32 %s646, %s644
        %s648 = smul.addr %s647, 8
        %s649 = scalar_lea.vmem %s0, %s648
        %p650 = pneg %p77
        %p651 = pneg %p74
        %s652 = sand.u32 %s90, 1
        %s653 = scalar_lea.sflag [#allocation6], %s652
        %s654 = sand.u32 %s90, 1
        %s655 = smul.addr %s654, 4
        %s656 = scalar_lea.vmem [#allocation5], %s655
        %p657 = pneg %p103
        %p658 = pneg %p100
        %p659 = scmp.lt.s32.totalorder %s46, 1
        %s660 = scalar_select %p659, %s46, 1
        %s661 = scalar_lea.vmem %s2, %s660
        %p662 = pneg %p129
        %p663 = pneg %p126
        %p664 = pneg %p150
        %p665 = pneg %p147
        %p666 = pneg %p171
        %p667 = pneg %p168
        %p668 = pneg %p192
        %p669 = pneg %p189
        %p670 = pneg %p213
        %p671 = pneg %p210
        %p672 = pneg %p234
        %p673 = pneg %p231
        %p674 = pneg %p255
        %p675 = pneg %p252
        %p676 = pneg %p276
        %p677 = pneg %p273
        %p678 = pneg %p297
        %p679 = pneg %p294
        %p680 = pneg %p318
        %p681 = pneg %p315
        %p682 = pneg %p339
        %p683 = pneg %p336
        %p684 = pneg %p360
        %p685 = pneg %p357
        %p686 = pneg %p381
        %p687 = pneg %p378
        %p688 = pneg %p402
        %p689 = pneg %p399
        %p690 = pneg %p430
        %p691 = pneg %p427
        %s692 = sand.u32 %s417, 1
        %s693 = scalar_lea.sflag [#allocation7], %s692
        %s694 = sand.u32 %s417, 1
        %s695 = smul.addr %s694, 8
        %s696 = scalar_lea.vmem [#allocation18], %s695
        %p697 = pneg %p458
        %p698 = pneg %p455
        %s699 = sand.u32 %s445, 1
        %s700 = scalar_lea.sflag [#allocation20], %s699
        %s701 = sand.u32 %s445, 1
        %s702 = smul.addr %s701, 16
        %s703 = scalar_lea.vmem [#allocation19], %s702
        %p704 = scmp.lt.s32.totalorder %s46, 1
        %s705 = scalar_select %p704, %s46, 1
        %p706 = scmp.lt.s32.totalorder %s47, 0
        %s707 = scalar_select %p706, %s47, 0
        %s708 = sadd.s32 %s707, %s705
        %s709 = smul.addr %s708, 8
        %s710 = scalar_lea.vmem %s0, %s709
        %p711 = scmp.lt.s32.totalorder %s46, 1
        %s712 = scalar_select %p711, %s46, 1
        %s713 = scalar_lea.vmem %s2, %s712
        %p715 = scmp.eq.s32.totalorder %s47, 0
        // Predicated region
        $region113: #{tpu_custom_call.1} parent=83 // pred_check
          %p716 = pneg %p715
        $region114: #{tpu_custom_call.1} parent=83 // pred_check_branch
          %718 = sbr.rel (%p716) target = $region116
        $region115: #{tpu_custom_call.1} parent=83 // pred_region
          %v719 = vld [vmem:[%s613] sm:$0xf]
          %v720 = vld [vmem:[%s5] sm:$0xf]
          %v721 = vld [vmem:[%s5 + $0x4] sm:$0xf]
          %v722 = vld [vmem:[%s5 + $0x8] sm:$0xf]
          %v723 = vld [vmem:[%s5 + $0xc] sm:$0xf]
          %v724 = vld [vmem:[#allocation11] sm:$0x1]
          %v726 = vlaneseq
          %v727 = vshrl.u32 %v726, 7
          %v728 = vsub.s32 0, %v727
          %v729 = vrot.slane %v724, %v728
          %v735 = vunpack.c.l.b16 %v720
          %v736 = vunpack.c.l.b16 %v721
          %v737 = vunpack.c.l.b16 %v722
          %v738 = vunpack.c.l.b16 %v723
          %v739 = vpack.c.b16 %v736, %v735
          %v740 = vpack.c.b16 %v738, %v737
          %vm743 = vcmask 261120
          %v745 = vsel %vm743, %v719, 0
          %747 = vmatprep.subr.bf16.mxu0 0
          %748 = vmatpush1.bf16.msra.mxu0 %v739
          %749 = vmatprep.subr.bf16.mxu0 0
          %750 = vmatpush1.bf16.msra.mxu0 %v740
          %751 = vmatprep.subr.bf16.mxu0 0
          %752 = vmatpush1.bf16.msra.mxu0 0
          %753 = vmatprep.subr.bf16.mxu0 0
          %754 = vmatpush1.bf16.msra.mxu0 0
          %755 = vmatprep.subr.bf16.mxu0 0
          %756 = vmatpush1.bf16.msra.mxu0 0
          %757 = vmatprep.subr.bf16.mxu0 0
          %758 = vmatpush1.bf16.msra.mxu0 0
          %759 = vmatprep.subr.bf16.mxu0 0
          %760 = vmatpush1.bf16.msra.mxu0 0
          %761 = vmatprep.subr.bf16.mxu0 0
          %762 = vmatpush1.bf16.msra.mxu0 0
          %763 = vmatprep.subr.bf16.mxu0 0
          %764 = vmatpush1.bf16.msra.mxu0 0
          %765 = vmatprep.subr.bf16.mxu0 0
          %766 = vmatpush1.bf16.msra.mxu0 0
          %767 = vmatprep.subr.bf16.mxu0 0
          %768 = vmatpush1.bf16.msra.mxu0 0
          %769 = vmatprep.subr.bf16.mxu0 0
          %770 = vmatpush1.bf16.msra.mxu0 0
          %771 = vmatprep.subr.bf16.mxu0 0
          %772 = vmatpush1.bf16.msra.mxu0 0
          %773 = vmatprep.subr.bf16.mxu0 0
          %774 = vmatpush1.bf16.msra.mxu0 0
          %775 = vmatprep.subr.bf16.mxu0 0
          %776 = vmatpush1.bf16.msra.mxu0 0
          %777 = vmatprep.subr.bf16.mxu0 0
          %778 = vmatpush1.bf16.msra.mxu0 0
          %779 = vmatprep.mubr.bf16.mxu0 0
          %780 = vmatmul.mubr.bf16.gmra.mrb[0].mxu0 %v745
          %v781 = vpop.f32.mrb[0].mxu0
          %v782 = vadd.f32 %v729, %v781
          %v783 = vpop.f32.mrb[0].mxu0
          %v784 = vpop.f32.mrb[0].mxu0
          %v785 = vpop.f32.mrb[0].mxu0
          %786 = vdwg.mxu0
          %v787 = vld [vmem:[#allocation12] sm:$0xf]
          %v788 = vld [vmem:[#allocation12 + $0x4] sm:$0xf]
          %v789 = vld [vmem:[#allocation12 + $0x8] sm:$0xf]
          %v790 = vld [vmem:[#allocation12 + $0xc] sm:$0xf]
          %v791 = vld [vmem:[#allocation14] sm:$0x1]
          %v793 = vlaneseq
          %v794 = vshrl.u32 %v793, 7
          %v795 = vsub.s32 0, %v794
          %v796 = vrot.slane %v791, %v795
          %v802 = vunpack.c.l.b16 %v787
          %v803 = vunpack.c.l.b16 %v788
          %v804 = vunpack.c.l.b16 %v789
          %v805 = vunpack.c.l.b16 %v790
          %v806 = vpack.c.b16 %v803, %v802
          %v807 = vpack.c.b16 %v805, %v804
          %810 = vmatprep.subr.bf16.mxu0 0
          %811 = vmatpush1.bf16.msra.mxu0 %v806
          %812 = vmatprep.subr.bf16.mxu0 0
          %813 = vmatpush1.bf16.msra.mxu0 %v807
          %814 = vmatprep.subr.bf16.mxu0 0
          %815 = vmatpush1.bf16.msra.mxu0 0
          %816 = vmatprep.subr.bf16.mxu0 0
          %817 = vmatpush1.bf16.msra.mxu0 0
          %818 = vmatprep.subr.bf16.mxu0 0
          %819 = vmatpush1.bf16.msra.mxu0 0
          %820 = vmatprep.subr.bf16.mxu0 0
          %821 = vmatpush1.bf16.msra.mxu0 0
          %822 = vmatprep.subr.bf16.mxu0 0
          %823 = vmatpush1.bf16.msra.mxu0 0
          %824 = vmatprep.subr.bf16.mxu0 0
          %825 = vmatpush1.bf16.msra.mxu0 0
          %826 = vmatprep.subr.bf16.mxu0 0
          %827 = vmatpush1.bf16.msra.mxu0 0
          %828 = vmatprep.subr.bf16.mxu0 0
          %829 = vmatpush1.bf16.msra.mxu0 0
          %830 = vmatprep.subr.bf16.mxu0 0
          %831 = vmatpush1.bf16.msra.mxu0 0
          %832 = vmatprep.subr.bf16.mxu0 0
          %833 = vmatpush1.bf16.msra.mxu0 0
          %834 = vmatprep.subr.bf16.mxu0 0
          %835 = vmatpush1.bf16.msra.mxu0 0
          %836 = vmatprep.subr.bf16.mxu0 0
          %837 = vmatpush1.bf16.msra.mxu0 0
          %838 = vmatprep.subr.bf16.mxu0 0
          %839 = vmatpush1.bf16.msra.mxu0 0
          %840 = vmatprep.subr.bf16.mxu0 0
          %841 = vmatpush1.bf16.msra.mxu0 0
          %842 = vmatprep.mubr.bf16.mxu0 0
          %843 = vmatmul.mubr.bf16.gmra.mrb[0].mxu0 %v745
          %v844 = vpop.f32.mrb[0].mxu0
          %v845 = vadd.f32 %v796, %v844
          %v846 = vpop.f32.mrb[0].mxu0
          %v847 = vpop.f32.mrb[0].mxu0
          %v848 = vpop.f32.mrb[0].mxu0
          %849 = vdwg.mxu0
          %v850 = vpack.c.bf16 %v782, %v782
          %vm851 = vcmask 257024
          %852 = vst.msk [vmem:[#allocation2] sm:$0xf] %vm851, %v850
          %v853 = vpack.c.bf16 %v845, %v845
          %854 = vst.msk [vmem:[#allocation3] sm:$0xf] %vm851, %v853
        $region116: #{tpu_custom_call.1} parent=83 // pred_fallthru
          _
        %v855 = vld [vmem:[%s710] sm:$0xff]
        %v856 = vld [vmem:[%s713] sm:$0x1]
        %vm857 = vcmp.gt.f32.partialorder %v856, 0.0
        %v858 = vsel %vm857, 0.0, -1e+09
        %v859 = vpack.c.bf16 %v855, %v855
        %v860 = vld [vmem:[%s3] sm:$0xf]
        %v861 = vld [vmem:[%s3 + $0x4] sm:$0xf]
        %v862 = vld [vmem:[%s3 + $0x8] sm:$0xf]
        %v863 = vld [vmem:[%s3 + $0xc] sm:$0xf]
        %v864 = vld [vmem:[#allocation9] sm:$0x1]
        %v866 = vlaneseq
        %v867 = vshrl.u32 %v866, 7
        %v868 = vsub.s32 0, %v867
        %v869 = vrot.slane %v864, %v868
        %v875 = vunpack.c.l.b16 %v860
        %v876 = vunpack.c.l.b16 %v861
        %v877 = vunpack.c.l.b16 %v862
        %v878 = vunpack.c.l.b16 %v863
        %v879 = vpack.c.b16 %v876, %v875
        %v880 = vpack.c.b16 %v878, %v877
        %vm883 = vcmask 261120
        %v885 = vsel %vm883, %v859, 0
        %887 = vmatprep.subr.bf16.mxu0 0
        %888 = vmatpush1.bf16.msra.mxu0 %v879
        %889 = vmatprep.subr.bf16.mxu0 0
        %890 = vmatpush1.bf16.msra.mxu0 %v880
        %891 = vmatprep.subr.bf16.mxu0 0
        %892 = vmatpush1.bf16.msra.mxu0 0
        %893 = vmatprep.subr.bf16.mxu0 0
        %894 = vmatpush1.bf16.msra.mxu0 0
        %895 = vmatprep.subr.bf16.mxu0 0
        %896 = vmatpush1.bf16.msra.mxu0 0
        %897 = vmatprep.subr.bf16.mxu0 0
        %898 = vmatpush1.bf16.msra.mxu0 0
        %899 = vmatprep.subr.bf16.mxu0 0
        %900 = vmatpush1.bf16.msra.mxu0 0
        %901 = vmatprep.subr.bf16.mxu0 0
        %902 = vmatpush1.bf16.msra.mxu0 0
        %903 = vmatprep.subr.bf16.mxu0 0
        %904 = vmatpush1.bf16.msra.mxu0 0
        %905 = vmatprep.subr.bf16.mxu0 0
        %906 = vmatpush1.bf16.msra.mxu0 0
        %907 = vmatprep.subr.bf16.mxu0 0
        %908 = vmatpush1.bf16.msra.mxu0 0
        %909 = vmatprep.subr.bf16.mxu0 0
        %910 = vmatpush1.bf16.msra.mxu0 0
        %911 = vmatprep.subr.bf16.mxu0 0
        %912 = vmatpush1.bf16.msra.mxu0 0
        %913 = vmatprep.subr.bf16.mxu0 0
        %914 = vmatpush1.bf16.msra.mxu0 0
        %915 = vmatprep.subr.bf16.mxu0 0
        %916 = vmatpush1.bf16.msra.mxu0 0
        %917 = vmatprep.subr.bf16.mxu0 0
        %918 = vmatpush1.bf16.msra.mxu0 0
        %919 = vmatprep.mubr.bf16.mxu0 0
        %920 = vmatmul.mubr.bf16.gmra.mrb[0].mxu0 %v885
        %v921 = vpop.f32.mrb[0].mxu0
        %v922 = vadd.f32 %v869, %v921
        %v923 = vpop.f32.mrb[0].mxu0
        %v924 = vpop.f32.mrb[0].mxu0
        %v925 = vpop.f32.mrb[0].mxu0
        %926 = vdwg.mxu0
        %v927 = vpack.c.bf16 %v922, %v922
        %v928 = vld [vmem:[#allocation2] sm:$0xf]
        %v929 = vld [vmem:[#allocation3] sm:$0xf]
        %v931 = vlaneseq
        %v932 = vshrl.u32 %v931, 7
        %v933 = vsub.s32 0, %v932
        %v934 = vrot.slane %v858, %v933
        %vm936 = vcmask 64512
        %v938 = vsel %vm936, %v927, 0
        %v941 = vsel %vm936, %v928, 0
        %943 = vmatprep.subr.bf16.mxu0 0
        %944 = vmatpush1.bf16.xpose.msra.mxu0 %v941
        %945 = vmatprep.subr.bf16.mxu0 0
        %946 = vmatpush1.bf16.xpose.msra.mxu0 0
        %947 = vmatprep.subr.bf16.mxu0 0
        %948 = vmatpush1.bf16.xpose.msra.mxu0 0
        %949 = vmatprep.subr.bf16.mxu0 0
        %950 = vmatpush1.bf16.xpose.msra.mxu0 0
        %951 = vmatprep.subr.bf16.mxu0 0
        %952 = vmatpush1.bf16.xpose.msra.mxu0 0
        %953 = vmatprep.subr.bf16.mxu0 0
        %954 = vmatpush1.bf16.xpose.msra.mxu0 0
        %955 = vmatprep.subr.bf16.mxu0 0
        %956 = vmatpush1.bf16.xpose.msra.mxu0 0
        %957 = vmatprep.subr.bf16.mxu0 0
        %958 = vmatpush1.bf16.xpose.msra.mxu0 0
        %959 = vmatprep.subr.bf16.mxu0 0
        %960 = vmatpush1.bf16.xpose.msra.mxu0 0
        %961 = vmatprep.subr.bf16.mxu0 0
        %962 = vmatpush1.bf16.xpose.msra.mxu0 0
        %963 = vmatprep.subr.bf16.mxu0 0
        %964 = vmatpush1.bf16.xpose.msra.mxu0 0
        %965 = vmatprep.subr.bf16.mxu0 0
        %966 = vmatpush1.bf16.xpose.msra.mxu0 0
        %967 = vmatprep.subr.bf16.mxu0 0
        %968 = vmatpush1.bf16.xpose.msra.mxu0 0
        %969 = vmatprep.subr.bf16.mxu0 0
        %970 = vmatpush1.bf16.xpose.msra.mxu0 0
        %971 = vmatprep.subr.bf16.mxu0 0
        %972 = vmatpush1.bf16.xpose.msra.mxu0 0
        %973 = vmatprep.subr.bf16.mxu0 0
        %974 = vmatpush1.bf16.xpose.msra.mxu0 0
        %975 = vmatprep.mubr.bf16.mxu0 0
        %976 = vmatmul.mubr.bf16.gmra.mrb[0].mxu0 %v938
        %v977 = vpop.f32.mrb[0].mxu0
        %v978 = vadd.f32 %v934, %v977
        %v979 = vpop.f32.mrb[0].mxu0
        %v980 = vpop.f32.mrb[0].mxu0
        %v981 = vpop.f32.mrb[0].mxu0
        %982 = vdwg.mxu0
        %v983 = vsel %vm936, %v978, -inf
        %984 = vmax.xlane.f32.xlu0 %v983
        %v985 = vpop.xlane.xlu0 %984
        %v986 = vsub.f32 %v978, %v985
        %v987 = vmul.f32 %v986, 1.442695
        %v988 = vpow.pop %v987
        %v989 = vsel %vm936, %v988, 0.0
        %990 = vadd.xlane.f32.xlu0 %v989
        %v991 = vpop.xlane.xlu0 %990
        %v992 = vrcp.pop %v991
        %v993 = vmul.f32 %v988, %v992
        %v994 = vpack.c.bf16 %v993, %v993
        %vm995 = vcmask 60416
        %996 = vst.msk [vmem:[%s703] sm:$0xf] %vm995, %v994
        %v998 = vsel %vm936, %v994, 0
        %vm1000 = vcmask 1043456
        %v1002 = vsel %vm1000, %v929, 0
        %1004 = vmatprep.subr.bf16.mxu0 0
        %1005 = vmatpush1.bf16.msra.mxu0 %v1002
        %1006 = vmatprep.subr.bf16.mxu0 0
        %1007 = vmatpush1.bf16.msra.mxu0 0
        %1008 = vmatprep.subr.bf16.mxu0 0
        %1009 = vmatpush1.bf16.msra.mxu0 0
        %1010 = vmatprep.subr.bf16.mxu0 0
        %1011 = vmatpush1.bf16.msra.mxu0 0
        %1012 = vmatprep.subr.bf16.mxu0 0
        %1013 = vmatpush1.bf16.msra.mxu0 0
        %1014 = vmatprep.subr.bf16.mxu0 0
        %1015 = vmatpush1.bf16.msra.mxu0 0
        %1016 = vmatprep.subr.bf16.mxu0 0
        %1017 = vmatpush1.bf16.msra.mxu0 0
        %1018 = vmatprep.subr.bf16.mxu0 0
        %1019 = vmatpush1.bf16.msra.mxu0 0
        %1020 = vmatprep.subr.bf16.mxu0 0
        %1021 = vmatpush1.bf16.msra.mxu0 0
        %1022 = vmatprep.subr.bf16.mxu0 0
        %1023 = vmatpush1.bf16.msra.mxu0 0
        %1024 = vmatprep.subr.bf16.mxu0 0
        %1025 = vmatpush1.bf16.msra.mxu0 0
        %1026 = vmatprep.subr.bf16.mxu0 0
        %1027 = vmatpush1.bf16.msra.mxu0 0
        %1028 = vmatprep.subr.bf16.mxu0 0
        %1029 = vmatpush1.bf16.msra.mxu0 0
        %1030 = vmatprep.subr.bf16.mxu0 0
        %1031 = vmatpush1.bf16.msra.mxu0 0
        %1032 = vmatprep.subr.bf16.mxu0 0
        %1033 = vmatpush1.bf16.msra.mxu0 0
        %1034 = vmatprep.subr.bf16.mxu0 0
        %1035 = vmatpush1.bf16.msra.mxu0 0
        %1036 = vmatprep.mubr.bf16.mxu0 0
        %1037 = vmatmul.mubr.bf16.gmra.mrb[0].mxu0 %v998
        %v1038 = vpop.f32.mrb[0].mxu0
        %v1039 = vadd.f32 0.0, %v1038
        %v1040 = vpop.f32.mrb[0].mxu0
        %v1041 = vpop.f32.mrb[0].mxu0
        %v1042 = vpop.f32.mrb[0].mxu0
        %1043 = vdwg.mxu0
        %1044 = vst.msk [vmem:[#allocation4] sm:$0xff] %vm936, %v1039
        %1046 = vrot.lane.b32.xlu0 %v927, 120
        %v1047 = vpop.permute.xlu0 %1046
        %v1049 = vunpack.c.l.b16 %v928
        %v1050 = vpack.c.b16 %v1049, %v1049
        %1051 = vrot.lane.b32.xlu0 %v1050, 120
        %v1052 = vpop.permute.xlu0 %1051
        %v1054 = vsel %vm936, %v1047, 0
        %v1057 = vsel %vm936, %v1052, 0
        %1059 = vmatprep.subr.bf16.mxu0 0
        %1060 = vmatpush1.bf16.xpose.msra.mxu0 %v1057
        %1061 = vmatprep.subr.bf16.mxu0 0
        %1062 = vmatpush1.bf16.xpose.msra.mxu0 0
        %1063 = vmatprep.subr.bf16.mxu0 0
        %1064 = vmatpush1.bf16.xpose.msra.mxu0 0
        %1065 = vmatprep.subr.bf16.mxu0 0
        %1066 = vmatpush1.bf16.xpose.msra.mxu0 0
        %1067 = vmatprep.subr.bf16.mxu0 0
        %1068 = vmatpush1.bf16.xpose.msra.mxu0 0
        %1069 = vmatprep.subr.bf16.mxu0 0
        %1070 = vmatpush1.bf16.xpose.msra.mxu0 0
        %1071 = vmatprep.subr.bf16.mxu0 0
        %1072 = vmatpush1.bf16.xpose.msra.mxu0 0
        %1073 = vmatprep.subr.bf16.mxu0 0
        %1074 = vmatpush1.bf16.xpose.msra.mxu0 0
        %1075 = vmatprep.subr.bf16.mxu0 0
        %1076 = vmatpush1.bf16.xpose.msra.mxu0 0
        %1077 = vmatprep.subr.bf16.mxu0 0
        %1078 = vmatpush1.bf16.xpose.msra.mxu0 0
        %1079 = vmatprep.subr.bf16.mxu0 0
        %1080 = vmatpush1.bf16.xpose.msra.mxu0 0
        %1081 = vmatprep.subr.bf16.mxu0 0
        %1082 = vmatpush1.bf16.xpose.msra.mxu0 0
        %1083 = vmatprep.subr.bf16.mxu0 0
        %1084 = vmatpush1.bf16.xpose.msra.mxu0 0
        %1085 = vmatprep.subr.bf16.mxu0 0
        %1086 = vmatpush1.bf16.xpose.msra.mxu0 0
        %1087 = vmatprep.subr.bf16.mxu0 0
        %1088 = vmatpush1.bf16.xpose.msra.mxu0 0
        %1089 = vmatprep.subr.bf16.mxu0 0
        %1090 = vmatpush1.bf16.xpose.msra.mxu0 0
        %1091 = vmatprep.mubr.bf16.mxu0 0
        %1092 = vmatmul.mubr.bf16.gmra.mrb[0].mxu0 %v1054
        %v1093 = vpop.f32.mrb[0].mxu0
        %v1094 = vadd.f32 %v934, %v1093
        %v1095 = vpop.f32.mrb[0].mxu0
        %v1096 = vpop.f32.mrb[0].mxu0
        %v1097 = vpop.f32.mrb[0].mxu0
        %1098 = vdwg.mxu0
        %v1099 = vsel %vm936, %v1094, -inf
        %1100 = vmax.xlane.f32.xlu0 %v1099
        %v1101 = vpop.xlane.xlu0 %1100
        %v1102 = vsub.f32 %v1094, %v1101
        %v1103 = vmul.f32 %v1102, 1.442695
        %v1104 = vpow.pop %v1103
        %v1105 = vsel %vm936, %v1104, 0.0
        %1106 = vadd.xlane.f32.xlu0 %v1105
        %v1107 = vpop.xlane.xlu0 %1106
        %v1108 = vrcp.pop %v1107
        %v1109 = vmul.f32 %v1104, %v1108
        %v1110 = vpack.c.bf16 %v1109, %v1109
        %s1111 = scalar_lea.vmem %s703, 4 [#allocation19]
        %1112 = vst.msk [vmem:[%s1111] sm:$0xf] %vm995, %v1110
        %v1114 = vunpack.c.l.b16 %v929
        %v1115 = vpack.c.b16 %v1114, %v1114
        %1116 = vrot.lane.b32.xlu0 %v1115, 120
        %v1117 = vpop.permute.xlu0 %1116
        %v1119 = vsel %vm936, %v1110, 0
        %v1122 = vsel %vm1000, %v1117, 0
        %1124 = vmatprep.subr.bf16.mxu0 0
        %1125 = vmatpush1.bf16.msra.mxu0 %v1122
        %1126 = vmatprep.subr.bf16.mxu0 0
        %1127 = vmatpush1.bf16.msra.mxu0 0
        %1128 = vmatprep.subr.bf16.mxu0 0
        %1129 = vmatpush1.bf16.msra.mxu0 0
        %1130 = vmatprep.subr.bf16.mxu0 0
        %1131 = vmatpush1.bf16.msra.mxu0 0
        %1132 = vmatprep.subr.bf16.mxu0 0
        %1133 = vmatpush1.bf16.msra.mxu0 0
        %1134 = vmatprep.subr.bf16.mxu0 0
        %1135 = vmatpush1.bf16.msra.mxu0 0
        %1136 = vmatprep.subr.bf16.mxu0 0
        %1137 = vmatpush1.bf16.msra.mxu0 0
        %1138 = vmatprep.subr.bf16.mxu0 0
        %1139 = vmatpush1.bf16.msra.mxu0 0
        %1140 = vmatprep.subr.bf16.mxu0 0
        %1141 = vmatpush1.bf16.msra.mxu0 0
        %1142 = vmatprep.subr.bf16.mxu0 0
        %1143 = vmatpush1.bf16.msra.mxu0 0
        %1144 = vmatprep.subr.bf16.mxu0 0
        %1145 = vmatpush1.bf16.msra.mxu0 0
        %1146 = vmatprep.subr.bf16.mxu0 0
        %1147 = vmatpush1.bf16.msra.mxu0 0
        %1148 = vmatprep.subr.bf16.mxu0 0
        %1149 = vmatpush1.bf16.msra.mxu0 0
        %1150 = vmatprep.subr.bf16.mxu0 0
        %1151 = vmatpush1.bf16.msra.mxu0 0
        %1152 = vmatprep.subr.bf16.mxu0 0
        %1153 = vmatpush1.bf16.msra.mxu0 0
        %1154 = vmatprep.subr.bf16.mxu0 0
        %1155 = vmatpush1.bf16.msra.mxu0 0
        %1156 = vmatprep.mubr.bf16.mxu0 0
        %1157 = vmatmul.mubr.bf16.gmra.mrb[0].mxu0 %v1119
        %v1158 = vpop.f32.mrb[0].mxu0
        %v1159 = vadd.f32 0.0, %v1158
        %v1160 = vpop.f32.mrb[0].mxu0
        %v1161 = vpop.f32.mrb[0].mxu0
        %v1162 = vpop.f32.mrb[0].mxu0
        %1163 = vdwg.mxu0
        %1165 = vrot.lane.b32.xlu0 %v1159, 8
        %v1166 = vpop.permute.xlu0 %1165
        %vm1168 = vcmask 130112
        %1169 = vst.msk [vmem:[#allocation4] sm:$0xff] %vm1168, %v1166
        %1170 = vrot.lane.b32.xlu0 %v927, 112
        %v1171 = vpop.permute.xlu0 %1170
        %1172 = vrot.lane.b32.xlu0 %v1050, 112
        %v1173 = vpop.permute.xlu0 %1172
        %v1175 = vsel %vm936, %v1171, 0
        %v1178 = vsel %vm936, %v1173, 0
        %1180 = vmatprep.subr.bf16.mxu0 0
        %1181 = vmatpush1.bf16.xpose.msra.mxu0 %v1178
        %1182 = vmatprep.subr.bf16.mxu0 0
        %1183 = vmatpush1.bf16.xpose.msra.mxu0 0
        %1184 = vmatprep.subr.bf16.mxu0 0
        %1185 = vmatpush1.bf16.xpose.msra.mxu0 0
        %1186 = vmatprep.subr.bf16.mxu0 0
        %1187 = vmatpush1.bf16.xpose.msra.mxu0 0
        %1188 = vmatprep.subr.bf16.mxu0 0
        %1189 = vmatpush1.bf16.xpose.msra.mxu0 0
        %1190 = vmatprep.subr.bf16.mxu0 0
        %1191 = vmatpush1.bf16.xpose.msra.mxu0 0
        %1192 = vmatprep.subr.bf16.mxu0 0
        %1193 = vmatpush1.bf16.xpose.msra.mxu0 0
        %1194 = vmatprep.subr.bf16.mxu0 0
        %1195 = vmatpush1.bf16.xpose.msra.mxu0 0
        %1196 = vmatprep.subr.bf16.mxu0 0
        %1197 = vmatpush1.bf16.xpose.msra.mxu0 0
        %1198 = vmatprep.subr.bf16.mxu0 0
        %1199 = vmatpush1.bf16.xpose.msra.mxu0 0
        %1200 = vmatprep.subr.bf16.mxu0 0
        %1201 = vmatpush1.bf16.xpose.msra.mxu0 0
        %1202 = vmatprep.subr.bf16.mxu0 0
        %1203 = vmatpush1.bf16.xpose.msra.mxu0 0
        %1204 = vmatprep.subr.bf16.mxu0 0
        %1205 = vmatpush1.bf16.xpose.msra.mxu0 0
        %1206 = vmatprep.subr.bf16.mxu0 0
        %1207 = vmatpush1.bf16.xpose.msra.mxu0 0
        %1208 = vmatprep.subr.bf16.mxu0 0
        %1209 = vmatpush1.bf16.xpose.msra.mxu0 0
        %1210 = vmatprep.subr.bf16.mxu0 0
        %1211 = vmatpush1.bf16.xpose.msra.mxu0 0
        %1212 = vmatprep.mubr.bf16.mxu0 0
        %1213 = vmatmul.mubr.bf16.gmra.mrb[0].mxu0 %v1175
        %v1214 = vpop.f32.mrb[0].mxu0
        %v1215 = vadd.f32 %v934, %v1214
        %v1216 = vpop.f32.mrb[0].mxu0
        %v1217 = vpop.f32.mrb[0].mxu0
        %v1218 = vpop.f32.mrb[0].mxu0
        %1219 = vdwg.mxu0
        %v1220 = vsel %vm936, %v1215, -inf
        %1221 = vmax.xlane.f32.xlu0 %v1220
        %v1222 = vpop.xlane.xlu0 %1221
        %v1223 = vsub.f32 %v1215, %v1222
        %v1224 = vmul.f32 %v1223, 1.442695
        %v1225 = vpow.pop %v1224
        %v1226 = vsel %vm936, %v1225, 0.0
        %1227 = vadd.xlane.f32.xlu0 %v1226
        %v1228 = vpop.xlane.xlu0 %1227
        %v1229 = vrcp.pop %v1228
        %v1230 = vmul.f32 %v1225, %v1229
        %v1231 = vpack.c.bf16 %v1230, %v1230
        %s1232 = scalar_lea.vmem %s703, 8 [#allocation19]
        %1233 = vst.msk [vmem:[%s1232] sm:$0xf] %vm995, %v1231
        %1234 = vrot.lane.b32.xlu0 %v1115, 112
        %v1235 = vpop.permute.xlu0 %1234
        %v1237 = vsel %vm936, %v1231, 0
        %v1240 = vsel %vm1000, %v1235, 0
        %1242 = vmatprep.subr.bf16.mxu0 0
        %1243 = vmatpush1.bf16.msra.mxu0 %v1240
        %1244 = vmatprep.subr.bf16.mxu0 0
        %1245 = vmatpush1.bf16.msra.mxu0 0
        %1246 = vmatprep.subr.bf16.mxu0 0
        %1247 = vmatpush1.bf16.msra.mxu0 0
        %1248 = vmatprep.subr.bf16.mxu0 0
        %1249 = vmatpush1.bf16.msra.mxu0 0
        %1250 = vmatprep.subr.bf16.mxu0 0
        %1251 = vmatpush1.bf16.msra.mxu0 0
        %1252 = vmatprep.subr.bf16.mxu0 0
        %1253 = vmatpush1.bf16.msra.mxu0 0
        %1254 = vmatprep.subr.bf16.mxu0 0
        %1255 = vmatpush1.bf16.msra.mxu0 0
        %1256 = vmatprep.subr.bf16.mxu0 0
        %1257 = vmatpush1.bf16.msra.mxu0 0
        %1258 = vmatprep.subr.bf16.mxu0 0
        %1259 = vmatpush1.bf16.msra.mxu0 0
        %1260 = vmatprep.subr.bf16.mxu0 0
        %1261 = vmatpush1.bf16.msra.mxu0 0
        %1262 = vmatprep.subr.bf16.mxu0 0
        %1263 = vmatpush1.bf16.msra.mxu0 0
        %1264 = vmatprep.subr.bf16.mxu0 0
        %1265 = vmatpush1.bf16.msra.mxu0 0
        %1266 = vmatprep.subr.bf16.mxu0 0
        %1267 = vmatpush1.bf16.msra.mxu0 0
        %1268 = vmatprep.subr.bf16.mxu0 0
        %1269 = vmatpush1.bf16.msra.mxu0 0
        %1270 = vmatprep.subr.bf16.mxu0 0
        %1271 = vmatpush1.bf16.msra.mxu0 0
        %1272 = vmatprep.subr.bf16.mxu0 0
        %1273 = vmatpush1.bf16.msra.mxu0 0
        %1274 = vmatprep.mubr.bf16.mxu0 0
        %1275 = vmatmul.mubr.bf16.gmra.mrb[0].mxu0 %v1237
        %v1276 = vpop.f32.mrb[0].mxu0
        %v1277 = vadd.f32 0.0, %v1276
        %v1278 = vpop.f32.mrb[0].mxu0
        %v1279 = vpop.f32.mrb[0].mxu0
        %v1280 = vpop.f32.mrb[0].mxu0
        %1281 = vdwg.mxu0
        %1283 = vrot.lane.b32.xlu0 %v1277, 16
        %v1284 = vpop.permute.xlu0 %1283
        %vm1286 = vcmask 195712
        %1287 = vst.msk [vmem:[#allocation4] sm:$0xff] %vm1286, %v1284
        %1288 = vrot.lane.b32.xlu0 %v927, 104
        %v1289 = vpop.permute.xlu0 %1288
        %1290 = vrot.lane.b32.xlu0 %v1050, 104
        %v1291 = vpop.permute.xlu0 %1290
        %v1293 = vsel %vm936, %v1289, 0
        %v1296 = vsel %vm936, %v1291, 0
        %1298 = vmatprep.subr.bf16.mxu0 0
        %1299 = vmatpush1.bf16.xpose.msra.mxu0 %v1296
        %1300 = vmatprep.subr.bf16.mxu0 0
        %1301 = vmatpush1.bf16.xpose.msra.mxu0 0
        %1302 = vmatprep.subr.bf16.mxu0 0
        %1303 = vmatpush1.bf16.xpose.msra.mxu0 0
        %1304 = vmatprep.subr.bf16.mxu0 0
        %1305 = vmatpush1.bf16.xpose.msra.mxu0 0
        %1306 = vmatprep.subr.bf16.mxu0 0
        %1307 = vmatpush1.bf16.xpose.msra.mxu0 0
        %1308 = vmatprep.subr.bf16.mxu0 0
        %1309 = vmatpush1.bf16.xpose.msra.mxu0 0
        %1310 = vmatprep.subr.bf16.mxu0 0
        %1311 = vmatpush1.bf16.xpose.msra.mxu0 0
        %1312 = vmatprep.subr.bf16.mxu0 0
        %1313 = vmatpush1.bf16.xpose.msra.mxu0 0
        %1314 = vmatprep.subr.bf16.mxu0 0
        %1315 = vmatpush1.bf16.xpose.msra.mxu0 0
        %1316 = vmatprep.subr.bf16.mxu0 0
        %1317 = vmatpush1.bf16.xpose.msra.mxu0 0
        %1318 = vmatprep.subr.bf16.mxu0 0
        %1319 = vmatpush1.bf16.xpose.msra.mxu0 0
        %1320 = vmatprep.subr.bf16.mxu0 0
        %1321 = vmatpush1.bf16.xpose.msra.mxu0 0
        %1322 = vmatprep.subr.bf16.mxu0 0
        %1323 = vmatpush1.bf16.xpose.msra.mxu0 0
        %1324 = vmatprep.subr.bf16.mxu0 0
        %1325 = vmatpush1.bf16.xpose.msra.mxu0 0
        %1326 = vmatprep.subr.bf16.mxu0 0
        %1327 = vmatpush1.bf16.xpose.msra.mxu0 0
        %1328 = vmatprep.subr.bf16.mxu0 0
        %1329 = vmatpush1.bf16.xpose.msra.mxu0 0
        %1330 = vmatprep.mubr.bf16.mxu0 0
        %1331 = vmatmul.mubr.bf16.gmra.mrb[0].mxu0 %v1293
        %v1332 = vpop.f32.mrb[0].mxu0
        %v1333 = vadd.f32 %v934, %v1332
        %v1334 = vpop.f32.mrb[0].mxu0
        %v1335 = vpop.f32.mrb[0].mxu0
        %v1336 = vpop.f32.mrb[0].mxu0
        %1337 = vdwg.mxu0
        %v1338 = vsel %vm936, %v1333, -inf
        %1339 = vmax.xlane.f32.xlu0 %v1338
        %v1340 = vpop.xlane.xlu0 %1339
        %v1341 = vsub.f32 %v1333, %v1340
        %v1342 = vmul.f32 %v1341, 1.442695
        %v1343 = vpow.pop %v1342
        %v1344 = vsel %vm936, %v1343, 0.0
        %1345 = vadd.xlane.f32.xlu0 %v1344
        %v1346 = vpop.xlane.xlu0 %1345
        %v1347 = vrcp.pop %v1346
        %v1348 = vmul.f32 %v1343, %v1347
        %v1349 = vpack.c.bf16 %v1348, %v1348
        %s1350 = scalar_lea.vmem %s703, 12 [#allocation19]
        %1351 = vst.msk [vmem:[%s1350] sm:$0xf] %vm995, %v1349
        %1352 = vrot.lane.b32.xlu0 %v1115, 104
        %v1353 = vpop.permute.xlu0 %1352
        %v1355 = vsel %vm936, %v1349, 0
        %v1358 = vsel %vm1000, %v1353, 0
        %1360 = vmatprep.subr.bf16.mxu0 0
        %1361 = vmatpush1.bf16.msra.mxu0 %v1358
        %1362 = vmatprep.subr.bf16.mxu0 0
        %1363 = vmatpush1.bf16.msra.mxu0 0
        %1364 = vmatprep.subr.bf16.mxu0 0
        %1365 = vmatpush1.bf16.msra.mxu0 0
        %1366 = vmatprep.subr.bf16.mxu0 0
        %1367 = vmatpush1.bf16.msra.mxu0 0
        %1368 = vmatprep.subr.bf16.mxu0 0
        %1369 = vmatpush1.bf16.msra.mxu0 0
        %1370 = vmatprep.subr.bf16.mxu0 0
        %1371 = vmatpush1.bf16.msra.mxu0 0
        %1372 = vmatprep.subr.bf16.mxu0 0
        %1373 = vmatpush1.bf16.msra.mxu0 0
        %1374 = vmatprep.subr.bf16.mxu0 0
        %1375 = vmatpush1.bf16.msra.mxu0 0
        %1376 = vmatprep.subr.bf16.mxu0 0
        %1377 = vmatpush1.bf16.msra.mxu0 0
        %1378 = vmatprep.subr.bf16.mxu0 0
        %1379 = vmatpush1.bf16.msra.mxu0 0
        %1380 = vmatprep.subr.bf16.mxu0 0
        %1381 = vmatpush1.bf16.msra.mxu0 0
        %1382 = vmatprep.subr.bf16.mxu0 0
        %1383 = vmatpush1.bf16.msra.mxu0 0
        %1384 = vmatprep.subr.bf16.mxu0 0
        %1385 = vmatpush1.bf16.msra.mxu0 0
        %1386 = vmatprep.subr.bf16.mxu0 0
        %1387 = vmatpush1.bf16.msra.mxu0 0
        %1388 = vmatprep.subr.bf16.mxu0 0
        %1389 = vmatpush1.bf16.msra.mxu0 0
        %1390 = vmatprep.subr.bf16.mxu0 0
        %1391 = vmatpush1.bf16.msra.mxu0 0
        %1392 = vmatprep.mubr.bf16.mxu0 0
        %1393 = vmatmul.mubr.bf16.gmra.mrb[0].mxu0 %v1355
        %v1394 = vpop.f32.mrb[0].mxu0
        %v1395 = vadd.f32 0.0, %v1394
        %v1396 = vpop.f32.mrb[0].mxu0
        %v1397 = vpop.f32.mrb[0].mxu0
        %v1398 = vpop.f32.mrb[0].mxu0
        %1399 = vdwg.mxu0
        %1401 = vrot.lane.b32.xlu0 %v1395, 24
        %v1402 = vpop.permute.xlu0 %1401
        %vm1404 = vcmask 261312
        %1405 = vst.msk [vmem:[#allocation4] sm:$0xff] %vm1404, %v1402
        %v1406 = vld [vmem:[#allocation4] sm:$0xff]
        %v1407 = vpack.c.bf16 %v1406, %v1406
        %v1408 = vld [vmem:[%s9] sm:$0xf]
        %v1409 = vld [vmem:[%s9 + $0x4] sm:$0xf]
        %v1410 = vld [vmem:[%s9 + $0x8] sm:$0xf]
        %v1411 = vld [vmem:[%s9 + $0xc] sm:$0xf]
        %v1412 = vld [vmem:[%s10] sm:$0x1]
        %v1414 = vlaneseq
        %v1415 = vshrl.u32 %v1414, 7
        %v1416 = vsub.s32 0, %v1415
        %v1417 = vrot.slane %v1412, %v1416
        %v1423 = vunpack.c.l.b16 %v1408
        %v1424 = vunpack.c.l.b16 %v1409
        %v1425 = vunpack.c.l.b16 %v1410
        %v1426 = vunpack.c.l.b16 %v1411
        %v1427 = vpack.c.b16 %v1424, %v1423
        %v1428 = vpack.c.b16 %v1426, %v1425
        %v1432 = vsel %vm883, %v1407, 0
        %1434 = vmatprep.subr.bf16.mxu0 0
        %1435 = vmatpush1.bf16.msra.mxu0 %v1427
        %1436 = vmatprep.subr.bf16.mxu0 0
        %1437 = vmatpush1.bf16.msra.mxu0 %v1428
        %1438 = vmatprep.subr.bf16.mxu0 0
        %1439 = vmatpush1.bf16.msra.mxu0 0
        %1440 = vmatprep.subr.bf16.mxu0 0
        %1441 = vmatpush1.bf16.msra.mxu0 0
        %1442 = vmatprep.subr.bf16.mxu0 0
        %1443 = vmatpush1.bf16.msra.mxu0 0
        %1444 = vmatprep.subr.bf16.mxu0 0
        %1445 = vmatpush1.bf16.msra.mxu0 0
        %1446 = vmatprep.subr.bf16.mxu0 0
        %1447 = vmatpush1.bf16.msra.mxu0 0
        %1448 = vmatprep.subr.bf16.mxu0 0
        %1449 = vmatpush1.bf16.msra.mxu0 0
        %1450 = vmatprep.subr.bf16.mxu0 0
        %1451 = vmatpush1.bf16.msra.mxu0 0
        %1452 = vmatprep.subr.bf16.mxu0 0
        %1453 = vmatpush1.bf16.msra.mxu0 0
        %1454 = vmatprep.subr.bf16.mxu0 0
        %1455 = vmatpush1.bf16.msra.mxu0 0
        %1456 = vmatprep.subr.bf16.mxu0 0
        %1457 = vmatpush1.bf16.msra.mxu0 0
        %1458 = vmatprep.subr.bf16.mxu0 0
        %1459 = vmatpush1.bf16.msra.mxu0 0
        %1460 = vmatprep.subr.bf16.mxu0 0
        %1461 = vmatpush1.bf16.msra.mxu0 0
        %1462 = vmatprep.subr.bf16.mxu0 0
        %1463 = vmatpush1.bf16.msra.mxu0 0
        %1464 = vmatprep.subr.bf16.mxu0 0
        %1465 = vmatpush1.bf16.msra.mxu0 0
        %1466 = vmatprep.mubr.bf16.mxu0 0
        %1467 = vmatmul.mubr.bf16.gmra.mrb[0].mxu0 %v1432
        %v1468 = vpop.f32.mrb[0].mxu0
        %v1469 = vadd.f32 %v1417, %v1468
        %v1470 = vpop.f32.mrb[0].mxu0
        %v1471 = vpop.f32.mrb[0].mxu0
        %v1472 = vpop.f32.mrb[0].mxu0
        %1473 = vdwg.mxu0
        %v1474 = vadd.f32 %v855, %v1469
        %s1475 = sld [smem:[#allocation17]]
        %s1476 = sld [smem:[#allocation17 + $0x1]]
        %v1477 = vsel %vm883, %v1474, 0.0
        %1478 = vadd.xlane.f32.xlu0 %v1477
        %v1479 = vpop.xlane.xlu0 %1478
        %v1480 = vrcp.pop 32.0
        %v1481 = vmul.f32 %v1479, %v1480
        %v1482 = vsub.f32 %v1474, %v1481
        %v1483 = vmul.f32 %v1482, %v1482
        %v1484 = vsel %vm883, %v1483, 0.0
        %1485 = vadd.xlane.f32.xlu0 %v1484
        %v1486 = vpop.xlane.xlu0 %1485
        %v1487 = vrcp.pop 31.0
        %v1488 = vmul.f32 %v1486, %v1487
        %v1489 = vrsqrt.pop %v1488
        %v1490 = vmul.f32 %v1488, %v1489
        %vm1491 = vcmp.eq.f32.partialorder %v1488, inf
        %v1492 = vsel %vm1491, %v1488, %v1490
        %vm1493 = vcmp.eq.f32.partialorder %v1488, 0.0
        %v1494 = vand.u32 %v1488, 2147483648
        %v1495 = vsel %vm1493, %v1494, %v1492
        %v1496 = vadd.f32 %v1495, 1e-05
        %v1497 = vrcp.pop %v1496
        %v1498 = vmul.f32 %v1482, %v1497
        %v1499 = vstv %s1475
        %v1500 = vmul.f32 %v1498, %v1499
        %v1501 = vstv %s1476
        %v1502 = vadd.f32 %v1500, %v1501
        %v1503 = vpack.c.bf16 %v1502, %v1502
        %v1504 = vld [vmem:[#allocation15] sm:$0xf]
        %v1505 = vld [vmem:[#allocation15 + $0x4] sm:$0xf]
        %v1506 = vld [vmem:[#allocation15 + $0x8] sm:$0xf]
        %v1507 = vld [vmem:[#allocation15 + $0xc] sm:$0xf]
        %v1508 = vld [vmem:[%s12] sm:$0x1]
        %v1510 = vlaneseq
        %v1511 = vshrl.u32 %v1510, 7
        %v1512 = vsub.s32 0, %v1511
        %v1513 = vrot.slane %v1508, %v1512
        %v1519 = vunpack.c.l.b16 %v1504
        %v1520 = vunpack.c.l.b16 %v1505
        %v1521 = vunpack.c.l.b16 %v1506
        %v1522 = vunpack.c.l.b16 %v1507
        %v1523 = vpack.c.b16 %v1520, %v1519
        %v1524 = vpack.c.b16 %v1522, %v1521
        %v1528 = vsel %vm883, %v1503, 0
        %1530 = vmatprep.subr.bf16.mxu0 0
        %1531 = vmatpush1.bf16.msra.mxu0 %v1523
        %1532 = vmatprep.subr.bf16.mxu0 0
        %1533 = vmatpush1.bf16.msra.mxu0 %v1524
        %1534 = vmatprep.subr.bf16.mxu0 0
        %1535 = vmatpush1.bf16.msra.mxu0 0
        %1536 = vmatprep.subr.bf16.mxu0 0
        %1537 = vmatpush1.bf16.msra.mxu0 0
        %1538 = vmatprep.subr.bf16.mxu0 0
        %1539 = vmatpush1.bf16.msra.mxu0 0
        %1540 = vmatprep.subr.bf16.mxu0 0
        %1541 = vmatpush1.bf16.msra.mxu0 0
        %1542 = vmatprep.subr.bf16.mxu0 0
        %1543 = vmatpush1.bf16.msra.mxu0 0
        %1544 = vmatprep.subr.bf16.mxu0 0
        %1545 = vmatpush1.bf16.msra.mxu0 0
        %1546 = vmatprep.subr.bf16.mxu0 0
        %1547 = vmatpush1.bf16.msra.mxu0 0
        %1548 = vmatprep.subr.bf16.mxu0 0
        %1549 = vmatpush1.bf16.msra.mxu0 0
        %1550 = vmatprep.subr.bf16.mxu0 0
        %1551 = vmatpush1.bf16.msra.mxu0 0
        %1552 = vmatprep.subr.bf16.mxu0 0
        %1553 = vmatpush1.bf16.msra.mxu0 0
        %1554 = vmatprep.subr.bf16.mxu0 0
        %1555 = vmatpush1.bf16.msra.mxu0 0
        %1556 = vmatprep.subr.bf16.mxu0 0
        %1557 = vmatpush1.bf16.msra.mxu0 0
        %1558 = vmatprep.subr.bf16.mxu0 0
        %1559 = vmatpush1.bf16.msra.mxu0 0
        %1560 = vmatprep.subr.bf16.mxu0 0
        %1561 = vmatpush1.bf16.msra.mxu0 0
        %1562 = vmatprep.mubr.bf16.mxu0 0
        %1563 = vmatmul.mubr.bf16.gmra.mrb[0].mxu0 %v1528
        %v1564 = vpop.f32.mrb[0].mxu0
        %v1565 = vadd.f32 %v1513, %v1564
        %v1566 = vpop.f32.mrb[0].mxu0
        %v1567 = vpop.f32.mrb[0].mxu0
        %v1568 = vpop.f32.mrb[0].mxu0
        %1569 = vdwg.mxu0
        %v1570 = vmax.f32 %v1565, 0.0
        %v1571 = vpack.c.bf16 %v1570, %v1570
        %v1572 = vld [vmem:[%s13] sm:$0xf]
        %v1573 = vld [vmem:[%s13 + $0x4] sm:$0xf]
        %v1574 = vld [vmem:[%s13 + $0x8] sm:$0xf]
        %v1575 = vld [vmem:[%s13 + $0xc] sm:$0xf]
        %v1576 = vld [vmem:[%s13 + $0x10] sm:$0xf]
        %v1577 = vld [vmem:[%s13 + $0x14] sm:$0xf]
        %v1578 = vld [vmem:[%s13 + $0x18] sm:$0xf]
        %v1579 = vld [vmem:[%s13 + $0x1c] sm:$0xf]
        %v1580 = vld [vmem:[%s14] sm:$0x1]
        %v1582 = vlaneseq
        %v1583 = vshrl.u32 %v1582, 7
        %v1584 = vsub.s32 0, %v1583
        %v1585 = vrot.slane %v1580, %v1584
        %v1595 = vunpack.c.l.b16 %v1572
        %v1596 = vunpack.c.l.b16 %v1573
        %v1597 = vunpack.c.l.b16 %v1574
        %v1598 = vunpack.c.l.b16 %v1575
        %v1599 = vunpack.c.l.b16 %v1576
        %v1600 = vunpack.c.l.b16 %v1577
        %v1601 = vunpack.c.l.b16 %v1578
        %v1602 = vunpack.c.l.b16 %v1579
        %v1603 = vpack.c.b16 %v1596, %v1595
        %v1604 = vpack.c.b16 %v1598, %v1597
        %v1605 = vpack.c.b16 %v1600, %v1599
        %v1606 = vpack.c.b16 %v1602, %v1601
        %vm1611 = vcmask 523264
        %v1613 = vsel %vm1611, %v1571, 0
        %1615 = vmatprep.subr.bf16.mxu0 0
        %1616 = vmatpush1.bf16.msra.mxu0 %v1603
        %1617 = vmatprep.subr.bf16.mxu0 0
        %1618 = vmatpush1.bf16.msra.mxu0 %v1604
        %1619 = vmatprep.subr.bf16.mxu0 0
        %1620 = vmatpush1.bf16.msra.mxu0 %v1605
        %1621 = vmatprep.subr.bf16.mxu0 0
        %1622 = vmatpush1.bf16.msra.mxu0 %v1606
        %1623 = vmatprep.subr.bf16.mxu0 0
        %1624 = vmatpush1.bf16.msra.mxu0 0
        %1625 = vmatprep.subr.bf16.mxu0 0
        %1626 = vmatpush1.bf16.msra.mxu0 0
        %1627 = vmatprep.subr.bf16.mxu0 0
        %1628 = vmatpush1.bf16.msra.mxu0 0
        %1629 = vmatprep.subr.bf16.mxu0 0
        %1630 = vmatpush1.bf16.msra.mxu0 0
        %1631 = vmatprep.subr.bf16.mxu0 0
        %1632 = vmatpush1.bf16.msra.mxu0 0
        %1633 = vmatprep.subr.bf16.mxu0 0
        %1634 = vmatpush1.bf16.msra.mxu0 0
        %1635 = vmatprep.subr.bf16.mxu0 0
        %1636 = vmatpush1.bf16.msra.mxu0 0
        %1637 = vmatprep.subr.bf16.mxu0 0
        %1638 = vmatpush1.bf16.msra.mxu0 0
        %1639 = vmatprep.subr.bf16.mxu0 0
        %1640 = vmatpush1.bf16.msra.mxu0 0
        %1641 = vmatprep.subr.bf16.mxu0 0
        %1642 = vmatpush1.bf16.msra.mxu0 0
        %1643 = vmatprep.subr.bf16.mxu0 0
        %1644 = vmatpush1.bf16.msra.mxu0 0
        %1645 = vmatprep.subr.bf16.mxu0 0
        %1646 = vmatpush1.bf16.msra.mxu0 0
        %1647 = vmatprep.mubr.bf16.mxu0 0
        %1648 = vmatmul.mubr.bf16.gmra.mrb[0].mxu0 %v1613
        %v1649 = vpop.f32.mrb[0].mxu0
        %v1650 = vadd.f32 %v1585, %v1649
        %v1651 = vpop.f32.mrb[0].mxu0
        %v1652 = vpop.f32.mrb[0].mxu0
        %v1653 = vpop.f32.mrb[0].mxu0
        %1654 = vdwg.mxu0
        %v1655 = vadd.f32 %v1502, %v1650
        %s1656 = sld [smem:[#allocation17 + $0x2]]
        %s1657 = sld [smem:[#allocation17 + $0x3]]
        %v1658 = vsel %vm883, %v1655, 0.0
        %1659 = vadd.xlane.f32.xlu0 %v1658
        %v1660 = vpop.xlane.xlu0 %1659
        %v1661 = vmul.f32 %v1660, %v1480
        %v1662 = vsub.f32 %v1655, %v1661
        %v1663 = vmul.f32 %v1662, %v1662
        %v1664 = vsel %vm883, %v1663, 0.0
        %1665 = vadd.xlane.f32.xlu0 %v1664
        %v1666 = vpop.xlane.xlu0 %1665
        %v1667 = vmul.f32 %v1666, %v1487
        %v1668 = vrsqrt.pop %v1667
        %v1669 = vmul.f32 %v1667, %v1668
        %vm1670 = vcmp.eq.f32.partialorder %v1667, inf
        %v1671 = vsel %vm1670, %v1667, %v1669
        %vm1672 = vcmp.eq.f32.partialorder %v1667, 0.0
        %v1673 = vand.u32 %v1667, 2147483648
        %v1674 = vsel %vm1672, %v1673, %v1671
        %v1675 = vadd.f32 %v1674, 1e-05
        %v1676 = vrcp.pop %v1675
        %v1677 = vmul.f32 %v1662, %v1676
        %v1678 = vstv %s1656
        %v1679 = vmul.f32 %v1677, %v1678
        %v1680 = vstv %s1657
        %v1681 = vadd.f32 %v1679, %v1680
        %1682 = vst.msk [vmem:[%s696] sm:$0xff] %vm883, %v1681
        %s1683 = sand.u32 %s417, 1
        %s1684 = scalar_lea.sflag [#allocation7], %s1683
        %s1685 = sand.u32 %s417, 1
        %s1686 = smul.addr %s1685, 8
        %s1687 = scalar_lea.vmem [#allocation18], %s1686
        %s1688 = sand.u32 %s445, 1
        %s1689 = scalar_lea.sflag [#allocation20], %s1688
        %s1690 = sand.u32 %s445, 1
        %s1691 = smul.addr %s1690, 16
        %s1692 = scalar_lea.vmem [#allocation19], %s1691
        // Predicated region
        $region117: #{tpu_custom_call.1} parent=83 // pred_check
          %p1693 = pneg %p427
        $region118: #{tpu_custom_call.1} parent=83 // pred_check_branch
          %1695 = sbr.rel (%p1693) target = $region120
        $region119: #{tpu_custom_call.1} parent=83 // pred_region
          %s1697 = ssub.s32 128, 128
          %1698 = vsyncadd %s1684, %s1697
          %s1699 = sadd.s32 %s47, %s46
          %s1700 = smul.addr %s1699, 128
          %s1701 = scalar_lea.hbm %s16, %s1700
          %s1703 = sshll.u32 %s1687, 4
          %s1704 = int_to_ptr.vmem [resolvable:$true] %s1703
          %1706 = dma.vmem_to_hbm [thread:$0]  %s1704, 128, %s1701, %s1684
        $region120: #{tpu_custom_call.1} parent=83 // pred_fallthru
          _
        // Predicated region
        $region121: #{tpu_custom_call.1} parent=83 // pred_check
          %p1707 = pneg %p455
        $region122: #{tpu_custom_call.1} parent=83 // pred_check_branch
          %1709 = sbr.rel (%p1707) target = $region124
        $region123: #{tpu_custom_call.1} parent=83 // pred_region
          %s1711 = ssub.s32 256, 256
          %1712 = vsyncadd %s1689, %s1711
          %s1713 = smul.addr %s46, 4
          %s1714 = sadd.s32 %s47, %s1713
          %s1715 = smul.addr %s1714, 64
          %s1716 = scalar_lea.hbm %s17, %s1715
          %s1717 = sshll.u32 %s1692, 4
          %s1718 = int_to_ptr.vmem [resolvable:$true] %s1717
          %1723 = dma.vmem_to_hbm [thread:$0]  %s1718, 256, %s1716, %s1689, 64, 64, 4
        $region124: #{tpu_custom_call.1} parent=83 // pred_fallthru
          _
      $region84: #{tpu_custom_call.1} parent=5 // pred_fallthru
        _
      %p1724 = scmp.le.s32.totalorder 2, %s37
      // Predicated region
      $region125: #{tpu_custom_call.1} parent=5 // pred_check
        %p1725 = pneg %p1724
      $region126: #{tpu_custom_call.1} parent=5 // pred_check_branch
        %1727 = sbr.rel (%p1725) target = $region128
      $region127: #{tpu_custom_call.1} parent=5 // pred_region
        %s1728 = ssub.s32 %s37, 2
        // Predicated region
        $region129: #{tpu_custom_call.1} parent=127 // pred_check
          %p1729 = pneg %p433
        $region130: #{tpu_custom_call.1} parent=127 // pred_check_branch
          %1731 = sbr.rel (%p1729) target = $region132
        $region131: #{tpu_custom_call.1} parent=127 // pred_region
          %s1732 = sand.u32 %s418, 1
          %s1733 = scalar_lea.sflag [#allocation7], %s1732
          %s1734 = sand.u32 %s418, 1
          %s1735 = smul.addr %s1734, 8
          %s1736 = scalar_lea.vmem [#allocation18], %s1735
          %1737 = dma.done %s1733, 128
        $region132: #{tpu_custom_call.1} parent=127 // pred_fallthru
          _
        // Predicated region
        $region133: #{tpu_custom_call.1} parent=127 // pred_check
          %p1738 = pneg %p461
        $region134: #{tpu_custom_call.1} parent=127 // pred_check_branch
          %1740 = sbr.rel (%p1738) target = $region136
        $region135: #{tpu_custom_call.1} parent=127 // pred_region
          %s1741 = sand.u32 %s446, 1
          %s1742 = scalar_lea.sflag [#allocation20], %s1741
          %s1743 = sand.u32 %s446, 1
          %s1744 = smul.addr %s1743, 16
          %s1745 = scalar_lea.vmem [#allocation19], %s1744
          %1746 = dma.done %s1742, 256
        $region136: #{tpu_custom_call.1} parent=127 // pred_fallthru
          _
      $region128: #{tpu_custom_call.1} parent=5 // pred_fallthru
        _
    $region6: #{tpu_custom_call.1} parent=1 // loop_footer
      %s41 = sadd.s32 1, %s37
    $region7: #{tpu_custom_call.1} parent=1 // loop_footer_branch
      %36 = sbr.rel target = $region3
    $region8: #{tpu_custom_call.1} parent=1 // loop_exit
      _
    %1747 = vsyncpa [#allocation6], 1
    %s1748 = scalar_lea.sflag [#allocation6], 1
    %1749 = vsyncpa %s1748, 1
    %1750 = vsyncpa [#allocation10], 1
    %1751 = vsyncpa [#allocation13], 1
    %1752 = vsyncpa [#allocation16], 1
    %1753 = vsyncpa [#allocation7], 1
    %s1754 = scalar_lea.sflag [#allocation7], 1
    %1755 = vsyncpa %s1754, 1
    %1756 = vsyncpa [#allocation20], 1
    %s1757 = scalar_lea.sflag [#allocation20], 1
    %1758 = vsyncpa %s1757, 1
    %1759 = vsyncpa [#allocation8], 1
    %s1760 = scalar_lea.sflag [#allocation8], 1
    %1761 = vsyncpa %s1760, 1

// kernel: tpu_custom_call.1
$region0: #{tpu_custom_call.1}
  #allocation0 [shape = 'u32[]', space=smem, size = 0x4, offset = 0x4, fixed_abs, tag = 'smem constant byte address 0x4 - core index']
  #allocation1 [shape = 'u32[144,128]{1,0:T(1,128)}', space=vmem, size = 0x12000, scoped, tag = 'internal scratch']
  #allocation2 [shape = 'bf16[8,32]{1,0:T(8,128)(2,1)}', space=vmem, size = 0x800, scoped, tag = 'scratch operand']
  #allocation3 [shape = 'bf16[8,32]{1,0:T(8,128)(2,1)}', space=vmem, size = 0x800, scoped, tag = 'scratch operand']
  #allocation4 [shape = 'f32[8,32]{1,0:T(8,128)}', space=vmem, size = 0x1000, scoped, tag = 'scratch operand']
  %s0 = inlined_call_operand.vmem [shape: f32[2,8,32], index: 0, kind: input, shape index: {}]
  %s1 = inlined_call_operand.hbm [shape: bf16[2,8,32], index: 1, kind: input, shape index: {}]
  %s2 = inlined_call_operand.vmem [shape: f32[2,1,8], index: 2, kind: input, shape index: {}]
  %s3 = inlined_call_operand.vmem [shape: bf16[32,32], index: 3, kind: input, shape index: {}]
  %s4 = inlined_call_operand.hbm [shape: f32[1,32], index: 4, kind: input, shape index: {}]
  %s5 = inlined_call_operand.vmem [shape: bf16[32,32], index: 5, kind: input, shape index: {}]
  %s6 = inlined_call_operand.hbm [shape: f32[1,32], index: 6, kind: input, shape index: {}]
  %s7 = inlined_call_operand.hbm [shape: bf16[32,32], index: 7, kind: input, shape index: {}]
  %s8 = inlined_call_operand.hbm [shape: f32[1,32], index: 8, kind: input, shape index: {}]
  %s9 = inlined_call_operand.vmem [shape: bf16[32,32], index: 9, kind: input, shape index: {}]
  %s10 = inlined_call_operand.vmem [shape: f32[1,32], index: 10, kind: input, shape index: {}]
  %s11 = inlined_call_operand.hbm [shape: bf16[32,64], index: 11, kind: input, shape index: {}]
  %s12 = inlined_call_operand.vmem [shape: f32[1,64], index: 12, kind: input, shape index: {}]
  %s13 = inlined_call_operand.vmem [shape: bf16[64,32], index: 13, kind: input, shape index: {}]
  %s14 = inlined_call_operand.vmem [shape: f32[1,32], index: 14, kind: input, shape index: {}]
  %s15 = inlined_call_operand.vmem [shape: f32[4], index: 15, kind: input, shape index: {}]
  %s16 = inlined_call_operand.hbm [shape: f32[2,8,32], index: 16, kind: output, shape index: {0}]
  %s17 = inlined_call_operand.hbm [shape: bf16[2,4,8,8], index: 17, kind: output, shape index: {1}]
  %18 = xla_tuple %s16, %s17
  %s19 = sld [smem:[#allocation0]]
  $region137: #{tpu_custom_call.1} parent=0
    _
  %s21 = ssub.s32 1, %s19
  %s22 = scalar_select 0, %s21, %s19
  $region1: #{tpu_custom_call.1} parent=0
    #allocation5 [shape = 'u8[4096]{0}', space=vmem, size = 0x1000, scoped, tag = 'input window, operand 1']
    #allocation6 [shape = 's32[2]{0}', space=sflag, size = 0x8, scoped, tag = 'scoped memory for tpu_custom_call.1']
    #allocation7 [shape = 's32[2]{0}', space=sflag, size = 0x8, scoped, tag = 'scoped memory for tpu_custom_call.1']
    #allocation8 [shape = 's32[2]{0}', space=sflag, size = 0x8, scoped, tag = 'scoped memory for tpu_custom_call.1']
    #allocation9 [shape = 'u8[512]{0}', space=vmem, size = 0x400, scoped, tag = 'input window, operand 4, single buffered']
    #allocation10 [shape = 's32[1]{0}', space=sflag, size = 0x4, scoped, tag = 'scoped memory for tpu_custom_call.1']
    #allocation11 [shape = 'u8[512]{0}', space=vmem, size = 0x400, scoped, tag = 'input window, operand 6, single buffered']
    #allocation12 [shape = 'u8[8192]{0}', space=vmem, size = 0x2000, scoped, tag = 'input window, operand 7, single buffered']
    #allocation13 [shape = 's32[1]{0}', space=sflag, size = 0x4, scoped, tag = 'scoped memory for tpu_custom_call.1']
    #allocation14 [shape = 'u8[512]{0}', space=vmem, size = 0x400, scoped, tag = 'input window, operand 8, single buffered']
    #allocation15 [shape = 'u8[8192]{0}', space=vmem, size = 0x2000, scoped, tag = 'input window, operand 11, single buffered']
    #allocation16 [shape = 's32[1]{0}', space=sflag, size = 0x4, scoped, tag = 'scoped memory for tpu_custom_call.1']
    #allocation17 [shape = 'u8[512]{0}', space=smem, size = 0x200, scoped, tag = 'input window, operand 15, single buffered']
    #allocation18 [shape = 'u8[8192]{0}', space=vmem, size = 0x2000, scoped, tag = 'output window, operand 0']
    #allocation19 [shape = 'u8[16384]{0}', space=vmem, size = 0x4000, scoped, tag = 'output window, operand 1']
    #allocation20 [shape = 's32[2]{0}', space=sflag, size = 0x8, scoped, tag = 'scoped memory for tpu_custom_call.1']
    %23 = vsyncpa [#allocation6], 0
    %s24 = scalar_lea.sflag [#allocation6], 1
    %25 = vsyncpa %s24, 0
    %26 = vsyncpa [#allocation10], 0
    %27 = vsyncpa [#allocation13], 0
    %28 = vsyncpa [#allocation16], 0
    %29 = vsyncpa [#allocation8], 0
    %30 = vsyncpa [#allocation7], 0
    %s31 = scalar_lea.sflag [#allocation7], 1
    %32 = vsyncpa %s31, 0
    %33 = vsyncpa [#allocation20], 0
    %s34 = scalar_lea.sflag [#allocation20], 1
    %35 = vsyncpa %s34, 0
    loop: start=0, step=1, limit=4
    $region2: #{tpu_custom_call.1} parent=1 // loop_pre_header
      _
    $region3: #{tpu_custom_call.1} parent=1 // loop_header
      %s37 = sphi 0, %s41
      %p38 = scmp.ge.s32.totalorder %s37, 4
      %s44 = sphi 0, %s56
      %s45 = sphi 0, %s52
      %s46 = sphi 0, %s44
      %s47 = sphi 0, %s45
      %s48 = sphi 0, %s46
      %s49 = sphi 0, %s47
      %s61 = sphi 0, %s63
      %s64 = sphi 0, %s61
      %s65 = sphi 0, %s64
      %s81 = sphi 0, %s65
      %s87 = sphi 0, %s89
      %s90 = sphi 0, %s87
      %s91 = sphi 0, %s90
      %s107 = sphi 0, %s91
      %s113 = sphi 0, %s115
      %s116 = sphi 0, %s113
      %s117 = sphi 0, %s116
      %s133 = sphi 0, %s117
      %s137 = sphi 0, %s137
      %s139 = sphi 0, %s137
      %s140 = sphi 0, %s139
      %s154 = sphi 0, %s140
      %s158 = sphi 0, %s158
      %s160 = sphi 0, %s158
      %s161 = sphi 0, %s160
      %s175 = sphi 0, %s161
      %s179 = sphi 0, %s179
      %s181 = sphi 0, %s179
      %s182 = sphi 0, %s181
      %s196 = sphi 0, %s182
      %s200 = sphi 0, %s200
      %s202 = sphi 0, %s200
      %s203 = sphi 0, %s202
      %s217 = sphi 0, %s203
      %s221 = sphi 0, %s221
      %s223 = sphi 0, %s221
      %s224 = sphi 0, %s223
      %s238 = sphi 0, %s224
      %s242 = sphi 0, %s242
      %s244 = sphi 0, %s242
      %s245 = sphi 0, %s244
      %s259 = sphi 0, %s245
      %s263 = sphi 0, %s263
      %s265 = sphi 0, %s263
      %s266 = sphi 0, %s265
      %s280 = sphi 0, %s266
      %s284 = sphi 0, %s284
      %s286 = sphi 0, %s284
      %s287 = sphi 0, %s286
      %s301 = sphi 0, %s287
      %s305 = sphi 0, %s305
      %s307 = sphi 0, %s305
      %s308 = sphi 0, %s307
      %s322 = sphi 0, %s308
      %s326 = sphi 0, %s326
      %s328 = sphi 0, %s326
      %s329 = sphi 0, %s328
      %s343 = sphi 0, %s329
      %s347 = sphi 0, %s347
      %s349 = sphi 0, %s347
      %s350 = sphi 0, %s349
      %s364 = sphi 0, %s350
      %s368 = sphi 0, %s368
      %s370 = sphi 0, %s368
      %s371 = sphi 0, %s370
      %s385 = sphi 0, %s371
      %s389 = sphi 0, %s389
      %s391 = sphi 0, %s389
      %s392 = sphi 0, %s391
      %s406 = sphi 0, %s392
      %s414 = sphi 0, %s416
      %s417 = sphi 0, %s414
      %s418 = sphi 0, %s417
      %s434 = sphi 0, %s418
      %s442 = sphi 0, %s444
      %s445 = sphi 0, %s442
      %s446 = sphi 0, %s445
      %s462 = sphi 0, %s446
    $region4: #{tpu_custom_call.1} parent=1 // loop_header_branch
      %40 = sbr.rel (%p38) target = $region8
    $region5: #{tpu_custom_call.1} parent=1 // loop_body
      %s42 = ssub.s32 %s37, 1
      %s43 = ssub.s32 %s37, 2
      %s50 = sadd.s32 1, %s45
      %p51 = scmp.ge.s32.totalorder %s50, 1
      %s52 = scalar_select %p51, 0, %s50
      %s53 = sadd.s32 1, %s44
      %s54 = scalar_select %p51, %s53, %s44
      %p55 = scmp.ge.s32.totalorder %s54, 2
      %s56 = scalar_select %p55, 0, %s54
      %s57 = ssub.s32 %s44, %s56
      %s58 = ssub.s32 %s45, %s52
      %s59 = sor.u32 %s57, %s58
      %p60 = scmp.eq.s32.totalorder %s59, 0
      %s62 = sadd.s32 %s61, 1
      %s63 = scalar_select %p60, %s61, %s62
      %p66 = pneg %p60
      %p67 = scmp.eq.s32.totalorder %s37, 1
      %p68 = por %p66, %p67
      %p69 = scmp.ne.s32.totalorder %s61, %s64
      %p70 = scmp.eq.s32.totalorder %s37, 0
      %p71 = por %p69, %p70
      %p72 = scmp.ne.s32.totalorder %s61, %s64
      %p73 = scmp.eq.s32.totalorder %s42, 1
      %p74 = por %p72, %p73
      %p75 = scmp.ne.s32.totalorder %s64, %s65
      %p76 = scmp.eq.s32.totalorder %s42, 0
      %p77 = por %p75, %p76
      %p78 = scmp.ne.s32.totalorder %s64, %s65
      %p79 = scmp.eq.s32.totalorder %s43, 1
      %p80 = por %p78, %p79
      %p82 = scmp.ne.s32.totalorder %s65, %s81
      %p83 = scmp.eq.s32.totalorder %s43, 0
      %p84 = por %p82, %p83
      %s85 = ssub.s32 %s44, %s56
      %p86 = scmp.eq.s32.totalorder %s85, 0
      %s88 = sadd.s32 %s87, 1
      %s89 = scalar_select %p86, %s87, %s88
      %p92 = pneg %p86
      %p93 = scmp.eq.s32.totalorder %s37, 1
      %p94 = por %p92, %p93
      %p95 = scmp.ne.s32.totalorder %s87, %s90
      %p96 = scmp.eq.s32.totalorder %s37, 0
      %p97 = por %p95, %p96
      %p98 = scmp.ne.s32.totalorder %s87, %s90
      %p99 = scmp.eq.s32.totalorder %s42, 1
      %p100 = por %p98, %p99
      %p101 = scmp.ne.s32.totalorder %s90, %s91
      %p102 = scmp.eq.s32.totalorder %s42, 0
      %p103 = por %p101, %p102
      %p104 = scmp.ne.s32.totalorder %s90, %s91
      %p105 = scmp.eq.s32.totalorder %s43, 1
      %p106 = por %p104, %p105
      %p108 = scmp.ne.s32.totalorder %s91, %s107
      %p109 = scmp.eq.s32.totalorder %s43, 0
      %p110 = por %p108, %p109
      %s111 = ssub.s32 %s44, %s56
      %p112 = scmp.eq.s32.totalorder %s111, 0
      %s114 = sadd.s32 %s113, 1
      %s115 = scalar_select %p112, %s113, %s114
      %p118 = pneg %p112
      %p119 = scmp.eq.s32.totalorder %s37, 1
      %p120 = por %p118, %p119
      %p121 = scmp.ne.s32.totalorder %s113, %s116
      %p122 = scmp.eq.s32.totalorder %s37, 0
      %p123 = por %p121, %p122
      %p124 = scmp.ne.s32.totalorder %s113, %s116
      %p125 = scmp.eq.s32.totalorder %s42, 1
      %p126 = por %p124, %p125
      %p127 = scmp.ne.s32.totalorder %s116, %s117
      %p128 = scmp.eq.s32.totalorder %s42, 0
      %p129 = por %p127, %p128
      %p130 = scmp.ne.s32.totalorder %s116, %s117
      %p131 = scmp.eq.s32.totalorder %s43, 1
      %p132 = por %p130, %p131
      %p134 = scmp.ne.s32.totalorder %s117, %s133
      %p135 = scmp.eq.s32.totalorder %s43, 0
      %p136 = por %p134, %p135
      %s138 = sadd.s32 %s137, 1
      %p141 = scmp.eq.s32.totalorder %s37, 1
      %p142 = scmp.ne.s32.totalorder %s137, %s139
      %p143 = scmp.eq.s32.totalorder %s37, 0
      %p144 = por %p142, %p143
      %p145 = scmp.ne.s32.totalorder %s137, %s139
      %p146 = scmp.eq.s32.totalorder %s42, 1
      %p147 = por %p145, %p146
      %p148 = scmp.ne.s32.totalorder %s139, %s140
      %p149 = scmp.eq.s32.totalorder %s42, 0
      %p150 = por %p148, %p149
      %p151 = scmp.ne.s32.totalorder %s139, %s140
      %p152 = scmp.eq.s32.totalorder %s43, 1
      %p153 = por %p151, %p152
      %p155 = scmp.ne.s32.totalorder %s140, %s154
      %p156 = scmp.eq.s32.totalorder %s43, 0
      %p157 = por %p155, %p156
      %s159 = sadd.s32 %s158, 1
      %p162 = scmp.eq.s32.totalorder %s37, 1
      %p163 = scmp.ne.s32.totalorder %s158, %s160
      %p164 = scmp.eq.s32.totalorder %s37, 0
      %p165 = por %p163, %p164
      %p166 = scmp.ne.s32.totalorder %s158, %s160
      %p167 = scmp.eq.s32.totalorder %s42, 1
      %p168 = por %p166, %p167
      %p169 = scmp.ne.s32.totalorder %s160, %s161
      %p170 = scmp.eq.s32.totalorder %s42, 0
      %p171 = por %p169, %p170
      %p172 = scmp.ne.s32.totalorder %s160, %s161
      %p173 = scmp.eq.s32.totalorder %s43, 1
      %p174 = por %p172, %p173
      %p176 = scmp.ne.s32.totalorder %s161, %s175
      %p177 = scmp.eq.s32.totalorder %s43, 0
      %p178 = por %p176, %p177
      %s180 = sadd.s32 %s179, 1
      %p183 = scmp.eq.s32.totalorder %s37, 1
      %p184 = scmp.ne.s32.totalorder %s179, %s181
      %p185 = scmp.eq.s32.totalorder %s37, 0
      %p186 = por %p184, %p185
      %p187 = scmp.ne.s32.totalorder %s179, %s181
      %p188 = scmp.eq.s32.totalorder %s42, 1
      %p189 = por %p187, %p188
      %p190 = scmp.ne.s32.totalorder %s181, %s182
      %p191 = scmp.eq.s32.totalorder %s42, 0
      %p192 = por %p190, %p191
      %p193 = scmp.ne.s32.totalorder %s181, %s182
      %p194 = scmp.eq.s32.totalorder %s43, 1
      %p195 = por %p193, %p194
      %p197 = scmp.ne.s32.totalorder %s182, %s196
      %p198 = scmp.eq.s32.totalorder %s43, 0
      %p199 = por %p197, %p198
      %s201 = sadd.s32 %s200, 1
      %p204 = scmp.eq.s32.totalorder %s37, 1
      %p205 = scmp.ne.s32.totalorder %s200, %s202
      %p206 = scmp.eq.s32.totalorder %s37, 0
      %p207 = por %p205, %p206
      %p208 = scmp.ne.s32.totalorder %s200, %s202
      %p209 = scmp.eq.s32.totalorder %s42, 1
      %p210 = por %p208, %p209
      %p211 = scmp.ne.s32.totalorder %s202, %s203
      %p212 = scmp.eq.s32.totalorder %s42, 0
      %p213 = por %p211, %p212
      %p214 = scmp.ne.s32.totalorder %s202, %s203
      %p215 = scmp.eq.s32.totalorder %s43, 1
      %p216 = por %p214, %p215
      %p218 = scmp.ne.s32.totalorder %s203, %s217
      %p219 = scmp.eq.s32.totalorder %s43, 0
      %p220 = por %p218, %p219
      %s222 = sadd.s32 %s221, 1
      %p225 = scmp.eq.s32.totalorder %s37, 1
      %p226 = scmp.ne.s32.totalorder %s221, %s223
      %p227 = scmp.eq.s32.totalorder %s37, 0
      %p228 = por %p226, %p227
      %p229 = scmp.ne.s32.totalorder %s221, %s223
      %p230 = scmp.eq.s32.totalorder %s42, 1
      %p231 = por %p229, %p230
      %p232 = scmp.ne.s32.totalorder %s223, %s224
      %p233 = scmp.eq.s32.totalorder %s42, 0
      %p234 = por %p232, %p233
      %p235 = scmp.ne.s32.totalorder %s223, %s224
      %p236 = scmp.eq.s32.totalorder %s43, 1
      %p237 = por %p235, %p236
      %p239 = scmp.ne.s32.totalorder %s224, %s238
      %p240 = scmp.eq.s32.totalorder %s43, 0
      %p241 = por %p239, %p240
      %s243 = sadd.s32 %s242, 1
      %p246 = scmp.eq.s32.totalorder %s37, 1
      %p247 = scmp.ne.s32.totalorder %s242, %s244
      %p248 = scmp.eq.s32.totalorder %s37, 0
      %p249 = por %p247, %p248
      %p250 = scmp.ne.s32.totalorder %s242, %s244
      %p251 = scmp.eq.s32.totalorder %s42, 1
      %p252 = por %p250, %p251
      %p253 = scmp.ne.s32.totalorder %s244, %s245
      %p254 = scmp.eq.s32.totalorder %s42, 0
      %p255 = por %p253, %p254
      %p256 = scmp.ne.s32.totalorder %s244, %s245
      %p257 = scmp.eq.s32.totalorder %s43, 1
      %p258 = por %p256, %p257
      %p260 = scmp.ne.s32.totalorder %s245, %s259
      %p261 = scmp.eq.s32.totalorder %s43, 0
      %p262 = por %p260, %p261
      %s264 = sadd.s32 %s263, 1
      %p267 = scmp.eq.s32.totalorder %s37, 1
      %p268 = scmp.ne.s32.totalorder %s263, %s265
      %p269 = scmp.eq.s32.totalorder %s37, 0
      %p270 = por %p268, %p269
      %p271 = scmp.ne.s32.totalorder %s263, %s265
      %p272 = scmp.eq.s32.totalorder %s42, 1
      %p273 = por %p271, %p272
      %p274 = scmp.ne.s32.totalorder %s265, %s266
      %p275 = scmp.eq.s32.totalorder %s42, 0
      %p276 = por %p274, %p275
      %p277 = scmp.ne.s32.totalorder %s265, %s266
      %p278 = scmp.eq.s32.totalorder %s43, 1
      %p279 = por %p277, %p278
      %p281 = scmp.ne.s32.totalorder %s266, %s280
      %p282 = scmp.eq.s32.totalorder %s43, 0
      %p283 = por %p281, %p282
      %s285 = sadd.s32 %s284, 1
      %p288 = scmp.eq.s32.totalorder %s37, 1
      %p289 = scmp.ne.s32.totalorder %s284, %s286
      %p290 = scmp.eq.s32.totalorder %s37, 0
      %p291 = por %p289, %p290
      %p292 = scmp.ne.s32.totalorder %s284, %s286
      %p293 = scmp.eq.s32.totalorder %s42, 1
      %p294 = por %p292, %p293
      %p295 = scmp.ne.s32.totalorder %s286, %s287
      %p296 = scmp.eq.s32.totalorder %s42, 0
      %p297 = por %p295, %p296
      %p298 = scmp.ne.s32.totalorder %s286, %s287
      %p299 = scmp.eq.s32.totalorder %s43, 1
      %p300 = por %p298, %p299
      %p302 = scmp.ne.s32.totalorder %s287, %s301
      %p303 = scmp.eq.s32.totalorder %s43, 0
      %p304 = por %p302, %p303
      %s306 = sadd.s32 %s305, 1
      %p309 = scmp.eq.s32.totalorder %s37, 1
      %p310 = scmp.ne.s32.totalorder %s305, %s307
      %p311 = scmp.eq.s32.totalorder %s37, 0
      %p312 = por %p310, %p311
      %p313 = scmp.ne.s32.totalorder %s305, %s307
      %p314 = scmp.eq.s32.totalorder %s42, 1
      %p315 = por %p313, %p314
      %p316 = scmp.ne.s32.totalorder %s307, %s308
      %p317 = scmp.eq.s32.totalorder %s42, 0
      %p318 = por %p316, %p317
      %p319 = scmp.ne.s32.totalorder %s307, %s308
      %p320 = scmp.eq.s32.totalorder %s43, 1
      %p321 = por %p319, %p320
      %p323 = scmp.ne.s32.totalorder %s308, %s322
      %p324 = scmp.eq.s32.totalorder %s43, 0
      %p325 = por %p323, %p324
      %s327 = sadd.s32 %s326, 1
      %p330 = scmp.eq.s32.totalorder %s37, 1
      %p331 = scmp.ne.s32.totalorder %s326, %s328
      %p332 = scmp.eq.s32.totalorder %s37, 0
      %p333 = por %p331, %p332
      %p334 = scmp.ne.s32.totalorder %s326, %s328
      %p335 = scmp.eq.s32.totalorder %s42, 1
      %p336 = por %p334, %p335
      %p337 = scmp.ne.s32.totalorder %s328, %s329
      %p338 = scmp.eq.s32.totalorder %s42, 0
      %p339 = por %p337, %p338
      %p340 = scmp.ne.s32.totalorder %s328, %s329
      %p341 = scmp.eq.s32.totalorder %s43, 1
      %p342 = por %p340, %p341
      %p344 = scmp.ne.s32.totalorder %s329, %s343
      %p345 = scmp.eq.s32.totalorder %s43, 0
      %p346 = por %p344, %p345
      %s348 = sadd.s32 %s347, 1
      %p351 = scmp.eq.s32.totalorder %s37, 1
      %p352 = scmp.ne.s32.totalorder %s347, %s349
      %p353 = scmp.eq.s32.totalorder %s37, 0
      %p354 = por %p352, %p353
      %p355 = scmp.ne.s32.totalorder %s347, %s349
      %p356 = scmp.eq.s32.totalorder %s42, 1
      %p357 = por %p355, %p356
      %p358 = scmp.ne.s32.totalorder %s349, %s350
      %p359 = scmp.eq.s32.totalorder %s42, 0
      %p360 = por %p358, %p359
      %p361 = scmp.ne.s32.totalorder %s349, %s350
      %p362 = scmp.eq.s32.totalorder %s43, 1
      %p363 = por %p361, %p362
      %p365 = scmp.ne.s32.totalorder %s350, %s364
      %p366 = scmp.eq.s32.totalorder %s43, 0
      %p367 = por %p365, %p366
      %s369 = sadd.s32 %s368, 1
      %p372 = scmp.eq.s32.totalorder %s37, 1
      %p373 = scmp.ne.s32.totalorder %s368, %s370
      %p374 = scmp.eq.s32.totalorder %s37, 0
      %p375 = por %p373, %p374
      %p376 = scmp.ne.s32.totalorder %s368, %s370
      %p377 = scmp.eq.s32.totalorder %s42, 1
      %p378 = por %p376, %p377
      %p379 = scmp.ne.s32.totalorder %s370, %s371
      %p380 = scmp.eq.s32.totalorder %s42, 0
      %p381 = por %p379, %p380
      %p382 = scmp.ne.s32.totalorder %s370, %s371
      %p383 = scmp.eq.s32.totalorder %s43, 1
      %p384 = por %p382, %p383
      %p386 = scmp.ne.s32.totalorder %s371, %s385
      %p387 = scmp.eq.s32.totalorder %s43, 0
      %p388 = por %p386, %p387
      %s390 = sadd.s32 %s389, 1
      %p393 = scmp.eq.s32.totalorder %s37, 1
      %p394 = scmp.ne.s32.totalorder %s389, %s391
      %p395 = scmp.eq.s32.totalorder %s37, 0
      %p396 = por %p394, %p395
      %p397 = scmp.ne.s32.totalorder %s389, %s391
      %p398 = scmp.eq.s32.totalorder %s42, 1
      %p399 = por %p397, %p398
      %p400 = scmp.ne.s32.totalorder %s391, %s392
      %p401 = scmp.eq.s32.totalorder %s42, 0
      %p402 = por %p400, %p401
      %p403 = scmp.ne.s32.totalorder %s391, %s392
      %p404 = scmp.eq.s32.totalorder %s43, 1
      %p405 = por %p403, %p404
      %p407 = scmp.ne.s32.totalorder %s392, %s406
      %p408 = scmp.eq.s32.totalorder %s43, 0
      %p409 = por %p407, %p408
      %s410 = ssub.s32 %s44, %s56
      %s411 = ssub.s32 %s45, %s52
      %s412 = sor.u32 %s410, %s411
      %p413 = scmp.eq.s32.totalorder %s412, 0
      %s415 = sadd.s32 %s414, 1
      %s416 = scalar_select %p413, %s414, %s415
      %p419 = pneg %p413
      %p420 = scmp.eq.s32.totalorder %s37, 1
      %p421 = por %p419, %p420
      %p422 = scmp.ne.s32.totalorder %s414, %s417
      %p423 = scmp.eq.s32.totalorder %s37, 0
      %p424 = por %p422, %p423
      %p425 = scmp.ne.s32.totalorder %s414, %s417
      %p426 = scmp.eq.s32.totalorder %s42, 1
      %p427 = por %p425, %p426
      %p428 = scmp.ne.s32.totalorder %s417, %s418
      %p429 = scmp.eq.s32.totalorder %s42, 0
      %p430 = por %p428, %p429
      %p431 = scmp.ne.s32.totalorder %s417, %s418
      %p432 = scmp.eq.s32.totalorder %s43, 1
      %p433 = por %p431, %p432
      %p435 = scmp.ne.s32.totalorder %s418, %s434
      %p436 = scmp.eq.s32.totalorder %s43, 0
      %p437 = por %p435, %p436
      %s438 = ssub.s32 %s44, %s56
      %s439 = ssub.s32 %s45, %s52
      %s440 = sor.u32 %s438, %s439
      %p441 = scmp.eq.s32.totalorder %s440, 0
      %s443 = sadd.s32 %s442, 1
      %s444 = scalar_select %p441, %s442, %s443
      %p447 = pneg %p441
      %p448 = scmp.eq.s32.totalorder %s37, 1
      %p449 = por %p447, %p448
      %p450 = scmp.ne.s32.totalorder %s442, %s445
      %p451 = scmp.eq.s32.totalorder %s37, 0
      %p452 = por %p450, %p451
      %p453 = scmp.ne.s32.totalorder %s442, %s445
      %p454 = scmp.eq.s32.totalorder %s42, 1
      %p455 = por %p453, %p454
      %p456 = scmp.ne.s32.totalorder %s445, %s446
      %p457 = scmp.eq.s32.totalorder %s42, 0
      %p458 = por %p456, %p457
      %p459 = scmp.ne.s32.totalorder %s445, %s446
      %p460 = scmp.eq.s32.totalorder %s43, 1
      %p461 = por %p459, %p460
      %p463 = scmp.ne.s32.totalorder %s446, %s462
      %p464 = scmp.eq.s32.totalorder %s43, 0
      %p465 = por %p463, %p464
      %p466 = scmp.le.s32.totalorder 1, %s37
      %p467 = scmp.lt.s32.totalorder %s37, 3
      %p468 = pnand %p466, %p467
      %p469 = pneg %p468
      // Predicated region
      $region9: #{tpu_custom_call.1} parent=5 // pred_check
        _
      $region10: #{tpu_custom_call.1} parent=5 // pred_check_branch
        %471 = sbr.rel (%p468) target = $region12
      $region11: #{tpu_custom_call.1} parent=5 // pred_region
        %s472 = ssub.s32 %s37, 1
        // Predicated region
        $region13: #{tpu_custom_call.1} parent=11 // pred_check
          %p473 = pneg %p150
        $region14: #{tpu_custom_call.1} parent=11 // pred_check_branch
          %475 = sbr.rel (%p473) target = $region16
        $region15: #{tpu_custom_call.1} parent=11 // pred_region
          _
        $region16: #{tpu_custom_call.1} parent=11 // pred_fallthru
          _
        // Predicated region
        $region17: #{tpu_custom_call.1} parent=11 // pred_check
          %p476 = pneg %p171
        $region18: #{tpu_custom_call.1} parent=11 // pred_check_branch
          %478 = sbr.rel (%p476) target = $region20
        $region19: #{tpu_custom_call.1} parent=11 // pred_region
          %s480 = ssub.s32 16, 16
          %481 = vsyncadd [#allocation10], %s480
          %s483 = sshll.u32 [#allocation9], 4
          %s484 = int_to_ptr.vmem [resolvable:$true] %s483
          %486 = dma.hbm_to_vmem [thread:$0]  %s4, 16, %s484, [#allocation10]
        $region20: #{tpu_custom_call.1} parent=11 // pred_fallthru
          _
        // Predicated region
        $region21: #{tpu_custom_call.1} parent=11 // pred_check
          %p487 = pneg %p192
        $region22: #{tpu_custom_call.1} parent=11 // pred_check_branch
          %489 = sbr.rel (%p487) target = $region24
        $region23: #{tpu_custom_call.1} parent=11 // pred_region
          _
        $region24: #{tpu_custom_call.1} parent=11 // pred_fallthru
          _
        // Predicated region
        $region25: #{tpu_custom_call.1} parent=11 // pred_check
          %p490 = pneg %p213
        $region26: #{tpu_custom_call.1} parent=11 // pred_check_branch
          %492 = sbr.rel (%p490) target = $region28
        $region27: #{tpu_custom_call.1} parent=11 // pred_region
          %s494 = ssub.s32 16, 16
          %495 = vsyncadd [#allocation10], %s494
          %s497 = sshll.u32 [#allocation11], 4
          %s498 = int_to_ptr.vmem [resolvable:$true] %s497
          %500 = dma.hbm_to_vmem [thread:$0]  %s6, 16, %s498, [#allocation10]
        $region28: #{tpu_custom_call.1} parent=11 // pred_fallthru
          _
        // Predicated region
        $region29: #{tpu_custom_call.1} parent=11 // pred_check
          %p501 = pneg %p234
        $region30: #{tpu_custom_call.1} parent=11 // pred_check_branch
          %503 = sbr.rel (%p501) target = $region32
        $region31: #{tpu_custom_call.1} parent=11 // pred_region
          %s505 = ssub.s32 256, 256
          %506 = vsyncadd [#allocation13], %s505
          %s507 = sshll.u32 [#allocation12], 4
          %s508 = int_to_ptr.vmem [resolvable:$true] %s507
          %513 = dma.hbm_to_vmem [thread:$0]  %s7, 256, %s508, [#allocation13], 64, 64, 4
        $region32: #{tpu_custom_call.1} parent=11 // pred_fallthru
          _
        // Predicated region
        $region33: #{tpu_custom_call.1} parent=11 // pred_check
          %p514 = pneg %p255
        $region34: #{tpu_custom_call.1} parent=11 // pred_check_branch
          %516 = sbr.rel (%p514) target = $region36
        $region35: #{tpu_custom_call.1} parent=11 // pred_region
          %s518 = ssub.s32 16, 16
          %519 = vsyncadd [#allocation13], %s518
          %s521 = sshll.u32 [#allocation14], 4
          %s522 = int_to_ptr.vmem [resolvable:$true] %s521
          %524 = dma.hbm_to_vmem [thread:$0]  %s8, 16, %s522, [#allocation13]
        $region36: #{tpu_custom_call.1} parent=11 // pred_fallthru
          _
        // Predicated region
        $region37: #{tpu_custom_call.1} parent=11 // pred_check
          %p525 = pneg %p276
        $region38: #{tpu_custom_call.1} parent=11 // pred_check_branch
          %527 = sbr.rel (%p525) target = $region40
        $region39: #{tpu_custom_call.1} parent=11 // pred_region
          _
        $region40: #{tpu_custom_call.1} parent=11 // pred_fallthru
          _
        // Predicated region
        $region41: #{tpu_custom_call.1} parent=11 // pred_check
          %p528 = pneg %p297
        $region42: #{tpu_custom_call.1} parent=11 // pred_check_branch
          %530 = sbr.rel (%p528) target = $region44
        $region43: #{tpu_custom_call.1} parent=11 // pred_region
          _
        $region44: #{tpu_custom_call.1} parent=11 // pred_fallthru
          _
        // Predicated region
        $region45: #{tpu_custom_call.1} parent=11 // pred_check
          %p531 = pneg %p318
        $region46: #{tpu_custom_call.1} parent=11 // pred_check_branch
          %533 = sbr.rel (%p531) target = $region48
        $region47: #{tpu_custom_call.1} parent=11 // pred_region
          %s535 = ssub.s32 256, 256
          %536 = vsyncadd [#allocation16], %s535
          %s537 = sshll.u32 [#allocation15], 4
          %s538 = int_to_ptr.vmem [resolvable:$true] %s537
          %543 = dma.hbm_to_vmem [thread:$0]  %s11, 256, %s538, [#allocation16], 64, 64, 4
        $region48: #{tpu_custom_call.1} parent=11 // pred_fallthru
          _
        // Predicated region
        $region49: #{tpu_custom_call.1} parent=11 // pred_check
          %p544 = pneg %p339
        $region50: #{tpu_custom_call.1} parent=11 // pred_check_branch
          %546 = sbr.rel (%p544) target = $region52
        $region51: #{tpu_custom_call.1} parent=11 // pred_region
          _
        $region52: #{tpu_custom_call.1} parent=11 // pred_fallthru
          _
        // Predicated region
        $region53: #{tpu_custom_call.1} parent=11 // pred_check
          %p547 = pneg %p360
        $region54: #{tpu_custom_call.1} parent=11 // pred_check_branch
          %549 = sbr.rel (%p547) target = $region56
        $region55: #{tpu_custom_call.1} parent=11 // pred_region
          _
        $region56: #{tpu_custom_call.1} parent=11 // pred_fallthru
          _
        // Predicated region
        $region57: #{tpu_custom_call.1} parent=11 // pred_check
          %p550 = pneg %p381
        $region58: #{tpu_custom_call.1} parent=11 // pred_check_branch
          %552 = sbr.rel (%p550) target = $region60
        $region59: #{tpu_custom_call.1} parent=11 // pred_region
          _
        $region60: #{tpu_custom_call.1} parent=11 // pred_fallthru
          _
        // Predicated region
        $region61: #{tpu_custom_call.1} parent=11 // pred_check
          %p553 = pneg %p402
        $region62: #{tpu_custom_call.1} parent=11 // pred_check_branch
          %555 = sbr.rel (%p553) target = $region64
        $region63: #{tpu_custom_call.1} parent=11 // pred_region
          %s557 = ssub.s32 16, 16
          %558 = vsyncadd [#allocation8], %s557
          %s560 = sshll.u32 %s15, 4
          %s561 = int_to_ptr.vmem [resolvable:$true] %s560
          %563 = dma.vmem_to_smem %s561, 16, [#allocation17], [#allocation8]
        $region64: #{tpu_custom_call.1} parent=11 // pred_fallthru
          _
      $region12: #{tpu_custom_call.1} parent=5 // pred_fallthru
        _
      %p564 = scmp.lt.s32.totalorder %s37, 2
      // Predicated region
      $region65: #{tpu_custom_call.1} parent=5 // pred_check
        %p565 = pneg %p564
      $region66: #{tpu_custom_call.1} parent=5 // pred_check_branch
        %567 = sbr.rel (%p565) target = $region68
      $region67: #{tpu_custom_call.1} parent=5 // pred_region
        // Predicated region
        $region69: #{tpu_custom_call.1} parent=67 // pred_check
          %p568 = pneg %p71
        $region70: #{tpu_custom_call.1} parent=67 // pred_check_branch
          %570 = sbr.rel (%p568) target = $region72
        $region71: #{tpu_custom_call.1} parent=67 // pred_region
          %p571 = scmp.lt.s32.totalorder %s44, 1
          %s572 = scalar_select %p571, %s44, 1
          %p573 = scmp.lt.s32.totalorder %s45, 0
          %s574 = scalar_select %p573, %s45, 0
          %s575 = sadd.s32 %s574, %s572
          %s576 = smul.addr %s575, 8
          %s577 = scalar_lea.vmem %s0, %s576
        $region72: #{tpu_custom_call.1} parent=67 // pred_fallthru
          _
        // Predicated region
        $region73: #{tpu_custom_call.1} parent=67 // pred_check
          %p578 = pneg %p97
        $region74: #{tpu_custom_call.1} parent=67 // pred_check_branch
          %580 = sbr.rel (%p578) target = $region76
        $region75: #{tpu_custom_call.1} parent=67 // pred_region
          %s581 = sand.u32 %s87, 1
          %s582 = scalar_lea.sflag [#allocation6], %s581
          %s583 = sand.u32 %s87, 1
          %s584 = smul.addr %s583, 4
          %s585 = scalar_lea.vmem [#allocation5], %s584
          %s587 = ssub.s32 64, 64
          %588 = vsyncadd %s582, %s587
          %s589 = smul.addr %s44, 64
          %s590 = scalar_lea.hbm %s1, %s589
          %s592 = sshll.u32 %s585, 4
          %s593 = int_to_ptr.vmem [resolvable:$true] %s592
          %595 = dma.hbm_to_vmem [thread:$0]  %s590, 64, %s593, %s582
        $region76: #{tpu_custom_call.1} parent=67 // pred_fallthru
          _
        // Predicated region
        $region77: #{tpu_custom_call.1} parent=67 // pred_check
          %p596 = pneg %p123
        $region78: #{tpu_custom_call.1} parent=67 // pred_check_branch
          %598 = sbr.rel (%p596) target = $region80
        $region79: #{tpu_custom_call.1} parent=67 // pred_region
          %p599 = scmp.lt.s32.totalorder %s44, 1
          %s600 = scalar_select %p599, %s44, 1
          %s601 = scalar_lea.vmem %s2, %s600
        $region80: #{tpu_custom_call.1} parent=67 // pred_fallthru
          _
      $region68: #{tpu_custom_call.1} parent=5 // pred_fallthru
        _
      %p602 = scmp.le.s32.totalorder 1, %s37
      %p603 = scmp.lt.s32.totalorder %s37, 3
      %p604 = pnand %p602, %p603
      %p605 = pneg %p604
      // Predicated region
      $region81: #{tpu_custom_call.1} parent=5 // pred_check
        _
      $region82: #{tpu_custom_call.1} parent=5 // pred_check_branch
        %607 = sbr.rel (%p604) target = $region84
      $region83: #{tpu_custom_call.1} parent=5 // pred_region
        %s608 = ssub.s32 %s37, 1
        %s609 = sand.u32 %s90, 1
        %s610 = scalar_lea.sflag [#allocation6], %s609
        %s611 = sand.u32 %s90, 1
        %s612 = smul.addr %s611, 4
        %s613 = scalar_lea.vmem [#allocation5], %s612
        // Predicated region
        $region85: #{tpu_custom_call.1} parent=83 // pred_check
          %p614 = pneg %p103
        $region86: #{tpu_custom_call.1} parent=83 // pred_check_branch
          %616 = sbr.rel (%p614) target = $region88
        $region87: #{tpu_custom_call.1} parent=83 // pred_region
          %617 = dma.done %s610, 64
        $region88: #{tpu_custom_call.1} parent=83 // pred_fallthru
          _
        // Predicated region
        $region89: #{tpu_custom_call.1} parent=83 // pred_check
          %p618 = pneg %p171
        $region90: #{tpu_custom_call.1} parent=83 // pred_check_branch
          %620 = sbr.rel (%p618) target = $region92
        $region91: #{tpu_custom_call.1} parent=83 // pred_region
          %621 = dma.done [#allocation10], 16
        $region92: #{tpu_custom_call.1} parent=83 // pred_fallthru
          _
        // Predicated region
        $region93: #{tpu_custom_call.1} parent=83 // pred_check
          %p622 = pneg %p213
        $region94: #{tpu_custom_call.1} parent=83 // pred_check_branch
          %624 = sbr.rel (%p622) target = $region96
        $region95: #{tpu_custom_call.1} parent=83 // pred_region
          %625 = dma.done [#allocation10], 16
        $region96: #{tpu_custom_call.1} parent=83 // pred_fallthru
          _
        // Predicated region
        $region97: #{tpu_custom_call.1} parent=83 // pred_check
          %p626 = pneg %p234
        $region98: #{tpu_custom_call.1} parent=83 // pred_check_branch
          %628 = sbr.rel (%p626) target = $region100
        $region99: #{tpu_custom_call.1} parent=83 // pred_region
          %629 = dma.done [#allocation13], 256
        $region100: #{tpu_custom_call.1} parent=83 // pred_fallthru
          _
        // Predicated region
        $region101: #{tpu_custom_call.1} parent=83 // pred_check
          %p630 = pneg %p255
        $region102: #{tpu_custom_call.1} parent=83 // pred_check_branch
          %632 = sbr.rel (%p630) target = $region104
        $region103: #{tpu_custom_call.1} parent=83 // pred_region
          %633 = dma.done [#allocation13], 16
        $region104: #{tpu_custom_call.1} parent=83 // pred_fallthru
          _
        // Predicated region
        $region105: #{tpu_custom_call.1} parent=83 // pred_check
          %p634 = pneg %p318
        $region106: #{tpu_custom_call.1} parent=83 // pred_check_branch
          %636 = sbr.rel (%p634) target = $region108
        $region107: #{tpu_custom_call.1} parent=83 // pred_region
          %637 = dma.done [#allocation16], 256
        $region108: #{tpu_custom_call.1} parent=83 // pred_fallthru
          _
        // Predicated region
        $region109: #{tpu_custom_call.1} parent=83 // pred_check
          %p638 = pneg %p402
        $region110: #{tpu_custom_call.1} parent=83 // pred_check_branch
          %640 = sbr.rel (%p638) target = $region112
        $region111: #{tpu_custom_call.1} parent=83 // pred_region
          %641 = dma.done [#allocation8], 16
        $region112: #{tpu_custom_call.1} parent=83 // pred_fallthru
          _
        %642 = sfence
        %p643 = scmp.lt.s32.totalorder %s46, 1
        %s644 = scalar_select %p643, %s46, 1
        %p645 = scmp.lt.s32.totalorder %s47, 0
        %s646 = scalar_select %p645, %s47, 0
        %s647 = sadd.s32 %s646, %s644
        %s648 = smul.addr %s647, 8
        %s649 = scalar_lea.vmem %s0, %s648
        %p650 = pneg %p77
        %p651 = pneg %p74
        %s652 = sand.u32 %s90, 1
        %s653 = scalar_lea.sflag [#allocation6], %s652
        %s654 = sand.u32 %s90, 1
        %s655 = smul.addr %s654, 4
        %s656 = scalar_lea.vmem [#allocation5], %s655
        %p657 = pneg %p103
        %p658 = pneg %p100
        %p659 = scmp.lt.s32.totalorder %s46, 1
        %s660 = scalar_select %p659, %s46, 1
        %s661 = scalar_lea.vmem %s2, %s660
        %p662 = pneg %p129
        %p663 = pneg %p126
        %p664 = pneg %p150
        %p665 = pneg %p147
        %p666 = pneg %p171
        %p667 = pneg %p168
        %p668 = pneg %p192
        %p669 = pneg %p189
        %p670 = pneg %p213
        %p671 = pneg %p210
        %p672 = pneg %p234
        %p673 = pneg %p231
        %p674 = pneg %p255
        %p675 = pneg %p252
        %p676 = pneg %p276
        %p677 = pneg %p273
        %p678 = pneg %p297
        %p679 = pneg %p294
        %p680 = pneg %p318
        %p681 = pneg %p315
        %p682 = pneg %p339
        %p683 = pneg %p336
        %p684 = pneg %p360
        %p685 = pneg %p357
        %p686 = pneg %p381
        %p687 = pneg %p378
        %p688 = pneg %p402
        %p689 = pneg %p399
        %p690 = pneg %p430
        %p691 = pneg %p427
        %s692 = sand.u32 %s417, 1
        %s693 = scalar_lea.sflag [#allocation7], %s692
        %s694 = sand.u32 %s417, 1
        %s695 = smul.addr %s694, 8
        %s696 = scalar_lea.vmem [#allocation18], %s695
        %p697 = pneg %p458
        %p698 = pneg %p455
        %s699 = sand.u32 %s445, 1
        %s700 = scalar_lea.sflag [#allocation20], %s699
        %s701 = sand.u32 %s445, 1
        %s702 = smul.addr %s701, 16
        %s703 = scalar_lea.vmem [#allocation19], %s702
        %p704 = scmp.lt.s32.totalorder %s46, 1
        %s705 = scalar_select %p704, %s46, 1
        %p706 = scmp.lt.s32.totalorder %s47, 0
        %s707 = scalar_select %p706, %s47, 0
        %s708 = sadd.s32 %s707, %s705
        %s709 = smul.addr %s708, 8
        %s710 = scalar_lea.vmem %s0, %s709
        %p711 = scmp.lt.s32.totalorder %s46, 1
        %s712 = scalar_select %p711, %s46, 1
        %s713 = scalar_lea.vmem %s2, %s712
        %p715 = scmp.eq.s32.totalorder %s47, 0
        // Predicated region
        $region113: #{tpu_custom_call.1} parent=83 // pred_check
          %p716 = pneg %p715
        $region114: #{tpu_custom_call.1} parent=83 // pred_check_branch
          %718 = sbr.rel (%p716) target = $region116
        $region115: #{tpu_custom_call.1} parent=83 // pred_region
          %v719 = vld [vmem:[%s613] sm:$0xf]
          %v720 = vld [vmem:[%s5] sm:$0xf]
          %v721 = vld [vmem:[%s5 + $0x4] sm:$0xf]
          %v722 = vld [vmem:[%s5 + $0x8] sm:$0xf]
          %v723 = vld [vmem:[%s5 + $0xc] sm:$0xf]
          %v724 = vld [vmem:[#allocation11] sm:$0x1]
          %v726 = vlaneseq
          %v727 = vshrl.u32 %v726, 7
          %v728 = vsub.s32 0, %v727
          %v729 = vrot.slane %v724, %v728
          %v735 = vunpack.c.l.b16 %v720
          %v736 = vunpack.c.l.b16 %v721
          %v737 = vunpack.c.l.b16 %v722
          %v738 = vunpack.c.l.b16 %v723
          %v739 = vpack.c.b16 %v736, %v735
          %v740 = vpack.c.b16 %v738, %v737
          %vm743 = vcmask 261120
          %v745 = vsel %vm743, %v719, 0
          %747 = vmatprep.subr.bf16.mxu0 0
          %748 = vmatpush1.bf16.msra.mxu0 %v739
          %749 = vmatprep.subr.bf16.mxu0 0
          %750 = vmatpush1.bf16.msra.mxu0 %v740
          %751 = vmatprep.subr.bf16.mxu0 0
          %752 = vmatpush1.bf16.msra.mxu0 0
          %753 = vmatprep.subr.bf16.mxu0 0
          %754 = vmatpush1.bf16.msra.mxu0 0
          %755 = vmatprep.subr.bf16.mxu0 0
          %756 = vmatpush1.bf16.msra.mxu0 0
          %757 = vmatprep.subr.bf16.mxu0 0
          %758 = vmatpush1.bf16.msra.mxu0 0
          %759 = vmatprep.subr.bf16.mxu0 0
          %760 = vmatpush1.bf16.msra.mxu0 0
          %761 = vmatprep.subr.bf16.mxu0 0
          %762 = vmatpush1.bf16.msra.mxu0 0
          %763 = vmatprep.subr.bf16.mxu0 0
          %764 = vmatpush1.bf16.msra.mxu0 0
          %765 = vmatprep.subr.bf16.mxu0 0
          %766 = vmatpush1.bf16.msra.mxu0 0
          %767 = vmatprep.subr.bf16.mxu0 0
          %768 = vmatpush1.bf16.msra.mxu0 0
          %769 = vmatprep.subr.bf16.mxu0 0
          %770 = vmatpush1.bf16.msra.mxu0 0
          %771 = vmatprep.subr.bf16.mxu0 0
          %772 = vmatpush1.bf16.msra.mxu0 0
          %773 = vmatprep.subr.bf16.mxu0 0
          %774 = vmatpush1.bf16.msra.mxu0 0
          %775 = vmatprep.subr.bf16.mxu0 0
          %776 = vmatpush1.bf16.msra.mxu0 0
          %777 = vmatprep.subr.bf16.mxu0 0
          %778 = vmatpush1.bf16.msra.mxu0 0
          %779 = vmatprep.mubr.bf16.mxu0 0
          %780 = vmatmul.mubr.bf16.gmra.mrb[0].mxu0 %v745
          %v781 = vpop.f32.mrb[0].mxu0
          %v782 = vadd.f32 %v729, %v781
          %v783 = vpop.f32.mrb[0].mxu0
          %v784 = vpop.f32.mrb[0].mxu0
          %v785 = vpop.f32.mrb[0].mxu0
          %786 = vdwg.mxu0
          %v787 = vld [vmem:[#allocation12] sm:$0xf]
          %v788 = vld [vmem:[#allocation12 + $0x4] sm:$0xf]
          %v789 = vld [vmem:[#allocation12 + $0x8] sm:$0xf]
          %v790 = vld [vmem:[#allocation12 + $0xc] sm:$0xf]
          %v791 = vld [vmem:[#allocation14] sm:$0x1]
          %v793 = vlaneseq
          %v794 = vshrl.u32 %v793, 7
          %v795 = vsub.s32 0, %v794
          %v796 = vrot.slane %v791, %v795
          %v802 = vunpack.c.l.b16 %v787
          %v803 = vunpack.c.l.b16 %v788
          %v804 = vunpack.c.l.b16 %v789
          %v805 = vunpack.c.l.b16 %v790
          %v806 = vpack.c.b16 %v803, %v802
          %v807 = vpack.c.b16 %v805, %v804
          %810 = vmatprep.subr.bf16.mxu0 0
          %811 = vmatpush1.bf16.msra.mxu0 %v806
          %812 = vmatprep.subr.bf16.mxu0 0
          %813 = vmatpush1.bf16.msra.mxu0 %v807
          %814 = vmatprep.subr.bf16.mxu0 0
          %815 = vmatpush1.bf16.msra.mxu0 0
          %816 = vmatprep.subr.bf16.mxu0 0
          %817 = vmatpush1.bf16.msra.mxu0 0
          %818 = vmatprep.subr.bf16.mxu0 0
          %819 = vmatpush1.bf16.msra.mxu0 0
          %820 = vmatprep.subr.bf16.mxu0 0
          %821 = vmatpush1.bf16.msra.mxu0 0
          %822 = vmatprep.subr.bf16.mxu0 0
          %823 = vmatpush1.bf16.msra.mxu0 0
          %824 = vmatprep.subr.bf16.mxu0 0
          %825 = vmatpush1.bf16.msra.mxu0 0
          %826 = vmatprep.subr.bf16.mxu0 0
          %827 = vmatpush1.bf16.msra.mxu0 0
          %828 = vmatprep.subr.bf16.mxu0 0
          %829 = vmatpush1.bf16.msra.mxu0 0
          %830 = vmatprep.subr.bf16.mxu0 0
          %831 = vmatpush1.bf16.msra.mxu0 0
          %832 = vmatprep.subr.bf16.mxu0 0
          %833 = vmatpush1.bf16.msra.mxu0 0
          %834 = vmatprep.subr.bf16.mxu0 0
          %835 = vmatpush1.bf16.msra.mxu0 0
          %836 = vmatprep.subr.bf16.mxu0 0
          %837 = vmatpush1.bf16.msra.mxu0 0
          %838 = vmatprep.subr.bf16.mxu0 0
          %839 = vmatpush1.bf16.msra.mxu0 0
          %840 = vmatprep.subr.bf16.mxu0 0
          %841 = vmatpush1.bf16.msra.mxu0 0
          %842 = vmatprep.mubr.bf16.mxu0 0
          %843 = vmatmul.mubr.bf16.gmra.mrb[0].mxu0 %v745
          %v844 = vpop.f32.mrb[0].mxu0
          %v845 = vadd.f32 %v796, %v844
          %v846 = vpop.f32.mrb[0].mxu0
          %v847 = vpop.f32.mrb[0].mxu0
          %v848 = vpop.f32.mrb[0].mxu0
          %849 = vdwg.mxu0
          %v850 = vpack.c.bf16 %v782, %v782
          %vm851 = vcmask 257024
          %852 = vst.msk [vmem:[#allocation2] sm:$0xf] %vm851, %v850
          %v853 = vpack.c.bf16 %v845, %v845
          %854 = vst.msk [vmem:[#allocation3] sm:$0xf] %vm851, %v853
        $region116: #{tpu_custom_call.1} parent=83 // pred_fallthru
          _
        %v855 = vld [vmem:[%s710] sm:$0xff]
        %v856 = vld [vmem:[%s713] sm:$0x1]
        %vm857 = vcmp.gt.f32.partialorder %v856, 0.0
        %v858 = vsel %vm857, 0.0, -1e+09
        %v859 = vpack.c.bf16 %v855, %v855
        %v860 = vld [vmem:[%s3] sm:$0xf]
        %v861 = vld [vmem:[%s3 + $0x4] sm:$0xf]
        %v862 = vld [vmem:[%s3 + $0x8] sm:$0xf]
        %v863 = vld [vmem:[%s3 + $0xc] sm:$0xf]
        %v864 = vld [vmem:[#allocation9] sm:$0x1]
        %v866 = vlaneseq
        %v867 = vshrl.u32 %v866, 7
        %v868 = vsub.s32 0, %v867
        %v869 = vrot.slane %v864, %v868
        %v875 = vunpack.c.l.b16 %v860
        %v876 = vunpack.c.l.b16 %v861
        %v877 = vunpack.c.l.b16 %v862
        %v878 = vunpack.c.l.b16 %v863
        %v879 = vpack.c.b16 %v876, %v875
        %v880 = vpack.c.b16 %v878, %v877
        %vm883 = vcmask 261120
        %v885 = vsel %vm883, %v859, 0
        %887 = vmatprep.subr.bf16.mxu0 0
        %888 = vmatpush1.bf16.msra.mxu0 %v879
        %889 = vmatprep.subr.bf16.mxu0 0
        %890 = vmatpush1.bf16.msra.mxu0 %v880
        %891 = vmatprep.subr.bf16.mxu0 0
        %892 = vmatpush1.bf16.msra.mxu0 0
        %893 = vmatprep.subr.bf16.mxu0 0
        %894 = vmatpush1.bf16.msra.mxu0 0
        %895 = vmatprep.subr.bf16.mxu0 0
        %896 = vmatpush1.bf16.msra.mxu0 0
        %897 = vmatprep.subr.bf16.mxu0 0
        %898 = vmatpush1.bf16.msra.mxu0 0
        %899 = vmatprep.subr.bf16.mxu0 0
        %900 = vmatpush1.bf16.msra.mxu0 0
        %901 = vmatprep.subr.bf16.mxu0 0
        %902 = vmatpush1.bf16.msra.mxu0 0
        %903 = vmatprep.subr.bf16.mxu0 0
        %904 = vmatpush1.bf16.msra.mxu0 0
        %905 = vmatprep.subr.bf16.mxu0 0
        %906 = vmatpush1.bf16.msra.mxu0 0
        %907 = vmatprep.subr.bf16.mxu0 0
        %908 = vmatpush1.bf16.msra.mxu0 0
        %909 = vmatprep.subr.bf16.mxu0 0
        %910 = vmatpush1.bf16.msra.mxu0 0
        %911 = vmatprep.subr.bf16.mxu0 0
        %912 = vmatpush1.bf16.msra.mxu0 0
        %913 = vmatprep.subr.bf16.mxu0 0
        %914 = vmatpush1.bf16.msra.mxu0 0
        %915 = vmatprep.subr.bf16.mxu0 0
        %916 = vmatpush1.bf16.msra.mxu0 0
        %917 = vmatprep.subr.bf16.mxu0 0
        %918 = vmatpush1.bf16.msra.mxu0 0
        %919 = vmatprep.mubr.bf16.mxu0 0
        %920 = vmatmul.mubr.bf16.gmra.mrb[0].mxu0 %v885
        %v921 = vpop.f32.mrb[0].mxu0
        %v922 = vadd.f32 %v869, %v921
        %v923 = vpop.f32.mrb[0].mxu0
        %v924 = vpop.f32.mrb[0].mxu0
        %v925 = vpop.f32.mrb[0].mxu0
        %926 = vdwg.mxu0
        %v927 = vpack.c.bf16 %v922, %v922
        %v928 = vld [vmem:[#allocation2] sm:$0xf]
        %v929 = vld [vmem:[#allocation3] sm:$0xf]
        %v931 = vlaneseq
        %v932 = vshrl.u32 %v931, 7
        %v933 = vsub.s32 0, %v932
        %v934 = vrot.slane %v858, %v933
        %vm936 = vcmask 64512
        %v938 = vsel %vm936, %v927, 0
        %v941 = vsel %vm936, %v928, 0
        %943 = vmatprep.subr.bf16.mxu0 0
        %944 = vmatpush1.bf16.xpose.msra.mxu0 %v941
        %945 = vmatprep.subr.bf16.mxu0 0
        %946 = vmatpush1.bf16.xpose.msra.mxu0 0
        %947 = vmatprep.subr.bf16.mxu0 0
        %948 = vmatpush1.bf16.xpose.msra.mxu0 0
        %949 = vmatprep.subr.bf16.mxu0 0
        %950 = vmatpush1.bf16.xpose.msra.mxu0 0
        %951 = vmatprep.subr.bf16.mxu0 0
        %952 = vmatpush1.bf16.xpose.msra.mxu0 0
        %953 = vmatprep.subr.bf16.mxu0 0
        %954 = vmatpush1.bf16.xpose.msra.mxu0 0
        %955 = vmatprep.subr.bf16.mxu0 0
        %956 = vmatpush1.bf16.xpose.msra.mxu0 0
        %957 = vmatprep.subr.bf16.mxu0 0
        %958 = vmatpush1.bf16.xpose.msra.mxu0 0
        %959 = vmatprep.subr.bf16.mxu0 0
        %960 = vmatpush1.bf16.xpose.msra.mxu0 0
        %961 = vmatprep.subr.bf16.mxu0 0
        %962 = vmatpush1.bf16.xpose.msra.mxu0 0
        %963 = vmatprep.subr.bf16.mxu0 0
        %964 = vmatpush1.bf16.xpose.msra.mxu0 0
        %965 = vmatprep.subr.bf16.mxu0 0
        %966 = vmatpush1.bf16.xpose.msra.mxu0 0
        %967 = vmatprep.subr.bf16.mxu0 0
        %968 = vmatpush1.bf16.xpose.msra.mxu0 0
        %969 = vmatprep.subr.bf16.mxu0 0
        %970 = vmatpush1.bf16.xpose.msra.mxu0 0
        %971 = vmatprep.subr.bf16.mxu0 0
        %972 = vmatpush1.bf16.xpose.msra.mxu0 0
        %973 = vmatprep.subr.bf16.mxu0 0
        %974 = vmatpush1.bf16.xpose.msra.mxu0 0
        %975 = vmatprep.mubr.bf16.mxu0 0
        %976 = vmatmul.mubr.bf16.gmra.mrb[0].mxu0 %v938
        %v977 = vpop.f32.mrb[0].mxu0
        %v978 = vadd.f32 %v934, %v977
        %v979 = vpop.f32.mrb[0].mxu0
        %v980 = vpop.f32.mrb[0].mxu0
        %v981 = vpop.f32.mrb[0].mxu0
        %982 = vdwg.mxu0
        %v983 = vsel %vm936, %v978, -inf
        %984 = vmax.xlane.f32.xlu0 %v983
        %v985 = vpop.xlane.xlu0 %984
        %v986 = vsub.f32 %v978, %v985
        %v987 = vmul.f32 %v986, 1.442695
        %v988 = vpow.pop %v987
        %v989 = vsel %vm936, %v988, 0.0
        %990 = vadd.xlane.f32.xlu0 %v989
        %v991 = vpop.xlane.xlu0 %990
        %v992 = vrcp.pop %v991
        %v993 = vmul.f32 %v988, %v992
        %v994 = vpack.c.bf16 %v993, %v993
        %vm995 = vcmask 60416
        %996 = vst.msk [vmem:[%s703] sm:$0xf] %vm995, %v994
        %v998 = vsel %vm936, %v994, 0
        %vm1000 = vcmask 1043456
        %v1002 = vsel %vm1000, %v929, 0
        %1004 = vmatprep.subr.bf16.mxu0 0
        %1005 = vmatpush1.bf16.msra.mxu0 %v1002
        %1006 = vmatprep.subr.bf16.mxu0 0
        %1007 = vmatpush1.bf16.msra.mxu0 0
        %1008 = vmatprep.subr.bf16.mxu0 0
        %1009 = vmatpush1.bf16.msra.mxu0 0
        %1010 = vmatprep.subr.bf16.mxu0 0
        %1011 = vmatpush1.bf16.msra.mxu0 0
        %1012 = vmatprep.subr.bf16.mxu0 0
        %1013 = vmatpush1.bf16.msra.mxu0 0
        %1014 = vmatprep.subr.bf16.mxu0 0
        %1015 = vmatpush1.bf16.msra.mxu0 0
        %1016 = vmatprep.subr.bf16.mxu0 0
        %1017 = vmatpush1.bf16.msra.mxu0 0
        %1018 = vmatprep.subr.bf16.mxu0 0
        %1019 = vmatpush1.bf16.msra.mxu0 0
        %1020 = vmatprep.subr.bf16.mxu0 0
        %1021 = vmatpush1.bf16.msra.mxu0 0
        %1022 = vmatprep.subr.bf16.mxu0 0
        %1023 = vmatpush1.bf16.msra.mxu0 0
        %1024 = vmatprep.subr.bf16.mxu0 0
        %1025 = vmatpush1.bf16.msra.mxu0 0
        %1026 = vmatprep.subr.bf16.mxu0 0
        %1027 = vmatpush1.bf16.msra.mxu0 0
        %1028 = vmatprep.subr.bf16.mxu0 0
        %1029 = vmatpush1.bf16.msra.mxu0 0
        %1030 = vmatprep.subr.bf16.mxu0 0
        %1031 = vmatpush1.bf16.msra.mxu0 0
        %1032 = vmatprep.subr.bf16.mxu0 0
        %1033 = vmatpush1.bf16.msra.mxu0 0
        %1034 = vmatprep.subr.bf16.mxu0 0
        %1035 = vmatpush1.bf16.msra.mxu0 0
        %1036 = vmatprep.mubr.bf16.mxu0 0
        %1037 = vmatmul.mubr.bf16.gmra.mrb[0].mxu0 %v998
        %v1038 = vpop.f32.mrb[0].mxu0
        %v1039 = vadd.f32 0.0, %v1038
        %v1040 = vpop.f32.mrb[0].mxu0
        %v1041 = vpop.f32.mrb[0].mxu0
        %v1042 = vpop.f32.mrb[0].mxu0
        %1043 = vdwg.mxu0
        %1044 = vst.msk [vmem:[#allocation4] sm:$0xff] %vm936, %v1039
        %1046 = vrot.lane.b32.xlu0 %v927, 120
        %v1047 = vpop.permute.xlu0 %1046
        %v1049 = vunpack.c.l.b16 %v928
        %v1050 = vpack.c.b16 %v1049, %v1049
        %1051 = vrot.lane.b32.xlu0 %v1050, 120
        %v1052 = vpop.permute.xlu0 %1051
        %v1054 = vsel %vm936, %v1047, 0
        %v1057 = vsel %vm936, %v1052, 0
        %1059 = vmatprep.subr.bf16.mxu0 0
        %1060 = vmatpush1.bf16.xpose.msra.mxu0 %v1057
        %1061 = vmatprep.subr.bf16.mxu0 0
        %1062 = vmatpush1.bf16.xpose.msra.mxu0 0
        %1063 = vmatprep.subr.bf16.mxu0 0
        %1064 = vmatpush1.bf16.xpose.msra.mxu0 0
        %1065 = vmatprep.subr.bf16.mxu0 0
        %1066 = vmatpush1.bf16.xpose.msra.mxu0 0
        %1067 = vmatprep.subr.bf16.mxu0 0
        %1068 = vmatpush1.bf16.xpose.msra.mxu0 0
        %1069 = vmatprep.subr.bf16.mxu0 0
        %1070 = vmatpush1.bf16.xpose.msra.mxu0 0
        %1071 = vmatprep.subr.bf16.mxu0 0
        %1072 = vmatpush1.bf16.xpose.msra.mxu0 0
        %1073 = vmatprep.subr.bf16.mxu0 0
        %1074 = vmatpush1.bf16.xpose.msra.mxu0 0
        %1075 = vmatprep.subr.bf16.mxu0 0
        %1076 = vmatpush1.bf16.xpose.msra.mxu0 0
        %1077 = vmatprep.subr.bf16.mxu0 0
        %1078 = vmatpush1.bf16.xpose.msra.mxu0 0
        %1079 = vmatprep.subr.bf16.mxu0 0
        %1080 = vmatpush1.bf16.xpose.msra.mxu0 0
        %1081 = vmatprep.subr.bf16.mxu0 0
        %1082 = vmatpush1.bf16.xpose.msra.mxu0 0
        %1083 = vmatprep.subr.bf16.mxu0 0
        %1084 = vmatpush1.bf16.xpose.msra.mxu0 0
        %1085 = vmatprep.subr.bf16.mxu0 0
        %1086 = vmatpush1.bf16.xpose.msra.mxu0 0
        %1087 = vmatprep.subr.bf16.mxu0 0
        %1088 = vmatpush1.bf16.xpose.msra.mxu0 0
        %1089 = vmatprep.subr.bf16.mxu0 0
        %1090 = vmatpush1.bf16.xpose.msra.mxu0 0
        %1091 = vmatprep.mubr.bf16.mxu0 0
        %1092 = vmatmul.mubr.bf16.gmra.mrb[0].mxu0 %v1054
        %v1093 = vpop.f32.mrb[0].mxu0
        %v1094 = vadd.f32 %v934, %v1093
        %v1095 = vpop.f32.mrb[0].mxu0
        %v1096 = vpop.f32.mrb[0].mxu0
        %v1097 = vpop.f32.mrb[0].mxu0
        %1098 = vdwg.mxu0
        %v1099 = vsel %vm936, %v1094, -inf
        %1100 = vmax.xlane.f32.xlu0 %v1099
        %v1101 = vpop.xlane.xlu0 %1100
        %v1102 = vsub.f32 %v1094, %v1101
        %v1103 = vmul.f32 %v1102, 1.442695
        %v1104 = vpow.pop %v1103
        %v1105 = vsel %vm936, %v1104, 0.0
        %1106 = vadd.xlane.f32.xlu0 %v1105
        %v1107 = vpop.xlane.xlu0 %1106
        %v1108 = vrcp.pop %v1107
        %v1109 = vmul.f32 %v1104, %v1108
        %v1110 = vpack.c.bf16 %v1109, %v1109
        %s1111 = scalar_lea.vmem %s703, 4 [#allocation19]
        %1112 = vst.msk [vmem:[%s1111] sm:$0xf] %vm995, %v1110
        %v1114 = vunpack.c.l.b16 %v929
        %v1115 = vpack.c.b16 %v1114, %v1114
        %1116 = vrot.lane.b32.xlu0 %v1115, 120
        %v1117 = vpop.permute.xlu0 %1116
        %v1119 = vsel %vm936, %v1110, 0
        %v1122 = vsel %vm1000, %v1117, 0
        %1124 = vmatprep.subr.bf16.mxu0 0
        %1125 = vmatpush1.bf16.msra.mxu0 %v1122
        %1126 = vmatprep.subr.bf16.mxu0 0
        %1127 = vmatpush1.bf16.msra.mxu0 0
        %1128 = vmatprep.subr.bf16.mxu0 0
        %1129 = vmatpush1.bf16.msra.mxu0 0
        %1130 = vmatprep.subr.bf16.mxu0 0
        %1131 = vmatpush1.bf16.msra.mxu0 0
        %1132 = vmatprep.subr.bf16.mxu0 0
        %1133 = vmatpush1.bf16.msra.mxu0 0
        %1134 = vmatprep.subr.bf16.mxu0 0
        %1135 = vmatpush1.bf16.msra.mxu0 0
        %1136 = vmatprep.subr.bf16.mxu0 0
        %1137 = vmatpush1.bf16.msra.mxu0 0
        %1138 = vmatprep.subr.bf16.mxu0 0
        %1139 = vmatpush1.bf16.msra.mxu0 0
        %1140 = vmatprep.subr.bf16.mxu0 0
        %1141 = vmatpush1.bf16.msra.mxu0 0
        %1142 = vmatprep.subr.bf16.mxu0 0
        %1143 = vmatpush1.bf16.msra.mxu0 0
        %1144 = vmatprep.subr.bf16.mxu0 0
        %1145 = vmatpush1.bf16.msra.mxu0 0
        %1146 = vmatprep.subr.bf16.mxu0 0
        %1147 = vmatpush1.bf16.msra.mxu0 0
        %1148 = vmatprep.subr.bf16.mxu0 0
        %1149 = vmatpush1.bf16.msra.mxu0 0
        %1150 = vmatprep.subr.bf16.mxu0 0
        %1151 = vmatpush1.bf16.msra.mxu0 0
        %1152 = vmatprep.subr.bf16.mxu0 0
        %1153 = vmatpush1.bf16.msra.mxu0 0
        %1154 = vmatprep.subr.bf16.mxu0 0
        %1155 = vmatpush1.bf16.msra.mxu0 0
        %1156 = vmatprep.mubr.bf16.mxu0 0
        %1157 = vmatmul.mubr.bf16.gmra.mrb[0].mxu0 %v1119
        %v1158 = vpop.f32.mrb[0].mxu0
        %v1159 = vadd.f32 0.0, %v1158
        %v1160 = vpop.f32.mrb[0].mxu0
        %v1161 = vpop.f32.mrb[0].mxu0
        %v1162 = vpop.f32.mrb[0].mxu0
        %1163 = vdwg.mxu0
        %1165 = vrot.lane.b32.xlu0 %v1159, 8
        %v1166 = vpop.permute.xlu0 %1165
        %vm1168 = vcmask 130112
        %1169 = vst.msk [vmem:[#allocation4] sm:$0xff] %vm1168, %v1166
        %1170 = vrot.lane.b32.xlu0 %v927, 112
        %v1171 = vpop.permute.xlu0 %1170
        %1172 = vrot.lane.b32.xlu0 %v1050, 112
        %v1173 = vpop.permute.xlu0 %1172
        %v1175 = vsel %vm936, %v1171, 0
        %v1178 = vsel %vm936, %v1173, 0
        %1180 = vmatprep.subr.bf16.mxu0 0
        %1181 = vmatpush1.bf16.xpose.msra.mxu0 %v1178
        %1182 = vmatprep.subr.bf16.mxu0 0
        %1183 = vmatpush1.bf16.xpose.msra.mxu0 0
        %1184 = vmatprep.subr.bf16.mxu0 0
        %1185 = vmatpush1.bf16.xpose.msra.mxu0 0
        %1186 = vmatprep.subr.bf16.mxu0 0
        %1187 = vmatpush1.bf16.xpose.msra.mxu0 0
        %1188 = vmatprep.subr.bf16.mxu0 0
        %1189 = vmatpush1.bf16.xpose.msra.mxu0 0
        %1190 = vmatprep.subr.bf16.mxu0 0
        %1191 = vmatpush1.bf16.xpose.msra.mxu0 0
        %1192 = vmatprep.subr.bf16.mxu0 0
        %1193 = vmatpush1.bf16.xpose.msra.mxu0 0
        %1194 = vmatprep.subr.bf16.mxu0 0
        %1195 = vmatpush1.bf16.xpose.msra.mxu0 0
        %1196 = vmatprep.subr.bf16.mxu0 0
        %1197 = vmatpush1.bf16.xpose.msra.mxu0 0
        %1198 = vmatprep.subr.bf16.mxu0 0
        %1199 = vmatpush1.bf16.xpose.msra.mxu0 0
        %1200 = vmatprep.subr.bf16.mxu0 0
        %1201 = vmatpush1.bf16.xpose.msra.mxu0 0
        %1202 = vmatprep.subr.bf16.mxu0 0
        %1203 = vmatpush1.bf16.xpose.msra.mxu0 0
        %1204 = vmatprep.subr.bf16.mxu0 0
        %1205 = vmatpush1.bf16.xpose.msra.mxu0 0
        %1206 = vmatprep.subr.bf16.mxu0 0
        %1207 = vmatpush1.bf16.xpose.msra.mxu0 0
        %1208 = vmatprep.subr.bf16.mxu0 0
        %1209 = vmatpush1.bf16.xpose.msra.mxu0 0
        %1210 = vmatprep.subr.bf16.mxu0 0
        %1211 = vmatpush1.bf16.xpose.msra.mxu0 0
        %1212 = vmatprep.mubr.bf16.mxu0 0
        %1213 = vmatmul.mubr.bf16.gmra.mrb[0].mxu0 %v1175
        %v1214 = vpop.f32.mrb[0].mxu0
        %v1215 = vadd.f32 %v934, %v1214
        %v1216 = vpop.f32.mrb[0].mxu0
        %v1217 = vpop.f32.mrb[0].mxu0
        %v1218 = vpop.f32.mrb[0].mxu0
        %1219 = vdwg.mxu0
        %v1220 = vsel %vm936, %v1215, -inf
        %1221 = vmax.xlane.f32.xlu0 %v1220
        %v1222 = vpop.xlane.xlu0 %1221
        %v1223 = vsub.f32 %v1215, %v1222
        %v1224 = vmul.f32 %v1223, 1.442695
        %v1225 = vpow.pop %v1224
        %v1226 = vsel %vm936, %v1225, 0.0
        %1227 = vadd.xlane.f32.xlu0 %v1226
        %v1228 = vpop.xlane.xlu0 %1227
        %v1229 = vrcp.pop %v1228
        %v1230 = vmul.f32 %v1225, %v1229
        %v1231 = vpack.c.bf16 %v1230, %v1230
        %s1232 = scalar_lea.vmem %s703, 8 [#allocation19]
        %1233 = vst.msk [vmem:[%s1232] sm:$0xf] %vm995, %v1231
        %1234 = vrot.lane.b32.xlu0 %v1115, 112
        %v1235 = vpop.permute.xlu0 %1234
        %v1237 = vsel %vm936, %v1231, 0
        %v1240 = vsel %vm1000, %v1235, 0
        %1242 = vmatprep.subr.bf16.mxu0 0
        %1243 = vmatpush1.bf16.msra.mxu0 %v1240
        %1244 = vmatprep.subr.bf16.mxu0 0
        %1245 = vmatpush1.bf16.msra.mxu0 0
        %1246 = vmatprep.subr.bf16.mxu0 0
        %1247 = vmatpush1.bf16.msra.mxu0 0
        %1248 = vmatprep.subr.bf16.mxu0 0
        %1249 = vmatpush1.bf16.msra.mxu0 0
        %1250 = vmatprep.subr.bf16.mxu0 0
        %1251 = vmatpush1.bf16.msra.mxu0 0
        %1252 = vmatprep.subr.bf16.mxu0 0
        %1253 = vmatpush1.bf16.msra.mxu0 0
        %1254 = vmatprep.subr.bf16.mxu0 0
        %1255 = vmatpush1.bf16.msra.mxu0 0
        %1256 = vmatprep.subr.bf16.mxu0 0
        %1257 = vmatpush1.bf16.msra.mxu0 0
        %1258 = vmatprep.subr.bf16.mxu0 0
        %1259 = vmatpush1.bf16.msra.mxu0 0
        %1260 = vmatprep.subr.bf16.mxu0 0
        %1261 = vmatpush1.bf16.msra.mxu0 0
        %1262 = vmatprep.subr.bf16.mxu0 0
        %1263 = vmatpush1.bf16.msra.mxu0 0
        %1264 = vmatprep.subr.bf16.mxu0 0
        %1265 = vmatpush1.bf16.msra.mxu0 0
        %1266 = vmatprep.subr.bf16.mxu0 0
        %1267 = vmatpush1.bf16.msra.mxu0 0
        %1268 = vmatprep.subr.bf16.mxu0 0
        %1269 = vmatpush1.bf16.msra.mxu0 0
        %1270 = vmatprep.subr.bf16.mxu0 0
        %1271 = vmatpush1.bf16.msra.mxu0 0
        %1272 = vmatprep.subr.bf16.mxu0 0
        %1273 = vmatpush1.bf16.msra.mxu0 0
        %1274 = vmatprep.mubr.bf16.mxu0 0
        %1275 = vmatmul.mubr.bf16.gmra.mrb[0].mxu0 %v1237
        %v1276 = vpop.f32.mrb[0].mxu0
        %v1277 = vadd.f32 0.0, %v1276
        %v1278 = vpop.f32.mrb[0].mxu0
        %v1279 = vpop.f32.mrb[0].mxu0
        %v1280 = vpop.f32.mrb[0].mxu0
        %1281 = vdwg.mxu0
        %1283 = vrot.lane.b32.xlu0 %v1277, 16
        %v1284 = vpop.permute.xlu0 %1283
        %vm1286 = vcmask 195712
        %1287 = vst.msk [vmem:[#allocation4] sm:$0xff] %vm1286, %v1284
        %1288 = vrot.lane.b32.xlu0 %v927, 104
        %v1289 = vpop.permute.xlu0 %1288
        %1290 = vrot.lane.b32.xlu0 %v1050, 104
        %v1291 = vpop.permute.xlu0 %1290
        %v1293 = vsel %vm936, %v1289, 0
        %v1296 = vsel %vm936, %v1291, 0
        %1298 = vmatprep.subr.bf16.mxu0 0
        %1299 = vmatpush1.bf16.xpose.msra.mxu0 %v1296
        %1300 = vmatprep.subr.bf16.mxu0 0
        %1301 = vmatpush1.bf16.xpose.msra.mxu0 0
        %1302 = vmatprep.subr.bf16.mxu0 0
        %1303 = vmatpush1.bf16.xpose.msra.mxu0 0
        %1304 = vmatprep.subr.bf16.mxu0 0
        %1305 = vmatpush1.bf16.xpose.msra.mxu0 0
        %1306 = vmatprep.subr.bf16.mxu0 0
        %1307 = vmatpush1.bf16.xpose.msra.mxu0 0
        %1308 = vmatprep.subr.bf16.mxu0 0
        %1309 = vmatpush1.bf16.xpose.msra.mxu0 0
        %1310 = vmatprep.subr.bf16.mxu0 0
        %1311 = vmatpush1.bf16.xpose.msra.mxu0 0
        %1312 = vmatprep.subr.bf16.mxu0 0
        %1313 = vmatpush1.bf16.xpose.msra.mxu0 0
        %1314 = vmatprep.subr.bf16.mxu0 0
        %1315 = vmatpush1.bf16.xpose.msra.mxu0 0
        %1316 = vmatprep.subr.bf16.mxu0 0
        %1317 = vmatpush1.bf16.xpose.msra.mxu0 0
        %1318 = vmatprep.subr.bf16.mxu0 0
        %1319 = vmatpush1.bf16.xpose.msra.mxu0 0
        %1320 = vmatprep.subr.bf16.mxu0 0
        %1321 = vmatpush1.bf16.xpose.msra.mxu0 0
        %1322 = vmatprep.subr.bf16.mxu0 0
        %1323 = vmatpush1.bf16.xpose.msra.mxu0 0
        %1324 = vmatprep.subr.bf16.mxu0 0
        %1325 = vmatpush1.bf16.xpose.msra.mxu0 0
        %1326 = vmatprep.subr.bf16.mxu0 0
        %1327 = vmatpush1.bf16.xpose.msra.mxu0 0
        %1328 = vmatprep.subr.bf16.mxu0 0
        %1329 = vmatpush1.bf16.xpose.msra.mxu0 0
        %1330 = vmatprep.mubr.bf16.mxu0 0
        %1331 = vmatmul.mubr.bf16.gmra.mrb[0].mxu0 %v1293
        %v1332 = vpop.f32.mrb[0].mxu0
        %v1333 = vadd.f32 %v934, %v1332
        %v1334 = vpop.f32.mrb[0].mxu0
        %v1335 = vpop.f32.mrb[0].mxu0
        %v1336 = vpop.f32.mrb[0].mxu0
        %1337 = vdwg.mxu0
        %v1338 = vsel %vm936, %v1333, -inf
        %1339 = vmax.xlane.f32.xlu0 %v1338
        %v1340 = vpop.xlane.xlu0 %1339
        %v1341 = vsub.f32 %v1333, %v1340
        %v1342 = vmul.f32 %v1341, 1.442695
        %v1343 = vpow.pop %v1342
        %v1344 = vsel %vm936, %v1343, 0.0
        %1345 = vadd.xlane.f32.xlu0 %v1344
        %v1346 = vpop.xlane.xlu0 %1345
        %v1347 = vrcp.pop %v1346
        %v1348 = vmul.f32 %v1343, %v1347
        %v1349 = vpack.c.bf16 %v1348, %v1348
        %s1350 = scalar_lea.vmem %s703, 12 [#allocation19]
        %1351 = vst.msk [vmem:[%s1350] sm:$0xf] %vm995, %v1349
        %1352 = vrot.lane.b32.xlu0 %v1115, 104
        %v1353 = vpop.permute.xlu0 %1352
        %v1355 = vsel %vm936, %v1349, 0
        %v1358 = vsel %vm1000, %v1353, 0
        %1360 = vmatprep.subr.bf16.mxu0 0
        %1361 = vmatpush1.bf16.msra.mxu0 %v1358
        %1362 = vmatprep.subr.bf16.mxu0 0
        %1363 = vmatpush1.bf16.msra.mxu0 0
        %1364 = vmatprep.subr.bf16.mxu0 0
        %1365 = vmatpush1.bf16.msra.mxu0 0
        %1366 = vmatprep.subr.bf16.mxu0 0
        %1367 = vmatpush1.bf16.msra.mxu0 0
        %1368 = vmatprep.subr.bf16.mxu0 0
        %1369 = vmatpush1.bf16.msra.mxu0 0
        %1370 = vmatprep.subr.bf16.mxu0 0
        %1371 = vmatpush1.bf16.msra.mxu0 0
        %1372 = vmatprep.subr.bf16.mxu0 0
        %1373 = vmatpush1.bf16.msra.mxu0 0
        %1374 = vmatprep.subr.bf16.mxu0 0
        %1375 = vmatpush1.bf16.msra.mxu0 0
        %1376 = vmatprep.subr.bf16.mxu0 0
        %1377 = vmatpush1.bf16.msra.mxu0 0
        %1378 = vmatprep.subr.bf16.mxu0 0
        %1379 = vmatpush1.bf16.msra.mxu0 0
        %1380 = vmatprep.subr.bf16.mxu0 0
        %1381 = vmatpush1.bf16.msra.mxu0 0
        %1382 = vmatprep.subr.bf16.mxu0 0
        %1383 = vmatpush1.bf16.msra.mxu0 0
        %1384 = vmatprep.subr.bf16.mxu0 0
        %1385 = vmatpush1.bf16.msra.mxu0 0
        %1386 = vmatprep.subr.bf16.mxu0 0
        %1387 = vmatpush1.bf16.msra.mxu0 0
        %1388 = vmatprep.subr.bf16.mxu0 0
        %1389 = vmatpush1.bf16.msra.mxu0 0
        %1390 = vmatprep.subr.bf16.mxu0 0
        %1391 = vmatpush1.bf16.msra.mxu0 0
        %1392 = vmatprep.mubr.bf16.mxu0 0
        %1393 = vmatmul.mubr.bf16.gmra.mrb[0].mxu0 %v1355
        %v1394 = vpop.f32.mrb[0].mxu0
        %v1395 = vadd.f32 0.0, %v1394
        %v1396 = vpop.f32.mrb[0].mxu0
        %v1397 = vpop.f32.mrb[0].mxu0
        %v1398 = vpop.f32.mrb[0].mxu0
        %1399 = vdwg.mxu0
        %1401 = vrot.lane.b32.xlu0 %v1395, 24
        %v1402 = vpop.permute.xlu0 %1401
        %vm1404 = vcmask 261312
        %1405 = vst.msk [vmem:[#allocation4] sm:$0xff] %vm1404, %v1402
        %v1406 = vld [vmem:[#allocation4] sm:$0xff]
        %v1407 = vpack.c.bf16 %v1406, %v1406
        %v1408 = vld [vmem:[%s9] sm:$0xf]
        %v1409 = vld [vmem:[%s9 + $0x4] sm:$0xf]
        %v1410 = vld [vmem:[%s9 + $0x8] sm:$0xf]
        %v1411 = vld [vmem:[%s9 + $0xc] sm:$0xf]
        %v1412 = vld [vmem:[%s10] sm:$0x1]
        %v1414 = vlaneseq
        %v1415 = vshrl.u32 %v1414, 7
        %v1416 = vsub.s32 0, %v1415
        %v1417 = vrot.slane %v1412, %v1416
        %v1423 = vunpack.c.l.b16 %v1408
        %v1424 = vunpack.c.l.b16 %v1409
        %v1425 = vunpack.c.l.b16 %v1410
        %v1426 = vunpack.c.l.b16 %v1411
        %v1427 = vpack.c.b16 %v1424, %v1423
        %v1428 = vpack.c.b16 %v1426, %v1425
        %v1432 = vsel %vm883, %v1407, 0
        %1434 = vmatprep.subr.bf16.mxu0 0
        %1435 = vmatpush1.bf16.msra.mxu0 %v1427
        %1436 = vmatprep.subr.bf16.mxu0 0
        %1437 = vmatpush1.bf16.msra.mxu0 %v1428
        %1438 = vmatprep.subr.bf16.mxu0 0
        %1439 = vmatpush1.bf16.msra.mxu0 0
        %1440 = vmatprep.subr.bf16.mxu0 0
        %1441 = vmatpush1.bf16.msra.mxu0 0
        %1442 = vmatprep.subr.bf16.mxu0 0
        %1443 = vmatpush1.bf16.msra.mxu0 0
        %1444 = vmatprep.subr.bf16.mxu0 0
        %1445 = vmatpush1.bf16.msra.mxu0 0
        %1446 = vmatprep.subr.bf16.mxu0 0
        %1447 = vmatpush1.bf16.msra.mxu0 0
        %1448 = vmatprep.subr.bf16.mxu0 0
        %1449 = vmatpush1.bf16.msra.mxu0 0
        %1450 = vmatprep.subr.bf16.mxu0 0
        %1451 = vmatpush1.bf16.msra.mxu0 0
        %1452 = vmatprep.subr.bf16.mxu0 0
        %1453 = vmatpush1.bf16.msra.mxu0 0
        %1454 = vmatprep.subr.bf16.mxu0 0
        %1455 = vmatpush1.bf16.msra.mxu0 0
        %1456 = vmatprep.subr.bf16.mxu0 0
        %1457 = vmatpush1.bf16.msra.mxu0 0
        %1458 = vmatprep.subr.bf16.mxu0 0
        %1459 = vmatpush1.bf16.msra.mxu0 0
        %1460 = vmatprep.subr.bf16.mxu0 0
        %1461 = vmatpush1.bf16.msra.mxu0 0
        %1462 = vmatprep.subr.bf16.mxu0 0
        %1463 = vmatpush1.bf16.msra.mxu0 0
        %1464 = vmatprep.subr.bf16.mxu0 0
        %1465 = vmatpush1.bf16.msra.mxu0 0
        %1466 = vmatprep.mubr.bf16.mxu0 0
        %1467 = vmatmul.mubr.bf16.gmra.mrb[0].mxu0 %v1432
        %v1468 = vpop.f32.mrb[0].mxu0
        %v1469 = vadd.f32 %v1417, %v1468
        %v1470 = vpop.f32.mrb[0].mxu0
        %v1471 = vpop.f32.mrb[0].mxu0
        %v1472 = vpop.f32.mrb[0].mxu0
        %1473 = vdwg.mxu0
        %v1474 = vadd.f32 %v855, %v1469
        %s1475 = sld [smem:[#allocation17]]
        %s1476 = sld [smem:[#allocation17 + $0x1]]
        %v1477 = vsel %vm883, %v1474, 0.0
        %1478 = vadd.xlane.f32.xlu0 %v1477
        %v1479 = vpop.xlane.xlu0 %1478
        %v1480 = vrcp.pop 32.0
        %v1481 = vmul.f32 %v1479, %v1480
        %v1482 = vsub.f32 %v1474, %v1481
        %v1483 = vmul.f32 %v1482, %v1482
        %v1484 = vsel %vm883, %v1483, 0.0
        %1485 = vadd.xlane.f32.xlu0 %v1484
        %v1486 = vpop.xlane.xlu0 %1485
        %v1487 = vrcp.pop 31.0
        %v1488 = vmul.f32 %v1486, %v1487
        %v1489 = vrsqrt.pop %v1488
        %v1490 = vmul.f32 %v1488, %v1489
        %vm1491 = vcmp.eq.f32.partialorder %v1488, inf
        %v1492 = vsel %vm1491, %v1488, %v1490
        %vm1493 = vcmp.eq.f32.partialorder %v1488, 0.0
        %v1494 = vand.u32 %v1488, 2147483648
        %v1495 = vsel %vm1493, %v1494, %v1492
        %v1496 = vadd.f32 %v1495, 1e-05
        %v1497 = vrcp.pop %v1496
        %v1498 = vmul.f32 %v1482, %v1497
        %v1499 = vstv %s1475
        %v1500 = vmul.f32 %v1498, %v1499
        %v1501 = vstv %s1476
        %v1502 = vadd.f32 %v1500, %v1501
        %v1503 = vpack.c.bf16 %v1502, %v1502
        %v1504 = vld [vmem:[#allocation15] sm:$0xf]
        %v1505 = vld [vmem:[#allocation15 + $0x4] sm:$0xf]
        %v1506 = vld [vmem:[#allocation15 + $0x8] sm:$0xf]
        %v1507 = vld [vmem:[#allocation15 + $0xc] sm:$0xf]
        %v1508 = vld [vmem:[%s12] sm:$0x1]
        %v1510 = vlaneseq
        %v1511 = vshrl.u32 %v1510, 7
        %v1512 = vsub.s32 0, %v1511
        %v1513 = vrot.slane %v1508, %v1512
        %v1519 = vunpack.c.l.b16 %v1504
        %v1520 = vunpack.c.l.b16 %v1505
        %v1521 = vunpack.c.l.b16 %v1506
        %v1522 = vunpack.c.l.b16 %v1507
        %v1523 = vpack.c.b16 %v1520, %v1519
        %v1524 = vpack.c.b16 %v1522, %v1521
        %v1528 = vsel %vm883, %v1503, 0
        %1530 = vmatprep.subr.bf16.mxu0 0
        %1531 = vmatpush1.bf16.msra.mxu0 %v1523
        %1532 = vmatprep.subr.bf16.mxu0 0
        %1533 = vmatpush1.bf16.msra.mxu0 %v1524
        %1534 = vmatprep.subr.bf16.mxu0 0
        %1535 = vmatpush1.bf16.msra.mxu0 0
        %1536 = vmatprep.subr.bf16.mxu0 0
        %1537 = vmatpush1.bf16.msra.mxu0 0
        %1538 = vmatprep.subr.bf16.mxu0 0
        %1539 = vmatpush1.bf16.msra.mxu0 0
        %1540 = vmatprep.subr.bf16.mxu0 0
        %1541 = vmatpush1.bf16.msra.mxu0 0
        %1542 = vmatprep.subr.bf16.mxu0 0
        %1543 = vmatpush1.bf16.msra.mxu0 0
        %1544 = vmatprep.subr.bf16.mxu0 0
        %1545 = vmatpush1.bf16.msra.mxu0 0
        %1546 = vmatprep.subr.bf16.mxu0 0
        %1547 = vmatpush1.bf16.msra.mxu0 0
        %1548 = vmatprep.subr.bf16.mxu0 0
        %1549 = vmatpush1.bf16.msra.mxu0 0
        %1550 = vmatprep.subr.bf16.mxu0 0
        %1551 = vmatpush1.bf16.msra.mxu0 0
        %1552 = vmatprep.subr.bf16.mxu0 0
        %1553 = vmatpush1.bf16.msra.mxu0 0
        %1554 = vmatprep.subr.bf16.mxu0 0
        %1555 = vmatpush1.bf16.msra.mxu0 0
        %1556 = vmatprep.subr.bf16.mxu0 0
        %1557 = vmatpush1.bf16.msra.mxu0 0
        %1558 = vmatprep.subr.bf16.mxu0 0
        %1559 = vmatpush1.bf16.msra.mxu0 0
        %1560 = vmatprep.subr.bf16.mxu0 0
        %1561 = vmatpush1.bf16.msra.mxu0 0
        %1562 = vmatprep.mubr.bf16.mxu0 0
        %1563 = vmatmul.mubr.bf16.gmra.mrb[0].mxu0 %v1528
        %v1564 = vpop.f32.mrb[0].mxu0
        %v1565 = vadd.f32 %v1513, %v1564
        %v1566 = vpop.f32.mrb[0].mxu0
        %v1567 = vpop.f32.mrb[0].mxu0
        %v1568 = vpop.f32.mrb[0].mxu0
        %1569 = vdwg.mxu0
        %v1570 = vmax.f32 %v1565, 0.0
        %v1571 = vpack.c.bf16 %v1570, %v1570
        %v1572 = vld [vmem:[%s13] sm:$0xf]
        %v1573 = vld [vmem:[%s13 + $0x4] sm:$0xf]
        %v1574 = vld [vmem:[%s13 + $0x8] sm:$0xf]
        %v1575 = vld [vmem:[%s13 + $0xc] sm:$0xf]
        %v1576 = vld [vmem:[%s13 + $0x10] sm:$0xf]
        %v1577 = vld [vmem:[%s13 + $0x14] sm:$0xf]
        %v1578 = vld [vmem:[%s13 + $0x18] sm:$0xf]
        %v1579 = vld [vmem:[%s13 + $0x1c] sm:$0xf]
        %v1580 = vld [vmem:[%s14] sm:$0x1]
        %v1582 = vlaneseq
        %v1583 = vshrl.u32 %v1582, 7
        %v1584 = vsub.s32 0, %v1583
        %v1585 = vrot.slane %v1580, %v1584
        %v1595 = vunpack.c.l.b16 %v1572
        %v1596 = vunpack.c.l.b16 %v1573
        %v1597 = vunpack.c.l.b16 %v1574
        %v1598 = vunpack.c.l.b16 %v1575
        %v1599 = vunpack.c.l.b16 %v1576
        %v1600 = vunpack.c.l.b16 %v1577
        %v1601 = vunpack.c.l.b16 %v1578
        %v1602 = vunpack.c.l.b16 %v1579
        %v1603 = vpack.c.b16 %v1596, %v1595
        %v1604 = vpack.c.b16 %v1598, %v1597
        %v1605 = vpack.c.b16 %v1600, %v1599
        %v1606 = vpack.c.b16 %v1602, %v1601
        %vm1611 = vcmask 523264
        %v1613 = vsel %vm1611, %v1571, 0
        %1615 = vmatprep.subr.bf16.mxu0 0
        %1616 = vmatpush1.bf16.msra.mxu0 %v1603
        %1617 = vmatprep.subr.bf16.mxu0 0
        %1618 = vmatpush1.bf16.msra.mxu0 %v1604
        %1619 = vmatprep.subr.bf16.mxu0 0
        %1620 = vmatpush1.bf16.msra.mxu0 %v1605
        %1621 = vmatprep.subr.bf16.mxu0 0
        %1622 = vmatpush1.bf16.msra.mxu0 %v1606
        %1623 = vmatprep.subr.bf16.mxu0 0
        %1624 = vmatpush1.bf16.msra.mxu0 0
        %1625 = vmatprep.subr.bf16.mxu0 0
        %1626 = vmatpush1.bf16.msra.mxu0 0
        %1627 = vmatprep.subr.bf16.mxu0 0
        %1628 = vmatpush1.bf16.msra.mxu0 0
        %1629 = vmatprep.subr.bf16.mxu0 0
        %1630 = vmatpush1.bf16.msra.mxu0 0
        %1631 = vmatprep.subr.bf16.mxu0 0
        %1632 = vmatpush1.bf16.msra.mxu0 0
        %1633 = vmatprep.subr.bf16.mxu0 0
        %1634 = vmatpush1.bf16.msra.mxu0 0
        %1635 = vmatprep.subr.bf16.mxu0 0
        %1636 = vmatpush1.bf16.msra.mxu0 0
        %1637 = vmatprep.subr.bf16.mxu0 0
        %1638 = vmatpush1.bf16.msra.mxu0 0
        %1639 = vmatprep.subr.bf16.mxu0 0
        %1640 = vmatpush1.bf16.msra.mxu0 0
        %1641 = vmatprep.subr.bf16.mxu0 0
        %1642 = vmatpush1.bf16.msra.mxu0 0
        %1643 = vmatprep.subr.bf16.mxu0 0
        %1644 = vmatpush1.bf16.msra.mxu0 0
        %1645 = vmatprep.subr.bf16.mxu0 0
        %1646 = vmatpush1.bf16.msra.mxu0 0
        %1647 = vmatprep.mubr.bf16.mxu0 0
        %1648 = vmatmul.mubr.bf16.gmra.mrb[0].mxu0 %v1613
        %v1649 = vpop.f32.mrb[0].mxu0
        %v1650 = vadd.f32 %v1585, %v1649
        %v1651 = vpop.f32.mrb[0].mxu0
        %v1652 = vpop.f32.mrb[0].mxu0
        %v1653 = vpop.f32.mrb[0].mxu0
        %1654 = vdwg.mxu0
        %v1655 = vadd.f32 %v1502, %v1650
        %s1656 = sld [smem:[#allocation17 + $0x2]]
        %s1657 = sld [smem:[#allocation17 + $0x3]]
        %v1658 = vsel %vm883, %v1655, 0.0
        %1659 = vadd.xlane.f32.xlu0 %v1658
        %v1660 = vpop.xlane.xlu0 %1659
        %v1661 = vmul.f32 %v1660, %v1480
        %v1662 = vsub.f32 %v1655, %v1661
        %v1663 = vmul.f32 %v1662, %v1662
        %v1664 = vsel %vm883, %v1663, 0.0
        %1665 = vadd.xlane.f32.xlu0 %v1664
        %v1666 = vpop.xlane.xlu0 %1665
        %v1667 = vmul.f32 %v1666, %v1487
        %v1668 = vrsqrt.pop %v1667
        %v1669 = vmul.f32 %v1667, %v1668
        %vm1670 = vcmp.eq.f32.partialorder %v1667, inf
        %v1671 = vsel %vm1670, %v1667, %v1669
        %vm1672 = vcmp.eq.f32.partialorder %v1667, 0.0
        %v1673 = vand.u32 %v1667, 2147483648
        %v1674 = vsel %vm1672, %v1673, %v1671
        %v1675 = vadd.f32 %v1674, 1e-05
        %v1676 = vrcp.pop %v1675
        %v1677 = vmul.f32 %v1662, %v1676
        %v1678 = vstv %s1656
        %v1679 = vmul.f32 %v1677, %v1678
        %v1680 = vstv %s1657
        %v1681 = vadd.f32 %v1679, %v1680
        %1682 = vst.msk [vmem:[%s696] sm:$0xff] %vm883, %v1681
        %s1683 = sand.u32 %s417, 1
        %s1684 = scalar_lea.sflag [#allocation7], %s1683
        %s1685 = sand.u32 %s417, 1
        %s1686 = smul.addr %s1685, 8
        %s1687 = scalar_lea.vmem [#allocation18], %s1686
        %s1688 = sand.u32 %s445, 1
        %s1689 = scalar_lea.sflag [#allocation20], %s1688
        %s1690 = sand.u32 %s445, 1
        %s1691 = smul.addr %s1690, 16
        %s1692 = scalar_lea.vmem [#allocation19], %s1691
        // Predicated region
        $region117: #{tpu_custom_call.1} parent=83 // pred_check
          %p1693 = pneg %p427
        $region118: #{tpu_custom_call.1} parent=83 // pred_check_branch
          %1695 = sbr.rel (%p1693) target = $region120
        $region119: #{tpu_custom_call.1} parent=83 // pred_region
          %s1697 = ssub.s32 128, 128
          %1698 = vsyncadd %s1684, %s1697
          %s1699 = sadd.s32 %s47, %s46
          %s1700 = smul.addr %s1699, 128
          %s1701 = scalar_lea.hbm %s16, %s1700
          %s1703 = sshll.u32 %s1687, 4
          %s1704 = int_to_ptr.vmem [resolvable:$true] %s1703
          %1706 = dma.vmem_to_hbm [thread:$0]  %s1704, 128, %s1701, %s1684
        $region120: #{tpu_custom_call.1} parent=83 // pred_fallthru
          _
        // Predicated region
        $region121: #{tpu_custom_call.1} parent=83 // pred_check
          %p1707 = pneg %p455
        $region122: #{tpu_custom_call.1} parent=83 // pred_check_branch
          %1709 = sbr.rel (%p1707) target = $region124
        $region123: #{tpu_custom_call.1} parent=83 // pred_region
          %s1711 = ssub.s32 256, 256
          %1712 = vsyncadd %s1689, %s1711
          %s1713 = smul.addr %s46, 4
          %s1714 = sadd.s32 %s47, %s1713
          %s1715 = smul.addr %s1714, 64
          %s1716 = scalar_lea.hbm %s17, %s1715
          %s1717 = sshll.u32 %s1692, 4
          %s1718 = int_to_ptr.vmem [resolvable:$true] %s1717
          %1723 = dma.vmem_to_hbm [thread:$0]  %s1718, 256, %s1716, %s1689, 64, 64, 4
        $region124: #{tpu_custom_call.1} parent=83 // pred_fallthru
          _
      $region84: #{tpu_custom_call.1} parent=5 // pred_fallthru
        _
      %p1724 = scmp.le.s32.totalorder 2, %s37
      // Predicated region
      $region125: #{tpu_custom_call.1} parent=5 // pred_check
        %p1725 = pneg %p1724
      $region126: #{tpu_custom_call.1} parent=5 // pred_check_branch
        %1727 = sbr.rel (%p1725) target = $region128
      $region127: #{tpu_custom_call.1} parent=5 // pred_region
        %s1728 = ssub.s32 %s37, 2
        // Predicated region
        $region129: #{tpu_custom_call.1} parent=127 // pred_check
          %p1729 = pneg %p433
        $region130: #{tpu_custom_call.1} parent=127 // pred_check_branch
          %1731 = sbr.rel (%p1729) target = $region132
        $region131: #{tpu_custom_call.1} parent=127 // pred_region
          %s1732 = sand.u32 %s418, 1
          %s1733 = scalar_lea.sflag [#allocation7], %s1732
          %s1734 = sand.u32 %s418, 1
          %s1735 = smul.addr %s1734, 8
          %s1736 = scalar_lea.vmem [#allocation18], %s1735
          %1737 = dma.done %s1733, 128
        $region132: #{tpu_custom_call.1} parent=127 // pred_fallthru
          _
        // Predicated region
        $region133: #{tpu_custom_call.1} parent=127 // pred_check
          %p1738 = pneg %p461
        $region134: #{tpu_custom_call.1} parent=127 // pred_check_branch
          %1740 = sbr.rel (%p1738) target = $region136
        $region135: #{tpu_custom_call.1} parent=127 // pred_region
          %s1741 = sand.u32 %s446, 1
          %s1742 = scalar_lea.sflag [#allocation20], %s1741
          %s1743 = sand.u32 %s446, 1
          %s1744 = smul.addr %s1743, 16
          %s1745 = scalar_lea.vmem [#allocation19], %s1744
          %1746 = dma.done %s1742, 256
        $region136: #{tpu_custom_call.1} parent=127 // pred_fallthru
          _
      $region128: #{tpu_custom_call.1} parent=5 // pred_fallthru
        _
    $region6: #{tpu_custom_call.1} parent=1 // loop_footer
      %s41 = sadd.s32 1, %s37
    $region7: #{tpu_custom_call.1} parent=1 // loop_footer_branch
      %36 = sbr.rel target = $region3
    $region8: #{tpu_custom_call.1} parent=1 // loop_exit
      _
    %1747 = vsyncpa [#allocation6], 1
    %s1748 = scalar_lea.sflag [#allocation6], 1
    %1749 = vsyncpa %s1748, 1
    %1750 = vsyncpa [#allocation10], 1
    %1751 = vsyncpa [#allocation13], 1
    %1752 = vsyncpa [#allocation16], 1
    %1753 = vsyncpa [#allocation7], 1
    %s1754 = scalar_lea.sflag [#allocation7], 1
    %1755 = vsyncpa %s1754, 1
    %1756 = vsyncpa [#allocation20], 1
    %s1757 = scalar_lea.sflag [#allocation20], 1
    %1758 = vsyncpa %s1757, 1
    %1759 = vsyncpa [#allocation8], 1
    %s1760 = scalar_lea.sflag [#allocation8], 1
    %1761 = vsyncpa %s1760, 1

</llo_original>
